<compile_context>
chip_gen: v7x
topology: tpu7x:2x2x1
jax: 0.10.0
libtpu: 0.0.40
codegen_flags: <defaults>
</compile_context>

<pallas_src>
import math

import jax
import jax.numpy as jnp
from jax.experimental import pallas as pl
from jax.experimental.pallas import tpu as pltpu

# ----------------------------- configuration --------------------------------
DIM = 8                    # feature dim of x (must be even)
HALF = DIM // 2
HIDDEN_DIM = 32            # hp.hidden_dim
NUM_BINS = 8               # hp.num_bins
K = NUM_BINS
TAIL_BOUND = 3.0           # hp.tail_bound
MIN_BIN_WIDTH = 1e-3
MIN_BIN_HEIGHT = 1e-3      # == MIN_BIN_WIDTH (lets widths & heights share work)
MIN_BIN_DERIVATIVE = 1e-3
FLIP = False

STATS_PER = 3 * NUM_BINS - 1        # 23 spline params per channel (w, h, d)
GK = HALF * K                       # 32  rows per (width|height|deriv) block
ROWS_WH = 2 * GK                    # 64  width+height logit rows
OUT2 = STATS_PER * HALF             # 92  true linear2 out features
OUT2P = 3 * GK                      # 96  padded, aligned linear2 out features
LN_EPS = 1e-5
DERIV_CONST = math.log(math.exp(1.0 - MIN_BIN_DERIVATIVE) - 1.0)
INV_SQRT_HID = 1.0 / math.sqrt(HIDDEN_DIM)

# Rows per grid step (lane axis).  512 keeps per-step VMEM ~1 MiB on all of
# v5e/v6e/v7x while still yielding >=2 grid steps (v7x megacore) for any
# realistically sized M; v5e/v6e can go to 1024 if M is large.
BM = 512


# ------------------------------ small helpers -------------------------------
def _softplus(x):
    # numerically-stable softplus; identical formula in kernel & reference
    return jnp.log(1.0 + jnp.exp(-jnp.abs(x))) + jnp.maximum(x, 0.0)


# -------------------------------- the kernel --------------------------------
def spline_coupling_kernel(x0_ref, x1_ref, w1_ref, w2_ref, b2_ref,
                           tri_ref, seg_ref, bc_ref, out_ref):
    x0 = x0_ref[...]                     # (HALF, BM)  rows on lanes
    x1 = x1_ref[...]                     # (HALF, BM)
    bm = x0.shape[1]

    # ---- conditioner MLP: linear1 -> LayerNorm -> ReLU -> linear2 ----
    # NOTE: default matmul precision passed the 5e-4 check vs a HIGHEST-
    # precision reference; kept default to avoid any lowering surprises.
    h = jnp.dot(w1_ref[...], x0, preferred_element_type=jnp.float32)   # (HID, BM)
    mu = jnp.mean(h, axis=0, keepdims=True)
    var = jnp.mean((h - mu) ** 2, axis=0, keepdims=True)
    ha = jnp.maximum((h - mu) * jax.lax.rsqrt(var + LN_EPS), 0.0)
    stats = jnp.dot(w2_ref[...], ha,
                    preferred_element_type=jnp.float32) + b2_ref[...]  # (96, BM)
    # stats layout (wrapper-preconditioned):
    #   rows [0:32)  width logits  (channel-major, 8 rows each, /sqrt(H) baked)
    #   rows [32:64) height logits (same layout)
    #   rows [64:96) per channel: [DERIV_CONST, ud_0..ud_6]  (raw)

    tri = tri_ref[...]   # (64, 64) block-diag strict-lower ones -> cumsum (MXU)
    seg = seg_ref[...]   # (4, 32)  segment-sum over each channel's 8 rows
    bc = bc_ref[...]     # (32, 4)  per-channel broadcast (= seg.T)

    # ---- per-channel softmax of width & height logits (8 groups of K rows) ----
    wh3 = stats[0:ROWS_WH, :].reshape(2 * HALF, K, bm)        # pure view
    m3 = jnp.max(wh3, axis=1, keepdims=True)
    e3 = jnp.exp(wh3 - m3)
    s3 = jnp.sum(e3, axis=1, keepdims=True)
    wh_norm = (MIN_BIN_WIDTH
               + (1.0 - MIN_BIN_WIDTH * K) * (e3 / s3)).reshape(ROWS_WH, bm)

    # left knot of every bin via one block-diagonal strict-lower-tri MXU matmul
    knots = (2.0 * TAIL_BOUND) * jnp.dot(
        tri, wh_norm, preferred_element_type=jnp.float32) - TAIL_BOUND  # (64,BM)
    wknots = knots[0:GK, :]              # (32, BM) width-knot left edges
    hknots = knots[GK:, :]               # (32, BM) height-knot left edges

    # ---- searchsorted + one-hot bin masks (all channels batched) ----
    x1_bc = jnp.dot(bc, x1, preferred_element_type=jnp.float32)         # (32,BM)
    cnt = jnp.dot(seg, (x1_bc >= wknots).astype(jnp.float32),
                  preferred_element_type=jnp.float32)                   # (4, BM)
    bin_idx = jnp.clip(cnt - 1.0, 0.0, float(K - 1))                    # exact ints
    bin_bc = jnp.dot(bc, bin_idx, preferred_element_type=jnp.float32)   # (32,BM)
    sub_f = (jax.lax.broadcasted_iota(jnp.int32, (GK, bm), 0) % K
             ).astype(jnp.float32)
    oh = (sub_f == bin_bc).astype(jnp.float32)                          # bin one-hot
    # (bin_idx + 1) mod K: since both boundary derivative logits equal
    # DERIV_CONST (stored in row 0 of each deriv group), this gather is exactly
    # derivatives[bin_idx + 1] of the reference's (K+1)-padded vector.
    bin_bc_r = jnp.where(bin_bc == float(K - 1), 0.0, bin_bc + 1.0)
    oh_r = (sub_f == bin_bc_r).astype(jnp.float32)

    # ---- gathers as masked segment-sums on the (idle) MXU ----
    d_slab = stats[ROWS_WH:, :]                                         # (32,BM)

    def gather(slab, mask):                                             # -> (4,BM)
        return jnp.dot(seg, slab * mask, preferred_element_type=jnp.float32)

    icw = gather(wknots, oh)                         # left knot of the bin
    ich = gather(hknots, oh)
    ibw = (2.0 * TAIL_BOUND) * gather(wh_norm[0:GK, :], oh)   # bin width
    ih = (2.0 * TAIL_BOUND) * gather(wh_norm[GK:, :], oh)     # bin height
    dl_raw = gather(d_slab, oh)                      # raw derivative logits
    dr_raw = gather(d_slab, oh_r)

    # deferred softplus: only on the two gathered (HALF, BM) slabs
    idr = MIN_BIN_DERIVATIVE + _softplus(dl_raw)
    idr1 = MIN_BIN_DERIVATIVE + _softplus(dr_raw)

    # ---- rational-quadratic spline evaluation (all (HALF, BM)) ----
    inv_ibw = 1.0 / ibw
    idl = ih * inv_ibw                               # delta = height / width
    theta = (x1 - icw) * inv_ibw
    tomt = theta * (1.0 - theta)
    numerator = ih * (idl * theta * theta + idr * tomt)
    denominator = idl + (idr + idr1 - 2.0 * idl) * tomt
    inv_den = 1.0 / denominator
    outputs = ich + numerator * inv_den
    deriv_num = (idl * idl) * (idr1 * theta * theta + 2.0 * idl * tomt
                               + idr * (1.0 - theta) * (1.0 - theta))
    logabsdet = jnp.log(deriv_num * (inv_den * inv_den))

    in_range = (x1 >= -TAIL_BOUND) & (x1 <= TAIL_BOUND)
    outputs = jnp.where(in_range, outputs, x1)
    logabsdet = jnp.where(in_range, logabsdet, 0.0)

    # single lane-dense store: rows [0:HALF) transformed half, [HALF:) logdet
    out_ref[...] = jnp.concatenate([outputs, logabsdet], axis=0)


# ------------------------------- the wrapper ---------------------------------
@jax.jit
def spline_coupling_forward(x, w1t, w2t, b2):
    b, t, n, dim = x.shape
    assert dim == DIM
    xf = x.reshape(-1, DIM)
    x0, x1 = xf[:, :HALF], xf[:, HALF:]
    if FLIP:
        x0, x1 = x1, x0

    m = xf.shape[0]
    m_pad = ((m + BM - 1) // BM) * BM
    pad = m_pad - m
    x0t = jnp.pad(x0.T, ((0, 0), (0, pad)))          # (HALF, m_pad), rows on lanes
    x1t = jnp.pad(x1.T, ((0, 0), (0, pad)))          # (HALF, m_pad)

    # ---- weight preconditioning (one-time, outside the hot path) ----
    w1 = w1t.T.astype(jnp.float32)                                   # (HID, HALF)
    w2 = w2t.T.reshape(HALF, STATS_PER, HIDDEN_DIM).astype(jnp.float32)
    b2r = b2.reshape(HALF, STATS_PER).astype(jnp.float32)

    w2p = jnp.concatenate([
        w2[:, :K, :] * INV_SQRT_HID,                                 # width rows
        w2[:, K:2 * K, :] * INV_SQRT_HID,                            # height rows
        jnp.concatenate([jnp.zeros((HALF, 1, HIDDEN_DIM), jnp.float32),
                         w2[:, 2 * K:, :]], axis=1),                 # [const, d]
    ], axis=0).reshape(OUT2P, HIDDEN_DIM)
    b2p = jnp.concatenate([
        b2r[:, :K] * INV_SQRT_HID,
        b2r[:, K:2 * K] * INV_SQRT_HID,
        jnp.concatenate([jnp.full((HALF, 1), DERIV_CONST, jnp.float32),
                         b2r[:, 2 * K:]], axis=1),
    ], axis=0).reshape(OUT2P, 1)

    # ---- tiny structural matrices (cumsum / segment-sum / broadcast) ----
    r = jnp.arange(ROWS_WH)
    tri = (((r[:, None] // K) == (r[None, :] // K))
           & ((r[:, None] % K) > (r[None, :] % K))).astype(jnp.float32)   # (64,64)
    g = jnp.arange(GK)
    seg = (jnp.arange(HALF)[:, None] == (g[None, :] // K)).astype(jnp.float32)
    bc = seg.T                                                            # (32,4)

    packed = pl.pallas_call(
        spline_coupling_kernel,
        out_shape=jax.ShapeDtypeStruct((2 * HALF, m_pad), jnp.float32),
        grid_spec=pltpu.PrefetchScalarGridSpec(
            num_scalar_prefetch=0,
            grid=(m_pad // BM,),
            in_specs=[
                pl.BlockSpec((HALF, BM), lambda i: (0, i)),
                pl.BlockSpec((HALF, BM), lambda i: (0, i)),
                pl.BlockSpec((HIDDEN_DIM, HALF), lambda i: (0, 0)),
                pl.BlockSpec((OUT2P, HIDDEN_DIM), lambda i: (0, 0)),
                pl.BlockSpec((OUT2P, 1), lambda i: (0, 0)),
                pl.BlockSpec((ROWS_WH, ROWS_WH), lambda i: (0, 0)),
                pl.BlockSpec((HALF, GK), lambda i: (0, 0)),
                pl.BlockSpec((GK, HALF), lambda i: (0, 0)),
            ],
            out_specs=pl.BlockSpec((2 * HALF, BM), lambda i: (0, i)),
        ),
        compiler_params=pltpu.CompilerParams(
            dimension_semantics=("parallel",)),
    )(x0t, x1t, w1, w2p, b2p, tri, seg, bc)

    y1 = packed[:HALF, :m].T                    # (M, HALF) transformed half
    ld = packed[HALF:, :m].T                    # (M, HALF) logabsdet
    y = jnp.concatenate([x0, y1], axis=-1).reshape(b, t, n, DIM)
    logdet = ld.reshape(b, t, n, HALF)
    return y, logdet


# ---------------------------- pure-JAX reference -----------------------------
def reference_forward(x, w1t, w2t, b2):
    b, t, n, dim = x.shape
    x0, x1 = x[..., :HALF], x[..., HALF:]
    if FLIP:
        x0, x1 = x1, x0
    h = jnp.dot(x0, w1t, precision=jax.lax.Precision.HIGHEST)
    mu = h.mean(-1, keepdims=True)
    var = ((h - mu) ** 2).mean(-1, keepdims=True)
    ha = jnp.maximum((h - mu) * jax.lax.rsqrt(var + LN_EPS), 0.0)
    stats = jnp.dot(ha, w2t, precision=jax.lax.Precision.HIGHEST) + b2
    stats = stats.reshape(b, t, n, HALF, STATS_PER)

    sq = math.sqrt(HIDDEN_DIM)
    uw, uh, ud = stats[..., :K] / sq, stats[..., K:2 * K] / sq, stats[..., 2 * K:]
    pad = jnp.full(ud.shape[:-1] + (1,), DERIV_CONST, jnp.float32)
    ud = jnp.concatenate([pad, ud, pad], -1)

    widths = MIN_BIN_WIDTH + (1 - MIN_BIN_WIDTH * K) * jax.nn.softmax(uw, -1)
    cw = jnp.cumsum(widths, -1)
    cw = jnp.concatenate([jnp.zeros_like(pad), cw], -1)
    cw = 2 * TAIL_BOUND * cw - TAIL_BOUND
    cw = cw.at[..., 0].set(-TAIL_BOUND).at[..., -1].set(TAIL_BOUND)
    widths = cw[..., 1:] - cw[..., :-1]

    derivatives = MIN_BIN_DERIVATIVE + _softplus(ud)

    heights = MIN_BIN_HEIGHT + (1 - MIN_BIN_HEIGHT * K) * jax.nn.softmax(uh, -1)
    ch = jnp.cumsum(heights, -1)
    ch = jnp.concatenate([jnp.zeros_like(pad), ch], -1)
    ch = 2 * TAIL_BOUND * ch - TAIL_BOUND
    ch = ch.at[..., 0].set(-TAIL_BOUND).at[..., -1].set(TAIL_BOUND)
    heights = ch[..., 1:] - ch[..., :-1]

    bin_locs = cw.at[..., -1].add(1e-6)
    bin_idx = jnp.sum((x1[..., None] >= bin_locs).astype(jnp.int32), -1) - 1
    bin_idx = jnp.clip(bin_idx, 0, K - 1)[..., None]
    g = lambda v: jnp.take_along_axis(v, bin_idx, axis=-1)[..., 0]

    icw, ibw, ich = g(cw), g(widths), g(ch)
    delta = heights / widths
    idl, idr, idr1, ih = g(delta), g(derivatives), g(derivatives[..., 1:]), g(heights)

    theta = (x1 - icw) / ibw
    tomt = theta * (1 - theta)
    numerator = ih * (idl * theta ** 2 + idr * tomt)
    denominator = idl + (idr + idr1 - 2 * idl) * tomt
    outputs = ich + numerator / denominator
    deriv_num = idl ** 2 * (idr1 * theta ** 2 + 2 * idl * tomt + idr * (1 - theta) ** 2)
    logabsdet = jnp.log(deriv_num) - 2 * jnp.log(denominator)

    int_mask = (x1 >= -TAIL_BOUND) & (x1 <= TAIL_BOUND)
    outputs = jnp.where(int_mask, outputs, x1)
    logabsdet = jnp.where(int_mask, logabsdet, 0.0)
    y = jnp.concatenate([x0, outputs], -1)
    return y, logabsdet


# ----------------------------------- main ------------------------------------
if __name__ == "__main__":
    key = jax.random.PRNGKey(0)
    kx, k1, k2, k3 = jax.random.split(key, 4)

    # M = 2*16*10 = 320 rows -> padded to one 512-row lane tile
    b, t, n = 2, 16, 10
    x = 1.5 * jax.random.normal(kx, (b, t, n, DIM), jnp.float32)

    # deterministic parameter init (PyTorch-style uniform(+-1/sqrt(fan_in)))
    bound1 = 1.0 / math.sqrt(HALF)
    W1 = jax.random.uniform(k1, (HIDDEN_DIM, HALF), jnp.float32, -bound1, bound1)
    bound2 = 1.0 / math.sqrt(HIDDEN_DIM)
    W2 = jax.random.uniform(k2, (OUT2, HIDDEN_DIM), jnp.float32, -bound2, bound2)
    b2 = jax.random.uniform(k3, (OUT2,), jnp.float32, -bound2, bound2)

    W1T = W1.T                      # (HALF, HIDDEN_DIM)
    W2T = W2.T                      # (HIDDEN_DIM, OUT2)

    y, logdet = spline_coupling_forward(x, W1T, W2T, b2)
    jax.block_until_ready((y, logdet))

    y_ref, ld_ref = reference_forward(x, W1T, W2T, b2)
    assert jnp.allclose(y, y_ref, atol=5e-4, rtol=5e-4), "output mismatch"
    assert jnp.allclose(logdet, ld_ref, atol=5e-4, rtol=5e-4), "logdet mismatch"

    print("KERNEL_OK")
</pallas_src>

<mosaic_0001>
module attributes {stable_mosaic.version = 11 : i64} {
  func.func @spline_coupling_kernel(%arg0: i32, %arg1: memref<4x512xf32, #tpu.memory_space<vmem>>, %arg2: memref<4x512xf32, #tpu.memory_space<vmem>>, %arg3: memref<32x4xf32, #tpu.memory_space<vmem>>, %arg4: memref<96x32xf32, #tpu.memory_space<vmem>>, %arg5: memref<96x1xf32, #tpu.memory_space<vmem>>, %arg6: memref<64x64xf32, #tpu.memory_space<vmem>>, %arg7: memref<4x32xf32, #tpu.memory_space<vmem>>, %arg8: memref<32x4xf32, #tpu.memory_space<vmem>>, %arg9: memref<8x512xf32, #tpu.memory_space<vmem>>) attributes {dimension_semantics = [#tpu.dimension_semantics<parallel>], iteration_bounds = array<i64: 1>, scalar_prefetch = 0 : i64, scratch_operands = 0 : i64, tpu.core_type = #tpu.core_type<tc>, window_params = [{transform_indices = @transform_0, window_bounds = array<i64: 4, 512>}, {transform_indices = @transform_1, window_bounds = array<i64: 4, 512>}, {pipeline_mode = #tpu.pipeline_mode<synchronous>, transform_indices = @transform_2, window_bounds = array<i64: 32, 4>}, {pipeline_mode = #tpu.pipeline_mode<synchronous>, transform_indices = @transform_3, window_bounds = array<i64: 96, 32>}, {pipeline_mode = #tpu.pipeline_mode<synchronous>, transform_indices = @transform_4, window_bounds = array<i64: 96, 1>}, {pipeline_mode = #tpu.pipeline_mode<synchronous>, transform_indices = @transform_5, window_bounds = array<i64: 64, 64>}, {pipeline_mode = #tpu.pipeline_mode<synchronous>, transform_indices = @transform_6, window_bounds = array<i64: 4, 32>}, {pipeline_mode = #tpu.pipeline_mode<synchronous>, transform_indices = @transform_7, window_bounds = array<i64: 32, 4>}, {transform_indices = @transform_8, window_bounds = array<i64: 8, 512>}]} {
    %c0 = arith.constant 0 : index
    %c0_0 = arith.constant 0 : index
    %0 = vector.load %arg1[%c0, %c0_0] : memref<4x512xf32, #tpu.memory_space<vmem>>, vector<4x512xf32>
    %c0_1 = arith.constant 0 : index
    %c0_2 = arith.constant 0 : index
    %1 = vector.load %arg2[%c0_1, %c0_2] : memref<4x512xf32, #tpu.memory_space<vmem>>, vector<4x512xf32>
    %c0_3 = arith.constant 0 : index
    %c0_4 = arith.constant 0 : index
    %2 = vector.load %arg3[%c0_3, %c0_4] : memref<32x4xf32, #tpu.memory_space<vmem>>, vector<32x4xf32>
    %cst = arith.constant dense<0.000000e+00> : vector<32x512xf32>
    %3 = tpu.matmul %2, %0, %cst {dimension_numbers = #tpu.dot_dimension_numbers<[1], [0], [0], [1], [0, 0, 1, 1], [], []>} : vector<32x4xf32>, vector<4x512xf32>, vector<32x512xf32> -> vector<32x512xf32>
    %cst_5 = arith.constant dense<0.000000e+00> : vector<512xf32>
    %4 = vector.multi_reduction <add>, %3, %cst_5 [0] : vector<32x512xf32> to vector<512xf32>
    %5 = vector.shape_cast %4 : vector<512xf32> to vector<1x512xf32>
    %cst_6 = arith.constant 3.200000e+01 : f32
    %6 = vector.broadcast %cst_6 : f32 to vector<1x512xf32>
    %7 = arith.divf %5, %6 : vector<1x512xf32>
    %8 = vector.broadcast %7 : vector<1x512xf32> to vector<32x512xf32>
    %9 = arith.subf %3, %8 : vector<32x512xf32>
    %10 = arith.mulf %9, %9 : vector<32x512xf32>
    %cst_7 = arith.constant dense<0.000000e+00> : vector<512xf32>
    %11 = vector.multi_reduction <add>, %10, %cst_7 [0] : vector<32x512xf32> to vector<512xf32>
    %12 = vector.shape_cast %11 : vector<512xf32> to vector<1x512xf32>
    %cst_8 = arith.constant 3.200000e+01 : f32
    %13 = vector.broadcast %cst_8 : f32 to vector<1x512xf32>
    %14 = arith.divf %12, %13 : vector<1x512xf32>
    %15 = vector.broadcast %7 : vector<1x512xf32> to vector<32x512xf32>
    %16 = arith.subf %3, %15 : vector<32x512xf32>
    %cst_9 = arith.constant 9.99999974E-6 : f32
    %17 = vector.broadcast %cst_9 : f32 to vector<1x512xf32>
    %18 = arith.addf %14, %17 : vector<1x512xf32>
    %19 = math.rsqrt %18 : vector<1x512xf32>
    %20 = vector.broadcast %19 : vector<1x512xf32> to vector<32x512xf32>
    %21 = arith.mulf %16, %20 : vector<32x512xf32>
    %cst_10 = arith.constant 0.000000e+00 : f32
    %22 = vector.broadcast %cst_10 : f32 to vector<32x512xf32>
    %23 = arith.maximumf %21, %22 : vector<32x512xf32>
    %c0_11 = arith.constant 0 : index
    %c0_12 = arith.constant 0 : index
    %24 = vector.load %arg4[%c0_11, %c0_12] : memref<96x32xf32, #tpu.memory_space<vmem>>, vector<96x32xf32>
    %cst_13 = arith.constant dense<0.000000e+00> : vector<96x512xf32>
    %25 = tpu.matmul %24, %23, %cst_13 {dimension_numbers = #tpu.dot_dimension_numbers<[1], [0], [0], [1], [0, 0, 1, 1], [], []>} : vector<96x32xf32>, vector<32x512xf32>, vector<96x512xf32> -> vector<96x512xf32>
    %c0_14 = arith.constant 0 : index
    %c0_15 = arith.constant 0 : index
    %26 = vector.load %arg5[%c0_14, %c0_15] : memref<96x1xf32, #tpu.memory_space<vmem>>, vector<96x1xf32>
    %27 = vector.broadcast %26 : vector<96x1xf32> to vector<96x512xf32>
    %28 = arith.addf %25, %27 : vector<96x512xf32>
    %c0_16 = arith.constant 0 : index
    %c0_17 = arith.constant 0 : index
    %29 = vector.load %arg6[%c0_16, %c0_17] : memref<64x64xf32, #tpu.memory_space<vmem>>, vector<64x64xf32>
    %c0_18 = arith.constant 0 : index
    %c0_19 = arith.constant 0 : index
    %30 = vector.load %arg7[%c0_18, %c0_19] : memref<4x32xf32, #tpu.memory_space<vmem>>, vector<4x32xf32>
    %c0_20 = arith.constant 0 : index
    %c0_21 = arith.constant 0 : index
    %31 = vector.load %arg8[%c0_20, %c0_21] : memref<32x4xf32, #tpu.memory_space<vmem>>, vector<32x4xf32>
    %32 = vector.extract_strided_slice %28 {offsets = [0, 0], sizes = [64, 512], strides = [1, 1]} : vector<96x512xf32> to vector<64x512xf32>
    %33 = vector.shape_cast %32 : vector<64x512xf32> to vector<8x8x512xf32>
    %cst_22 = arith.constant dense<0xFF800000> : vector<8x512xf32>
    %34 = vector.multi_reduction <maximumf>, %33, %cst_22 [1] : vector<8x8x512xf32> to vector<8x512xf32>
    %35 = vector.shape_cast %34 : vector<8x512xf32> to vector<8x1x512xf32>
    %36 = vector.broadcast %35 : vector<8x1x512xf32> to vector<8x8x512xf32>
    %37 = arith.subf %33, %36 : vector<8x8x512xf32>
    %38 = math.exp %37 : vector<8x8x512xf32>
    %cst_23 = arith.constant dense<0.000000e+00> : vector<8x512xf32>
    %39 = vector.multi_reduction <add>, %38, %cst_23 [1] : vector<8x8x512xf32> to vector<8x512xf32>
    %40 = vector.shape_cast %39 : vector<8x512xf32> to vector<8x1x512xf32>
    %41 = vector.broadcast %40 : vector<8x1x512xf32> to vector<8x8x512xf32>
    %42 = arith.divf %38, %41 : vector<8x8x512xf32>
    %cst_24 = arith.constant 0.991999983 : f32
    %43 = vector.broadcast %cst_24 : f32 to vector<8x8x512xf32>
    %44 = arith.mulf %43, %42 : vector<8x8x512xf32>
    %cst_25 = arith.constant 1.000000e-03 : f32
    %45 = vector.broadcast %cst_25 : f32 to vector<8x8x512xf32>
    %46 = arith.addf %45, %44 : vector<8x8x512xf32>
    %47 = vector.shape_cast %46 : vector<8x8x512xf32> to vector<64x512xf32>
    %cst_26 = arith.constant dense<0.000000e+00> : vector<64x512xf32>
    %48 = tpu.matmul %29, %47, %cst_26 {dimension_numbers = #tpu.dot_dimension_numbers<[1], [0], [0], [1], [0, 0, 1, 1], [], []>} : vector<64x64xf32>, vector<64x512xf32>, vector<64x512xf32> -> vector<64x512xf32>
    %cst_27 = arith.constant 6.000000e+00 : f32
    %49 = vector.broadcast %cst_27 : f32 to vector<64x512xf32>
    %50 = arith.mulf %49, %48 : vector<64x512xf32>
    %cst_28 = arith.constant 3.000000e+00 : f32
    %51 = vector.broadcast %cst_28 : f32 to vector<64x512xf32>
    %52 = arith.subf %50, %51 : vector<64x512xf32>
    %53 = vector.extract_strided_slice %52 {offsets = [0, 0], sizes = [32, 512], strides = [1, 1]} : vector<64x512xf32> to vector<32x512xf32>
    %54 = vector.extract_strided_slice %52 {offsets = [32, 0], sizes = [32, 512], strides = [1, 1]} : vector<64x512xf32> to vector<32x512xf32>
    %cst_29 = arith.constant dense<0.000000e+00> : vector<32x512xf32>
    %55 = tpu.matmul %31, %1, %cst_29 {dimension_numbers = #tpu.dot_dimension_numbers<[1], [0], [0], [1], [0, 0, 1, 1], [], []>} : vector<32x4xf32>, vector<4x512xf32>, vector<32x512xf32> -> vector<32x512xf32>
    %56 = arith.cmpf oge, %55, %53 : vector<32x512xf32>
    %57 = arith.extui %56 : vector<32x512xi1> to vector<32x512xi32>
    %58 = arith.sitofp %57 : vector<32x512xi32> to vector<32x512xf32>
    %cst_30 = arith.constant dense<0.000000e+00> : vector<4x512xf32>
    %59 = tpu.matmul %30, %58, %cst_30 {dimension_numbers = #tpu.dot_dimension_numbers<[1], [0], [0], [1], [0, 0, 1, 1], [], []>} : vector<4x32xf32>, vector<32x512xf32>, vector<4x512xf32> -> vector<4x512xf32>
    %cst_31 = arith.constant 1.000000e+00 : f32
    %60 = vector.broadcast %cst_31 : f32 to vector<4x512xf32>
    %61 = arith.subf %59, %60 : vector<4x512xf32>
    %cst_32 = arith.constant 0.000000e+00 : f32
    %cst_33 = arith.constant 7.000000e+00 : f32
    %62 = vector.broadcast %cst_32 : f32 to vector<4x512xf32>
    %63 = arith.maximumf %62, %61 : vector<4x512xf32>
    %64 = vector.broadcast %cst_33 : f32 to vector<4x512xf32>
    %65 = arith.minimumf %64, %63 : vector<4x512xf32>
    %cst_34 = arith.constant dense<0.000000e+00> : vector<32x512xf32>
    %66 = tpu.matmul %31, %65, %cst_34 {dimension_numbers = #tpu.dot_dimension_numbers<[1], [0], [0], [1], [0, 0, 1, 1], [], []>} : vector<32x4xf32>, vector<4x512xf32>, vector<32x512xf32> -> vector<32x512xf32>
    %67 = tpu.iota {dimensions = array<i32: 0>} : vector<32x512xi32>
    %c8_i32 = arith.constant 8 : i32
    %c0_i32 = arith.constant 0 : i32
    %68 = arith.cmpi eq, %c8_i32, %c0_i32 : i32
    %c1_i32 = arith.constant 1 : i32
    %69 = arith.select %68, %c1_i32, %c8_i32 : i32
    %70 = vector.broadcast %69 : i32 to vector<32x512xi32>
    %71 = arith.remsi %67, %70 : vector<32x512xi32>
    %c0_i32_35 = arith.constant 0 : i32
    %72 = vector.broadcast %c0_i32_35 : i32 to vector<32x512xi32>
    %73 = arith.cmpi ne, %71, %72 : vector<32x512xi32>
    %c0_i32_36 = arith.constant 0 : i32
    %74 = vector.broadcast %c0_i32_36 : i32 to vector<32x512xi32>
    %75 = arith.cmpi slt, %71, %74 : vector<32x512xi32>
    %c0_i32_37 = arith.constant 0 : i32
    %76 = arith.cmpi slt, %69, %c0_i32_37 : i32
    %77 = vector.broadcast %76 : i1 to vector<32x512xi1>
    %78 = vector.broadcast %77 : vector<32x512xi1> to vector<32x512xi1>
    %79 = arith.xori %75, %78 : vector<32x512xi1>
    %80 = arith.andi %79, %73 : vector<32x512xi1>
    %81 = vector.broadcast %69 : i32 to vector<32x512xi32>
    %82 = arith.addi %71, %81 : vector<32x512xi32>
    %83 = arith.select %80, %82, %71 : vector<32x512xi1>, vector<32x512xi32>
    %84 = arith.sitofp %83 : vector<32x512xi32> to vector<32x512xf32>
    %85 = arith.cmpf oeq, %84, %66 : vector<32x512xf32>
    %86 = arith.extui %85 : vector<32x512xi1> to vector<32x512xi32>
    %87 = arith.sitofp %86 : vector<32x512xi32> to vector<32x512xf32>
    %cst_38 = arith.constant 7.000000e+00 : f32
    %88 = vector.broadcast %cst_38 : f32 to vector<32x512xf32>
    %89 = arith.cmpf oeq, %66, %88 : vector<32x512xf32>
    %cst_39 = arith.constant 1.000000e+00 : f32
    %90 = vector.broadcast %cst_39 : f32 to vector<32x512xf32>
    %91 = arith.addf %66, %90 : vector<32x512xf32>
    %cst_40 = arith.constant 0.000000e+00 : f32
    %92 = vector.broadcast %cst_40 : f32 to vector<32x512xf32>
    %93 = arith.select %89, %92, %91 : vector<32x512xi1>, vector<32x512xf32>
    %94 = arith.cmpf oeq, %84, %93 : vector<32x512xf32>
    %95 = arith.extui %94 : vector<32x512xi1> to vector<32x512xi32>
    %96 = arith.sitofp %95 : vector<32x512xi32> to vector<32x512xf32>
    %97 = vector.extract_strided_slice %28 {offsets = [64, 0], sizes = [32, 512], strides = [1, 1]} : vector<96x512xf32> to vector<32x512xf32>
    %98 = arith.mulf %53, %87 : vector<32x512xf32>
    %cst_41 = arith.constant dense<0.000000e+00> : vector<4x512xf32>
    %99 = tpu.matmul %30, %98, %cst_41 {dimension_numbers = #tpu.dot_dimension_numbers<[1], [0], [0], [1], [0, 0, 1, 1], [], []>} : vector<4x32xf32>, vector<32x512xf32>, vector<4x512xf32> -> vector<4x512xf32>
    %100 = arith.mulf %54, %87 : vector<32x512xf32>
    %cst_42 = arith.constant dense<0.000000e+00> : vector<4x512xf32>
    %101 = tpu.matmul %30, %100, %cst_42 {dimension_numbers = #tpu.dot_dimension_numbers<[1], [0], [0], [1], [0, 0, 1, 1], [], []>} : vector<4x32xf32>, vector<32x512xf32>, vector<4x512xf32> -> vector<4x512xf32>
    %102 = vector.extract_strided_slice %47 {offsets = [0, 0], sizes = [32, 512], strides = [1, 1]} : vector<64x512xf32> to vector<32x512xf32>
    %103 = arith.mulf %102, %87 : vector<32x512xf32>
    %cst_43 = arith.constant dense<0.000000e+00> : vector<4x512xf32>
    %104 = tpu.matmul %30, %103, %cst_43 {dimension_numbers = #tpu.dot_dimension_numbers<[1], [0], [0], [1], [0, 0, 1, 1], [], []>} : vector<4x32xf32>, vector<32x512xf32>, vector<4x512xf32> -> vector<4x512xf32>
    %cst_44 = arith.constant 6.000000e+00 : f32
    %105 = vector.broadcast %cst_44 : f32 to vector<4x512xf32>
    %106 = arith.mulf %105, %104 : vector<4x512xf32>
    %107 = vector.extract_strided_slice %47 {offsets = [32, 0], sizes = [32, 512], strides = [1, 1]} : vector<64x512xf32> to vector<32x512xf32>
    %108 = arith.mulf %107, %87 : vector<32x512xf32>
    %cst_45 = arith.constant dense<0.000000e+00> : vector<4x512xf32>
    %109 = tpu.matmul %30, %108, %cst_45 {dimension_numbers = #tpu.dot_dimension_numbers<[1], [0], [0], [1], [0, 0, 1, 1], [], []>} : vector<4x32xf32>, vector<32x512xf32>, vector<4x512xf32> -> vector<4x512xf32>
    %cst_46 = arith.constant 6.000000e+00 : f32
    %110 = vector.broadcast %cst_46 : f32 to vector<4x512xf32>
    %111 = arith.mulf %110, %109 : vector<4x512xf32>
    %112 = arith.mulf %97, %87 : vector<32x512xf32>
    %cst_47 = arith.constant dense<0.000000e+00> : vector<4x512xf32>
    %113 = tpu.matmul %30, %112, %cst_47 {dimension_numbers = #tpu.dot_dimension_numbers<[1], [0], [0], [1], [0, 0, 1, 1], [], []>} : vector<4x32xf32>, vector<32x512xf32>, vector<4x512xf32> -> vector<4x512xf32>
    %114 = arith.mulf %97, %96 : vector<32x512xf32>
    %cst_48 = arith.constant dense<0.000000e+00> : vector<4x512xf32>
    %115 = tpu.matmul %30, %114, %cst_48 {dimension_numbers = #tpu.dot_dimension_numbers<[1], [0], [0], [1], [0, 0, 1, 1], [], []>} : vector<4x32xf32>, vector<32x512xf32>, vector<4x512xf32> -> vector<4x512xf32>
    %116 = math.absf %113 : vector<4x512xf32>
    %cst_49 = arith.constant 0.000000e+00 : f32
    %117 = vector.broadcast %cst_49 : f32 to vector<4x512xf32>
    %118 = arith.subf %117, %116 : vector<4x512xf32>
    %119 = math.exp %118 : vector<4x512xf32>
    %cst_50 = arith.constant 1.000000e+00 : f32
    %120 = vector.broadcast %cst_50 : f32 to vector<4x512xf32>
    %121 = arith.addf %120, %119 : vector<4x512xf32>
    %122 = math.log %121 : vector<4x512xf32>
    %cst_51 = arith.constant 0.000000e+00 : f32
    %123 = vector.broadcast %cst_51 : f32 to vector<4x512xf32>
    %124 = arith.maximumf %113, %123 : vector<4x512xf32>
    %125 = arith.addf %122, %124 : vector<4x512xf32>
    %cst_52 = arith.constant 1.000000e-03 : f32
    %126 = vector.broadcast %cst_52 : f32 to vector<4x512xf32>
    %127 = arith.addf %126, %125 : vector<4x512xf32>
    %128 = math.absf %115 : vector<4x512xf32>
    %cst_53 = arith.constant 0.000000e+00 : f32
    %129 = vector.broadcast %cst_53 : f32 to vector<4x512xf32>
    %130 = arith.subf %129, %128 : vector<4x512xf32>
    %131 = math.exp %130 : vector<4x512xf32>
    %cst_54 = arith.constant 1.000000e+00 : f32
    %132 = vector.broadcast %cst_54 : f32 to vector<4x512xf32>
    %133 = arith.addf %132, %131 : vector<4x512xf32>
    %134 = math.log %133 : vector<4x512xf32>
    %cst_55 = arith.constant 0.000000e+00 : f32
    %135 = vector.broadcast %cst_55 : f32 to vector<4x512xf32>
    %136 = arith.maximumf %115, %135 : vector<4x512xf32>
    %137 = arith.addf %134, %136 : vector<4x512xf32>
    %cst_56 = arith.constant 1.000000e-03 : f32
    %138 = vector.broadcast %cst_56 : f32 to vector<4x512xf32>
    %139 = arith.addf %138, %137 : vector<4x512xf32>
    %cst_57 = arith.constant 1.000000e+00 : f32
    %140 = vector.broadcast %cst_57 : f32 to vector<4x512xf32>
    %141 = arith.divf %140, %106 : vector<4x512xf32>
    %142 = arith.mulf %111, %141 : vector<4x512xf32>
    %143 = arith.subf %1, %99 : vector<4x512xf32>
    %144 = arith.mulf %143, %141 : vector<4x512xf32>
    %cst_58 = arith.constant 1.000000e+00 : f32
    %145 = vector.broadcast %cst_58 : f32 to vector<4x512xf32>
    %146 = arith.subf %145, %144 : vector<4x512xf32>
    %147 = arith.mulf %144, %146 : vector<4x512xf32>
    %148 = arith.mulf %142, %144 : vector<4x512xf32>
    %149 = arith.mulf %148, %144 : vector<4x512xf32>
    %150 = arith.mulf %127, %147 : vector<4x512xf32>
    %151 = arith.addf %149, %150 : vector<4x512xf32>
    %152 = arith.mulf %111, %151 : vector<4x512xf32>
    %153 = arith.addf %127, %139 : vector<4x512xf32>
    %cst_59 = arith.constant 2.000000e+00 : f32
    %154 = vector.broadcast %cst_59 : f32 to vector<4x512xf32>
    %155 = arith.mulf %154, %142 : vector<4x512xf32>
    %156 = arith.subf %153, %155 : vector<4x512xf32>
    %157 = arith.mulf %156, %147 : vector<4x512xf32>
    %158 = arith.addf %142, %157 : vector<4x512xf32>
    %cst_60 = arith.constant 1.000000e+00 : f32
    %159 = vector.broadcast %cst_60 : f32 to vector<4x512xf32>
    %160 = arith.divf %159, %158 : vector<4x512xf32>
    %161 = arith.mulf %152, %160 : vector<4x512xf32>
    %162 = arith.addf %101, %161 : vector<4x512xf32>
    %163 = arith.mulf %142, %142 : vector<4x512xf32>
    %164 = arith.mulf %139, %144 : vector<4x512xf32>
    %165 = arith.mulf %164, %144 : vector<4x512xf32>
    %cst_61 = arith.constant 2.000000e+00 : f32
    %166 = vector.broadcast %cst_61 : f32 to vector<4x512xf32>
    %167 = arith.mulf %166, %142 : vector<4x512xf32>
    %168 = arith.mulf %167, %147 : vector<4x512xf32>
    %169 = arith.addf %165, %168 : vector<4x512xf32>
    %cst_62 = arith.constant 1.000000e+00 : f32
    %170 = vector.broadcast %cst_62 : f32 to vector<4x512xf32>
    %171 = arith.subf %170, %144 : vector<4x512xf32>
    %172 = arith.mulf %127, %171 : vector<4x512xf32>
    %cst_63 = arith.constant 1.000000e+00 : f32
    %173 = vector.broadcast %cst_63 : f32 to vector<4x512xf32>
    %174 = arith.subf %173, %144 : vector<4x512xf32>
    %175 = arith.mulf %172, %174 : vector<4x512xf32>
    %176 = arith.addf %169, %175 : vector<4x512xf32>
    %177 = arith.mulf %163, %176 : vector<4x512xf32>
    %178 = arith.mulf %160, %160 : vector<4x512xf32>
    %179 = arith.mulf %177, %178 : vector<4x512xf32>
    %180 = math.log %179 : vector<4x512xf32>
    %cst_64 = arith.constant -3.000000e+00 : f32
    %181 = vector.broadcast %cst_64 : f32 to vector<4x512xf32>
    %182 = arith.cmpf oge, %1, %181 : vector<4x512xf32>
    %cst_65 = arith.constant 3.000000e+00 : f32
    %183 = vector.broadcast %cst_65 : f32 to vector<4x512xf32>
    %184 = arith.cmpf ole, %1, %183 : vector<4x512xf32>
    %185 = arith.andi %182, %184 : vector<4x512xi1>
    %186 = arith.select %185, %162, %1 : vector<4x512xi1>, vector<4x512xf32>
    %cst_66 = arith.constant 0.000000e+00 : f32
    %187 = vector.broadcast %cst_66 : f32 to vector<4x512xf32>
    %188 = arith.select %185, %180, %187 : vector<4x512xi1>, vector<4x512xf32>
    %189 = tpu.concatenate %186, %188 in 0 : vector<4x512xf32>, vector<4x512xf32> -> vector<8x512xf32>
    %c0_67 = arith.constant 0 : index
    %c0_68 = arith.constant 0 : index
    %190 = vector.load %arg9[%c0_67, %c0_68] : memref<8x512xf32, #tpu.memory_space<vmem>>, vector<8x512xf32>
    tpu.vector_store %arg9[%c0_67, %c0_68], %189 {strides = array<i32>} : memref<8x512xf32, #tpu.memory_space<vmem>>, vector<8x512xf32>,
    return
  }
  func.func @transform_0(%arg0: i32) -> (i32, i32) {
    %c0_i32 = arith.constant 0 : i32
    %c0_i32_0 = arith.constant 0 : i32
    return %c0_i32, %arg0 : i32, i32
  }
  func.func @transform_1(%arg0: i32) -> (i32, i32) {
    %c0_i32 = arith.constant 0 : i32
    %c0_i32_0 = arith.constant 0 : i32
    return %c0_i32, %arg0 : i32, i32
  }
  func.func @transform_2(%arg0: i32) -> (i32, i32) {
    %c0_i32 = arith.constant 0 : i32
    %c0_i32_0 = arith.constant 0 : i32
    %c0_i32_1 = arith.constant 0 : i32
    return %c0_i32, %c0_i32_0 : i32, i32
  }
  func.func @transform_3(%arg0: i32) -> (i32, i32) {
    %c0_i32 = arith.constant 0 : i32
    %c0_i32_0 = arith.constant 0 : i32
    %c0_i32_1 = arith.constant 0 : i32
    return %c0_i32, %c0_i32_0 : i32, i32
  }
  func.func @transform_4(%arg0: i32) -> (i32, i32) {
    %c0_i32 = arith.constant 0 : i32
    %c0_i32_0 = arith.constant 0 : i32
    %c0_i32_1 = arith.constant 0 : i32
    return %c0_i32, %c0_i32_0 : i32, i32
  }
  func.func @transform_5(%arg0: i32) -> (i32, i32) {
    %c0_i32 = arith.constant 0 : i32
    %c0_i32_0 = arith.constant 0 : i32
    %c0_i32_1 = arith.constant 0 : i32
    return %c0_i32, %c0_i32_0 : i32, i32
  }
  func.func @transform_6(%arg0: i32) -> (i32, i32) {
    %c0_i32 = arith.constant 0 : i32
    %c0_i32_0 = arith.constant 0 : i32
    %c0_i32_1 = arith.constant 0 : i32
    return %c0_i32, %c0_i32_0 : i32, i32
  }
  func.func @transform_7(%arg0: i32) -> (i32, i32) {
    %c0_i32 = arith.constant 0 : i32
    %c0_i32_0 = arith.constant 0 : i32
    %c0_i32_1 = arith.constant 0 : i32
    return %c0_i32, %c0_i32_0 : i32, i32
  }
  func.func @transform_8(%arg0: i32) -> (i32, i32) {
    %c0_i32 = arith.constant 0 : i32
    %c0_i32_0 = arith.constant 0 : i32
    return %c0_i32, %arg0 : i32, i32
  }
}

</mosaic_0001>

<llo_original>
// kernel: spline_coupling_forward.1
$region0: #{spline_coupling_forward.1}
  #allocation0 [shape = 'u32[]', space=smem, size = 0x4, offset = 0x4, fixed_abs, tag = 'smem constant byte address 0x4 - core index']
  #allocation1 [shape = 'u32[144,128]{1,0:T(1,128)}', space=vmem, size = 0x12000, scoped, tag = 'internal scratch']
  %s0 = inlined_call_operand.vmem [shape: f32[4,512], index: 0, kind: input, shape index: {}]
  %s1 = inlined_call_operand.vmem [shape: f32[4,512], index: 1, kind: input, shape index: {}]
  %s2 = inlined_call_operand.vmem [shape: f32[32,4], index: 2, kind: input, shape index: {}]
  %s3 = inlined_call_operand.vmem [shape: f32[96,32], index: 3, kind: input, shape index: {}]
  %s4 = inlined_call_operand.vmem [shape: f32[96,1], index: 4, kind: input, shape index: {}]
  %s5 = inlined_call_operand.vmem [shape: f32[64,64], index: 5, kind: input, shape index: {}]
  %s6 = inlined_call_operand.vmem [shape: f32[4,32], index: 6, kind: input, shape index: {}]
  %s7 = inlined_call_operand.vmem [shape: f32[32,4], index: 7, kind: input, shape index: {}]
  %s8 = inlined_call_operand.vmem [shape: f32[8,512], index: 8, kind: output, shape index: {}]
  %s9 = sld [smem:[#allocation0]]
  $region42: #{spline_coupling_forward.1} parent=0
    _
  %s11 = ssub.s32 1, %s9
  %s12 = scalar_select 0, %s11, %s9
  // Predicated region
  $region2: #{spline_coupling_forward.1} parent=0 // pred_check
    _
  $region3: #{spline_coupling_forward.1} parent=0 // pred_check_branch
    %14 = sbr.rel (0) target = $region5
  $region4: #{spline_coupling_forward.1} parent=0 // pred_region
    _
  $region5: #{spline_coupling_forward.1} parent=0 // pred_fallthru
    _
  // Predicated region
  $region6: #{spline_coupling_forward.1} parent=0 // pred_check
    _
  $region7: #{spline_coupling_forward.1} parent=0 // pred_check_branch
    %16 = sbr.rel (0) target = $region9
  $region8: #{spline_coupling_forward.1} parent=0 // pred_region
    _
  $region9: #{spline_coupling_forward.1} parent=0 // pred_fallthru
    _
  // Predicated region
  $region10: #{spline_coupling_forward.1} parent=0 // pred_check
    _
  $region11: #{spline_coupling_forward.1} parent=0 // pred_check_branch
    %18 = sbr.rel (0) target = $region13
  $region12: #{spline_coupling_forward.1} parent=0 // pred_region
    _
  $region13: #{spline_coupling_forward.1} parent=0 // pred_fallthru
    _
  // Predicated region
  $region14: #{spline_coupling_forward.1} parent=0 // pred_check
    _
  $region15: #{spline_coupling_forward.1} parent=0 // pred_check_branch
    %20 = sbr.rel (0) target = $region17
  $region16: #{spline_coupling_forward.1} parent=0 // pred_region
    _
  $region17: #{spline_coupling_forward.1} parent=0 // pred_fallthru
    _
  // Predicated region
  $region18: #{spline_coupling_forward.1} parent=0 // pred_check
    _
  $region19: #{spline_coupling_forward.1} parent=0 // pred_check_branch
    %22 = sbr.rel (0) target = $region21
  $region20: #{spline_coupling_forward.1} parent=0 // pred_region
    _
  $region21: #{spline_coupling_forward.1} parent=0 // pred_fallthru
    _
  // Predicated region
  $region22: #{spline_coupling_forward.1} parent=0 // pred_check
    _
  $region23: #{spline_coupling_forward.1} parent=0 // pred_check_branch
    %24 = sbr.rel (0) target = $region25
  $region24: #{spline_coupling_forward.1} parent=0 // pred_region
    _
  $region25: #{spline_coupling_forward.1} parent=0 // pred_fallthru
    _
  // Predicated region
  $region26: #{spline_coupling_forward.1} parent=0 // pred_check
    _
  $region27: #{spline_coupling_forward.1} parent=0 // pred_check_branch
    %26 = sbr.rel (0) target = $region29
  $region28: #{spline_coupling_forward.1} parent=0 // pred_region
    _
  $region29: #{spline_coupling_forward.1} parent=0 // pred_fallthru
    _
  // Predicated region
  $region30: #{spline_coupling_forward.1} parent=0 // pred_check
    _
  $region31: #{spline_coupling_forward.1} parent=0 // pred_check_branch
    %28 = sbr.rel (0) target = $region33
  $region32: #{spline_coupling_forward.1} parent=0 // pred_region
    _
  $region33: #{spline_coupling_forward.1} parent=0 // pred_fallthru
    _
  %v29 = vld [vmem:[%s0] sm:$0xff]
  %v30 = vld [vmem:[%s0 + $0x8] sm:$0xff]
  %v31 = vld [vmem:[%s1] sm:$0xff]
  %v32 = vld [vmem:[%s1 + $0x8] sm:$0xff]
  %v33 = vld [vmem:[%s2] sm:$0xff]
  %v34 = vld [vmem:[%s2 + $0x8] sm:$0xff]
  %v35 = vld [vmem:[%s2 + $0x10] sm:$0xff]
  %v36 = vld [vmem:[%s2 + $0x18] sm:$0xff]
  %v39 = vcombine.high %v29, %v29
  %v40 = vcombine.high %v30, %v30
  %vm41 = vcmask 31744
  %v43 = vsel %vm41, %v33, 0
  %v46 = vsel %vm41, %v34, 0
  %v49 = vsel %vm41, %v35, 0
  %v52 = vsel %vm41, %v36, 0
  %vm54 = vcmask 1043456
  %v55 = vsel %vm54, %v29, 0
  %v57 = vsel %vm54, %v39, 0
  %v59 = vsel %vm54, %v30, 0
  %v61 = vsel %vm54, %v40, 0
  %63 = vmatprep.subr.mxu0 %v57
  %64 = vmatpush1.msra.mxu0 %v55
  %65 = vmatprep.subr.mxu0 0.0
  %66 = vmatpush1.msra.mxu0 0.0
  %67 = vmatprep.subr.mxu0 0.0
  %68 = vmatpush1.msra.mxu0 0.0
  %69 = vmatprep.subr.mxu0 0.0
  %70 = vmatpush1.msra.mxu0 0.0
  %71 = vmatprep.subr.mxu0 0.0
  %72 = vmatpush1.msra.mxu0 0.0
  %73 = vmatprep.subr.mxu0 0.0
  %74 = vmatpush1.msra.mxu0 0.0
  %75 = vmatprep.subr.mxu0 0.0
  %76 = vmatpush1.msra.mxu0 0.0
  %77 = vmatprep.subr.mxu0 0.0
  %78 = vmatpush1.msra.mxu0 0.0
  %79 = vmatprep.subr.mxu0 0.0
  %80 = vmatpush1.msra.mxu0 0.0
  %81 = vmatprep.subr.mxu0 0.0
  %82 = vmatpush1.msra.mxu0 0.0
  %83 = vmatprep.subr.mxu0 0.0
  %84 = vmatpush1.msra.mxu0 0.0
  %85 = vmatprep.subr.mxu0 0.0
  %86 = vmatpush1.msra.mxu0 0.0
  %87 = vmatprep.subr.mxu0 0.0
  %88 = vmatpush1.msra.mxu0 0.0
  %89 = vmatprep.subr.mxu0 0.0
  %90 = vmatpush1.msra.mxu0 0.0
  %91 = vmatprep.subr.mxu0 0.0
  %92 = vmatpush1.msra.mxu0 0.0
  %93 = vmatprep.subr.mxu0 0.0
  %94 = vmatpush1.msra.mxu0 0.0
  %95 = vmatprep.subr.mxu0 0.0
  %96 = vmatpush1.msra.mxu0 0.0
  %97 = vmatprep.subr.mxu0 0.0
  %98 = vmatpush1.msra.mxu0 0.0
  %99 = vmatprep.subr.mxu0 0.0
  %100 = vmatpush1.msra.mxu0 0.0
  %101 = vmatprep.subr.mxu0 0.0
  %102 = vmatpush1.msra.mxu0 0.0
  %103 = vmatprep.subr.mxu0 0.0
  %104 = vmatpush1.msra.mxu0 0.0
  %105 = vmatprep.subr.mxu0 0.0
  %106 = vmatpush1.msra.mxu0 0.0
  %107 = vmatprep.subr.mxu0 0.0
  %108 = vmatpush1.msra.mxu0 0.0
  %109 = vmatprep.subr.mxu0 0.0
  %110 = vmatpush1.msra.mxu0 0.0
  %111 = vmatprep.subr.mxu0 0.0
  %112 = vmatpush1.msra.mxu0 0.0
  %113 = vmatprep.subr.mxu0 0.0
  %114 = vmatpush1.msra.mxu0 0.0
  %115 = vmatprep.subr.mxu0 0.0
  %116 = vmatpush1.msra.mxu0 0.0
  %117 = vmatprep.subr.mxu0 0.0
  %118 = vmatpush1.msra.mxu0 0.0
  %119 = vmatprep.subr.mxu0 0.0
  %120 = vmatpush1.msra.mxu0 0.0
  %121 = vmatprep.subr.mxu0 0.0
  %122 = vmatpush1.msra.mxu0 0.0
  %123 = vmatprep.subr.mxu0 0.0
  %124 = vmatpush1.msra.mxu0 0.0
  %125 = vmatprep.subr.mxu0 0.0
  %126 = vmatpush1.msra.mxu0 0.0
  %127 = vmatprep.mubr.f32.mxu0 0.0
  %128 = vmatmul.mubr.f32.gmra.mrb[0].mxu0 %v43
  %v129 = vpop.f32.mrb[0].mxu0
  %v130 = vadd.f32 0.0, %v129
  %v131 = vpop.f32.mrb[0].mxu0
  %v132 = vadd.f32 0.0, %v131
  %133 = vmatprep.mubr.f32.mxu0 0.0
  %134 = vmatmul.mubr.f32.gmra.mrb[0].mxu0 %v46
  %v135 = vpop.f32.mrb[0].mxu0
  %v136 = vadd.f32 0.0, %v135
  %v137 = vpop.f32.mrb[0].mxu0
  %v138 = vadd.f32 0.0, %v137
  %139 = vmatprep.mubr.f32.mxu0 0.0
  %140 = vmatmul.mubr.f32.gmra.mrb[0].mxu0 %v49
  %v141 = vpop.f32.mrb[0].mxu0
  %v142 = vadd.f32 0.0, %v141
  %v143 = vpop.f32.mrb[0].mxu0
  %v144 = vadd.f32 0.0, %v143
  %145 = vmatprep.mubr.f32.mxu0 0.0
  %146 = vmatmul.mubr.f32.gmra.mrb[0].mxu0 %v52
  %v147 = vpop.f32.mrb[0].mxu0
  %v148 = vadd.f32 0.0, %v147
  %v149 = vpop.f32.mrb[0].mxu0
  %v150 = vadd.f32 0.0, %v149
  %151 = vdwg.mxu0
  %152 = vmatprep.subr.mxu0 %v61
  %153 = vmatpush1.msra.mxu0 %v59
  %154 = vmatprep.subr.mxu0 0.0
  %155 = vmatpush1.msra.mxu0 0.0
  %156 = vmatprep.subr.mxu0 0.0
  %157 = vmatpush1.msra.mxu0 0.0
  %158 = vmatprep.subr.mxu0 0.0
  %159 = vmatpush1.msra.mxu0 0.0
  %160 = vmatprep.subr.mxu0 0.0
  %161 = vmatpush1.msra.mxu0 0.0
  %162 = vmatprep.subr.mxu0 0.0
  %163 = vmatpush1.msra.mxu0 0.0
  %164 = vmatprep.subr.mxu0 0.0
  %165 = vmatpush1.msra.mxu0 0.0
  %166 = vmatprep.subr.mxu0 0.0
  %167 = vmatpush1.msra.mxu0 0.0
  %168 = vmatprep.subr.mxu0 0.0
  %169 = vmatpush1.msra.mxu0 0.0
  %170 = vmatprep.subr.mxu0 0.0
  %171 = vmatpush1.msra.mxu0 0.0
  %172 = vmatprep.subr.mxu0 0.0
  %173 = vmatpush1.msra.mxu0 0.0
  %174 = vmatprep.subr.mxu0 0.0
  %175 = vmatpush1.msra.mxu0 0.0
  %176 = vmatprep.subr.mxu0 0.0
  %177 = vmatpush1.msra.mxu0 0.0
  %178 = vmatprep.subr.mxu0 0.0
  %179 = vmatpush1.msra.mxu0 0.0
  %180 = vmatprep.subr.mxu0 0.0
  %181 = vmatpush1.msra.mxu0 0.0
  %182 = vmatprep.subr.mxu0 0.0
  %183 = vmatpush1.msra.mxu0 0.0
  %184 = vmatprep.subr.mxu0 0.0
  %185 = vmatpush1.msra.mxu0 0.0
  %186 = vmatprep.subr.mxu0 0.0
  %187 = vmatpush1.msra.mxu0 0.0
  %188 = vmatprep.subr.mxu0 0.0
  %189 = vmatpush1.msra.mxu0 0.0
  %190 = vmatprep.subr.mxu0 0.0
  %191 = vmatpush1.msra.mxu0 0.0
  %192 = vmatprep.subr.mxu0 0.0
  %193 = vmatpush1.msra.mxu0 0.0
  %194 = vmatprep.subr.mxu0 0.0
  %195 = vmatpush1.msra.mxu0 0.0
  %196 = vmatprep.subr.mxu0 0.0
  %197 = vmatpush1.msra.mxu0 0.0
  %198 = vmatprep.subr.mxu0 0.0
  %199 = vmatpush1.msra.mxu0 0.0
  %200 = vmatprep.subr.mxu0 0.0
  %201 = vmatpush1.msra.mxu0 0.0
  %202 = vmatprep.subr.mxu0 0.0
  %203 = vmatpush1.msra.mxu0 0.0
  %204 = vmatprep.subr.mxu0 0.0
  %205 = vmatpush1.msra.mxu0 0.0
  %206 = vmatprep.subr.mxu0 0.0
  %207 = vmatpush1.msra.mxu0 0.0
  %208 = vmatprep.subr.mxu0 0.0
  %209 = vmatpush1.msra.mxu0 0.0
  %210 = vmatprep.subr.mxu0 0.0
  %211 = vmatpush1.msra.mxu0 0.0
  %212 = vmatprep.subr.mxu0 0.0
  %213 = vmatpush1.msra.mxu0 0.0
  %214 = vmatprep.subr.mxu0 0.0
  %215 = vmatpush1.msra.mxu0 0.0
  %216 = vmatprep.mubr.f32.mxu0 0.0
  %217 = vmatmul.mubr.f32.gmra.mrb[0].mxu0 %v43
  %v218 = vpop.f32.mrb[0].mxu0
  %v219 = vadd.f32 0.0, %v218
  %v220 = vpop.f32.mrb[0].mxu0
  %v221 = vadd.f32 0.0, %v220
  %222 = vmatprep.mubr.f32.mxu0 0.0
  %223 = vmatmul.mubr.f32.gmra.mrb[0].mxu0 %v46
  %v224 = vpop.f32.mrb[0].mxu0
  %v225 = vadd.f32 0.0, %v224
  %v226 = vpop.f32.mrb[0].mxu0
  %v227 = vadd.f32 0.0, %v226
  %228 = vmatprep.mubr.f32.mxu0 0.0
  %229 = vmatmul.mubr.f32.gmra.mrb[0].mxu0 %v49
  %v230 = vpop.f32.mrb[0].mxu0
  %v231 = vadd.f32 0.0, %v230
  %v232 = vpop.f32.mrb[0].mxu0
  %v233 = vadd.f32 0.0, %v232
  %234 = vmatprep.mubr.f32.mxu0 0.0
  %235 = vmatmul.mubr.f32.gmra.mrb[0].mxu0 %v52
  %v236 = vpop.f32.mrb[0].mxu0
  %v237 = vadd.f32 0.0, %v236
  %v238 = vpop.f32.mrb[0].mxu0
  %v239 = vadd.f32 0.0, %v238
  %240 = vdwg.mxu0
  %v241 = vadd.f32 %v130, %v136
  %v242 = vadd.f32 %v241, %v142
  %v243 = vadd.f32 %v242, %v148
  %v244 = vrot.slane %v243, 4
  %v245 = vadd.f32 %v243, %v244
  %v246 = vrot.slane %v245, 2
  %v247 = vadd.f32 %v245, %v246
  %v248 = vrot.slane %v247, 1
  %v249 = vadd.f32 %v247, %v248
  %v250 = vadd.f32 %v132, %v138
  %v251 = vadd.f32 %v250, %v144
  %v252 = vadd.f32 %v251, %v150
  %v253 = vrot.slane %v252, 4
  %v254 = vadd.f32 %v252, %v253
  %v255 = vrot.slane %v254, 2
  %v256 = vadd.f32 %v254, %v255
  %v257 = vrot.slane %v256, 1
  %v258 = vadd.f32 %v256, %v257
  %v259 = vadd.f32 %v219, %v225
  %v260 = vadd.f32 %v259, %v231
  %v261 = vadd.f32 %v260, %v237
  %v262 = vrot.slane %v261, 4
  %v263 = vadd.f32 %v261, %v262
  %v264 = vrot.slane %v263, 2
  %v265 = vadd.f32 %v263, %v264
  %v266 = vrot.slane %v265, 1
  %v267 = vadd.f32 %v265, %v266
  %v268 = vadd.f32 %v221, %v227
  %v269 = vadd.f32 %v268, %v233
  %v270 = vadd.f32 %v269, %v239
  %v271 = vrot.slane %v270, 4
  %v272 = vadd.f32 %v270, %v271
  %v273 = vrot.slane %v272, 2
  %v274 = vadd.f32 %v272, %v273
  %v275 = vrot.slane %v274, 1
  %v276 = vadd.f32 %v274, %v275
  %v277 = vrcp.pop 32.0
  %v278 = vmul.f32 %v249, %v277
  %v279 = vmul.f32 %v258, %v277
  %v280 = vmul.f32 %v267, %v277
  %v281 = vmul.f32 %v276, %v277
  %v282 = vsub.f32 %v130, %v278
  %v283 = vsub.f32 %v132, %v279
  %v284 = vsub.f32 %v219, %v280
  %v285 = vsub.f32 %v221, %v281
  %v286 = vsub.f32 %v136, %v278
  %v287 = vsub.f32 %v138, %v279
  %v288 = vsub.f32 %v225, %v280
  %v289 = vsub.f32 %v227, %v281
  %v290 = vsub.f32 %v142, %v278
  %v291 = vsub.f32 %v144, %v279
  %v292 = vsub.f32 %v231, %v280
  %v293 = vsub.f32 %v233, %v281
  %v294 = vsub.f32 %v148, %v278
  %v295 = vsub.f32 %v150, %v279
  %v296 = vsub.f32 %v237, %v280
  %v297 = vsub.f32 %v239, %v281
  %v298 = vmul.f32 %v282, %v282
  %v299 = vmul.f32 %v283, %v283
  %v300 = vmul.f32 %v284, %v284
  %v301 = vmul.f32 %v285, %v285
  %v302 = vmul.f32 %v286, %v286
  %v303 = vmul.f32 %v287, %v287
  %v304 = vmul.f32 %v288, %v288
  %v305 = vmul.f32 %v289, %v289
  %v306 = vmul.f32 %v290, %v290
  %v307 = vmul.f32 %v291, %v291
  %v308 = vmul.f32 %v292, %v292
  %v309 = vmul.f32 %v293, %v293
  %v310 = vmul.f32 %v294, %v294
  %v311 = vmul.f32 %v295, %v295
  %v312 = vmul.f32 %v296, %v296
  %v313 = vmul.f32 %v297, %v297
  %v314 = vadd.f32 %v298, %v302
  %v315 = vadd.f32 %v314, %v306
  %v316 = vadd.f32 %v315, %v310
  %v317 = vrot.slane %v316, 4
  %v318 = vadd.f32 %v316, %v317
  %v319 = vrot.slane %v318, 2
  %v320 = vadd.f32 %v318, %v319
  %v321 = vrot.slane %v320, 1
  %v322 = vadd.f32 %v320, %v321
  %v323 = vadd.f32 %v299, %v303
  %v324 = vadd.f32 %v323, %v307
  %v325 = vadd.f32 %v324, %v311
  %v326 = vrot.slane %v325, 4
  %v327 = vadd.f32 %v325, %v326
  %v328 = vrot.slane %v327, 2
  %v329 = vadd.f32 %v327, %v328
  %v330 = vrot.slane %v329, 1
  %v331 = vadd.f32 %v329, %v330
  %v332 = vadd.f32 %v300, %v304
  %v333 = vadd.f32 %v332, %v308
  %v334 = vadd.f32 %v333, %v312
  %v335 = vrot.slane %v334, 4
  %v336 = vadd.f32 %v334, %v335
  %v337 = vrot.slane %v336, 2
  %v338 = vadd.f32 %v336, %v337
  %v339 = vrot.slane %v338, 1
  %v340 = vadd.f32 %v338, %v339
  %v341 = vadd.f32 %v301, %v305
  %v342 = vadd.f32 %v341, %v309
  %v343 = vadd.f32 %v342, %v313
  %v344 = vrot.slane %v343, 4
  %v345 = vadd.f32 %v343, %v344
  %v346 = vrot.slane %v345, 2
  %v347 = vadd.f32 %v345, %v346
  %v348 = vrot.slane %v347, 1
  %v349 = vadd.f32 %v347, %v348
  %v350 = vmul.f32 %v322, %v277
  %v351 = vmul.f32 %v331, %v277
  %v352 = vmul.f32 %v340, %v277
  %v353 = vmul.f32 %v349, %v277
  %v354 = vadd.f32 %v350, 1e-05
  %v355 = vadd.f32 %v351, 1e-05
  %v356 = vadd.f32 %v352, 1e-05
  %v357 = vadd.f32 %v353, 1e-05
  %v358 = vrsqrt.pop %v354
  %v359 = vrsqrt.pop %v355
  %v360 = vrsqrt.pop %v356
  %v361 = vrsqrt.pop %v357
  %v362 = vmul.f32 %v282, %v358
  %v363 = vmul.f32 %v283, %v359
  %v364 = vmul.f32 %v284, %v360
  %v365 = vmul.f32 %v285, %v361
  %v366 = vmul.f32 %v286, %v358
  %v367 = vmul.f32 %v287, %v359
  %v368 = vmul.f32 %v288, %v360
  %v369 = vmul.f32 %v289, %v361
  %v370 = vmul.f32 %v290, %v358
  %v371 = vmul.f32 %v291, %v359
  %v372 = vmul.f32 %v292, %v360
  %v373 = vmul.f32 %v293, %v361
  %v374 = vmul.f32 %v294, %v358
  %v375 = vmul.f32 %v295, %v359
  %v376 = vmul.f32 %v296, %v360
  %v377 = vmul.f32 %v297, %v361
  %v378 = vmax.f32 %v362, 0.0
  %v379 = vmax.f32 %v363, 0.0
  %v380 = vmax.f32 %v364, 0.0
  %v381 = vmax.f32 %v365, 0.0
  %v382 = vmax.f32 %v366, 0.0
  %v383 = vmax.f32 %v367, 0.0
  %v384 = vmax.f32 %v368, 0.0
  %v385 = vmax.f32 %v369, 0.0
  %v386 = vmax.f32 %v370, 0.0
  %v387 = vmax.f32 %v371, 0.0
  %v388 = vmax.f32 %v372, 0.0
  %v389 = vmax.f32 %v373, 0.0
  %v390 = vmax.f32 %v374, 0.0
  %v391 = vmax.f32 %v375, 0.0
  %v392 = vmax.f32 %v376, 0.0
  %v393 = vmax.f32 %v377, 0.0
  %v394 = vld [vmem:[%s3] sm:$0xff]
  %v395 = vld [vmem:[%s3 + $0x8] sm:$0xff]
  %v396 = vld [vmem:[%s3 + $0x10] sm:$0xff]
  %v397 = vld [vmem:[%s3 + $0x18] sm:$0xff]
  %v398 = vld [vmem:[%s3 + $0x20] sm:$0xff]
  %v399 = vld [vmem:[%s3 + $0x28] sm:$0xff]
  %v400 = vld [vmem:[%s3 + $0x30] sm:$0xff]
  %v401 = vld [vmem:[%s3 + $0x38] sm:$0xff]
  %v402 = vld [vmem:[%s3 + $0x40] sm:$0xff]
  %v403 = vld [vmem:[%s3 + $0x48] sm:$0xff]
  %v404 = vld [vmem:[%s3 + $0x50] sm:$0xff]
  %v405 = vld [vmem:[%s3 + $0x58] sm:$0xff]
  %v406 = vld [vmem:[%s4] sm:$0xff]
  %v407 = vld [vmem:[%s4 + $0x8] sm:$0xff]
  %v408 = vld [vmem:[%s4 + $0x10] sm:$0xff]
  %v409 = vld [vmem:[%s4 + $0x18] sm:$0xff]
  %v410 = vld [vmem:[%s4 + $0x20] sm:$0xff]
  %v411 = vld [vmem:[%s4 + $0x28] sm:$0xff]
  %v412 = vld [vmem:[%s4 + $0x30] sm:$0xff]
  %v413 = vld [vmem:[%s4 + $0x38] sm:$0xff]
  %v414 = vld [vmem:[%s4 + $0x40] sm:$0xff]
  %v415 = vld [vmem:[%s4 + $0x48] sm:$0xff]
  %v416 = vld [vmem:[%s4 + $0x50] sm:$0xff]
  %v417 = vld [vmem:[%s4 + $0x58] sm:$0xff]
  %419 = vset.pattern.permute.xlu0 0
  %420 = vperm.xlu0 %419, %v406
  %v421 = vpop.permute.xlu0 %420
  %424 = vset.pattern.permute.xlu0 0
  %425 = vperm.xlu0 %424, %v407
  %v426 = vpop.permute.xlu0 %425
  %429 = vset.pattern.permute.xlu0 0
  %430 = vperm.xlu0 %429, %v408
  %v431 = vpop.permute.xlu0 %430
  %434 = vset.pattern.permute.xlu0 0
  %435 = vperm.xlu0 %434, %v409
  %v436 = vpop.permute.xlu0 %435
  %439 = vset.pattern.permute.xlu0 0
  %440 = vperm.xlu0 %439, %v410
  %v441 = vpop.permute.xlu0 %440
  %444 = vset.pattern.permute.xlu0 0
  %445 = vperm.xlu0 %444, %v411
  %v446 = vpop.permute.xlu0 %445
  %449 = vset.pattern.permute.xlu0 0
  %450 = vperm.xlu0 %449, %v412
  %v451 = vpop.permute.xlu0 %450
  %454 = vset.pattern.permute.xlu0 0
  %455 = vperm.xlu0 %454, %v413
  %v456 = vpop.permute.xlu0 %455
  %459 = vset.pattern.permute.xlu0 0
  %460 = vperm.xlu0 %459, %v414
  %v461 = vpop.permute.xlu0 %460
  %464 = vset.pattern.permute.xlu0 0
  %465 = vperm.xlu0 %464, %v415
  %v466 = vpop.permute.xlu0 %465
  %469 = vset.pattern.permute.xlu0 0
  %470 = vperm.xlu0 %469, %v416
  %v471 = vpop.permute.xlu0 %470
  %474 = vset.pattern.permute.xlu0 0
  %475 = vperm.xlu0 %474, %v417
  %v476 = vpop.permute.xlu0 %475
  %vm478 = vcmask 261120
  %v480 = vsel %vm478, %v394, 0
  %v483 = vsel %vm478, %v395, 0
  %v486 = vsel %vm478, %v396, 0
  %v489 = vsel %vm478, %v397, 0
  %v492 = vsel %vm478, %v398, 0
  %v495 = vsel %vm478, %v399, 0
  %v498 = vsel %vm478, %v400, 0
  %v501 = vsel %vm478, %v401, 0
  %v504 = vsel %vm478, %v402, 0
  %v507 = vsel %vm478, %v403, 0
  %v510 = vsel %vm478, %v404, 0
  %v513 = vsel %vm478, %v405, 0
  %515 = vmatprep.subr.mxu0 %v379
  %516 = vmatpush1.msra.mxu0 %v378
  %517 = vmatprep.subr.mxu0 %v383
  %518 = vmatpush1.msra.mxu0 %v382
  %519 = vmatprep.subr.mxu0 %v387
  %520 = vmatpush1.msra.mxu0 %v386
  %521 = vmatprep.subr.mxu0 %v391
  %522 = vmatpush1.msra.mxu0 %v390
  %523 = vmatprep.subr.mxu0 0.0
  %524 = vmatpush1.msra.mxu0 0.0
  %525 = vmatprep.subr.mxu0 0.0
  %526 = vmatpush1.msra.mxu0 0.0
  %527 = vmatprep.subr.mxu0 0.0
  %528 = vmatpush1.msra.mxu0 0.0
  %529 = vmatprep.subr.mxu0 0.0
  %530 = vmatpush1.msra.mxu0 0.0
  %531 = vmatprep.subr.mxu0 0.0
  %532 = vmatpush1.msra.mxu0 0.0
  %533 = vmatprep.subr.mxu0 0.0
  %534 = vmatpush1.msra.mxu0 0.0
  %535 = vmatprep.subr.mxu0 0.0
  %536 = vmatpush1.msra.mxu0 0.0
  %537 = vmatprep.subr.mxu0 0.0
  %538 = vmatpush1.msra.mxu0 0.0
  %539 = vmatprep.subr.mxu0 0.0
  %540 = vmatpush1.msra.mxu0 0.0
  %541 = vmatprep.subr.mxu0 0.0
  %542 = vmatpush1.msra.mxu0 0.0
  %543 = vmatprep.subr.mxu0 0.0
  %544 = vmatpush1.msra.mxu0 0.0
  %545 = vmatprep.subr.mxu0 0.0
  %546 = vmatpush1.msra.mxu0 0.0
  %547 = vmatprep.subr.mxu0 0.0
  %548 = vmatpush1.msra.mxu0 0.0
  %549 = vmatprep.subr.mxu0 0.0
  %550 = vmatpush1.msra.mxu0 0.0
  %551 = vmatprep.subr.mxu0 0.0
  %552 = vmatpush1.msra.mxu0 0.0
  %553 = vmatprep.subr.mxu0 0.0
  %554 = vmatpush1.msra.mxu0 0.0
  %555 = vmatprep.subr.mxu0 0.0
  %556 = vmatpush1.msra.mxu0 0.0
  %557 = vmatprep.subr.mxu0 0.0
  %558 = vmatpush1.msra.mxu0 0.0
  %559 = vmatprep.subr.mxu0 0.0
  %560 = vmatpush1.msra.mxu0 0.0
  %561 = vmatprep.subr.mxu0 0.0
  %562 = vmatpush1.msra.mxu0 0.0
  %563 = vmatprep.subr.mxu0 0.0
  %564 = vmatpush1.msra.mxu0 0.0
  %565 = vmatprep.subr.mxu0 0.0
  %566 = vmatpush1.msra.mxu0 0.0
  %567 = vmatprep.subr.mxu0 0.0
  %568 = vmatpush1.msra.mxu0 0.0
  %569 = vmatprep.subr.mxu0 0.0
  %570 = vmatpush1.msra.mxu0 0.0
  %571 = vmatprep.subr.mxu0 0.0
  %572 = vmatpush1.msra.mxu0 0.0
  %573 = vmatprep.subr.mxu0 0.0
  %574 = vmatpush1.msra.mxu0 0.0
  %575 = vmatprep.subr.mxu0 0.0
  %576 = vmatpush1.msra.mxu0 0.0
  %577 = vmatprep.subr.mxu0 0.0
  %578 = vmatpush1.msra.mxu0 0.0
  %579 = vmatprep.mubr.f32.mxu0 0.0
  %580 = vmatmul.mubr.f32.gmra.mrb[0].mxu0 %v480
  %v581 = vpop.f32.mrb[0].mxu0
  %v582 = vadd.f32 %v421, %v581
  %v583 = vpop.f32.mrb[0].mxu0
  %v584 = vadd.f32 %v421, %v583
  %585 = vmatprep.mubr.f32.mxu0 0.0
  %586 = vmatmul.mubr.f32.gmra.mrb[0].mxu0 %v483
  %v587 = vpop.f32.mrb[0].mxu0
  %v588 = vadd.f32 %v426, %v587
  %v589 = vpop.f32.mrb[0].mxu0
  %v590 = vadd.f32 %v426, %v589
  %591 = vmatprep.mubr.f32.mxu0 0.0
  %592 = vmatmul.mubr.f32.gmra.mrb[0].mxu0 %v486
  %v593 = vpop.f32.mrb[0].mxu0
  %v594 = vadd.f32 %v431, %v593
  %v595 = vpop.f32.mrb[0].mxu0
  %v596 = vadd.f32 %v431, %v595
  %597 = vmatprep.mubr.f32.mxu0 0.0
  %598 = vmatmul.mubr.f32.gmra.mrb[0].mxu0 %v489
  %v599 = vpop.f32.mrb[0].mxu0
  %v600 = vadd.f32 %v436, %v599
  %v601 = vpop.f32.mrb[0].mxu0
  %v602 = vadd.f32 %v436, %v601
  %603 = vmatprep.mubr.f32.mxu0 0.0
  %604 = vmatmul.mubr.f32.gmra.mrb[0].mxu0 %v492
  %v605 = vpop.f32.mrb[0].mxu0
  %v606 = vadd.f32 %v441, %v605
  %v607 = vpop.f32.mrb[0].mxu0
  %v608 = vadd.f32 %v441, %v607
  %609 = vmatprep.mubr.f32.mxu0 0.0
  %610 = vmatmul.mubr.f32.gmra.mrb[0].mxu0 %v495
  %v611 = vpop.f32.mrb[0].mxu0
  %v612 = vadd.f32 %v446, %v611
  %v613 = vpop.f32.mrb[0].mxu0
  %v614 = vadd.f32 %v446, %v613
  %615 = vmatprep.mubr.f32.mxu0 0.0
  %616 = vmatmul.mubr.f32.gmra.mrb[0].mxu0 %v498
  %v617 = vpop.f32.mrb[0].mxu0
  %v618 = vadd.f32 %v451, %v617
  %v619 = vpop.f32.mrb[0].mxu0
  %v620 = vadd.f32 %v451, %v619
  %621 = vmatprep.mubr.f32.mxu0 0.0
  %622 = vmatmul.mubr.f32.gmra.mrb[0].mxu0 %v501
  %v623 = vpop.f32.mrb[0].mxu0
  %v624 = vadd.f32 %v456, %v623
  %v625 = vpop.f32.mrb[0].mxu0
  %v626 = vadd.f32 %v456, %v625
  %627 = vmatprep.mubr.f32.mxu0 0.0
  %628 = vmatmul.mubr.f32.gmra.mrb[0].mxu0 %v504
  %v629 = vpop.f32.mrb[0].mxu0
  %v630 = vadd.f32 %v461, %v629
  %v631 = vpop.f32.mrb[0].mxu0
  %v632 = vadd.f32 %v461, %v631
  %633 = vmatprep.mubr.f32.mxu0 0.0
  %634 = vmatmul.mubr.f32.gmra.mrb[0].mxu0 %v507
  %v635 = vpop.f32.mrb[0].mxu0
  %v636 = vadd.f32 %v466, %v635
  %v637 = vpop.f32.mrb[0].mxu0
  %v638 = vadd.f32 %v466, %v637
  %639 = vmatprep.mubr.f32.mxu0 0.0
  %640 = vmatmul.mubr.f32.gmra.mrb[0].mxu0 %v510
  %v641 = vpop.f32.mrb[0].mxu0
  %v642 = vadd.f32 %v471, %v641
  %v643 = vpop.f32.mrb[0].mxu0
  %v644 = vadd.f32 %v471, %v643
  %645 = vmatprep.mubr.f32.mxu0 0.0
  %646 = vmatmul.mubr.f32.gmra.mrb[0].mxu0 %v513
  %v647 = vpop.f32.mrb[0].mxu0
  %v648 = vadd.f32 %v476, %v647
  %v649 = vpop.f32.mrb[0].mxu0
  %v650 = vadd.f32 %v476, %v649
  %651 = vdwg.mxu0
  %652 = vmatprep.subr.mxu0 %v381
  %653 = vmatpush1.msra.mxu0 %v380
  %654 = vmatprep.subr.mxu0 %v385
  %655 = vmatpush1.msra.mxu0 %v384
  %656 = vmatprep.subr.mxu0 %v389
  %657 = vmatpush1.msra.mxu0 %v388
  %658 = vmatprep.subr.mxu0 %v393
  %659 = vmatpush1.msra.mxu0 %v392
  %660 = vmatprep.subr.mxu0 0.0
  %661 = vmatpush1.msra.mxu0 0.0
  %662 = vmatprep.subr.mxu0 0.0
  %663 = vmatpush1.msra.mxu0 0.0
  %664 = vmatprep.subr.mxu0 0.0
  %665 = vmatpush1.msra.mxu0 0.0
  %666 = vmatprep.subr.mxu0 0.0
  %667 = vmatpush1.msra.mxu0 0.0
  %668 = vmatprep.subr.mxu0 0.0
  %669 = vmatpush1.msra.mxu0 0.0
  %670 = vmatprep.subr.mxu0 0.0
  %671 = vmatpush1.msra.mxu0 0.0
  %672 = vmatprep.subr.mxu0 0.0
  %673 = vmatpush1.msra.mxu0 0.0
  %674 = vmatprep.subr.mxu0 0.0
  %675 = vmatpush1.msra.mxu0 0.0
  %676 = vmatprep.subr.mxu0 0.0
  %677 = vmatpush1.msra.mxu0 0.0
  %678 = vmatprep.subr.mxu0 0.0
  %679 = vmatpush1.msra.mxu0 0.0
  %680 = vmatprep.subr.mxu0 0.0
  %681 = vmatpush1.msra.mxu0 0.0
  %682 = vmatprep.subr.mxu0 0.0
  %683 = vmatpush1.msra.mxu0 0.0
  %684 = vmatprep.subr.mxu0 0.0
  %685 = vmatpush1.msra.mxu0 0.0
  %686 = vmatprep.subr.mxu0 0.0
  %687 = vmatpush1.msra.mxu0 0.0
  %688 = vmatprep.subr.mxu0 0.0
  %689 = vmatpush1.msra.mxu0 0.0
  %690 = vmatprep.subr.mxu0 0.0
  %691 = vmatpush1.msra.mxu0 0.0
  %692 = vmatprep.subr.mxu0 0.0
  %693 = vmatpush1.msra.mxu0 0.0
  %694 = vmatprep.subr.mxu0 0.0
  %695 = vmatpush1.msra.mxu0 0.0
  %696 = vmatprep.subr.mxu0 0.0
  %697 = vmatpush1.msra.mxu0 0.0
  %698 = vmatprep.subr.mxu0 0.0
  %699 = vmatpush1.msra.mxu0 0.0
  %700 = vmatprep.subr.mxu0 0.0
  %701 = vmatpush1.msra.mxu0 0.0
  %702 = vmatprep.subr.mxu0 0.0
  %703 = vmatpush1.msra.mxu0 0.0
  %704 = vmatprep.subr.mxu0 0.0
  %705 = vmatpush1.msra.mxu0 0.0
  %706 = vmatprep.subr.mxu0 0.0
  %707 = vmatpush1.msra.mxu0 0.0
  %708 = vmatprep.subr.mxu0 0.0
  %709 = vmatpush1.msra.mxu0 0.0
  %710 = vmatprep.subr.mxu0 0.0
  %711 = vmatpush1.msra.mxu0 0.0
  %712 = vmatprep.subr.mxu0 0.0
  %713 = vmatpush1.msra.mxu0 0.0
  %714 = vmatprep.subr.mxu0 0.0
  %715 = vmatpush1.msra.mxu0 0.0
  %716 = vmatprep.mubr.f32.mxu0 0.0
  %717 = vmatmul.mubr.f32.gmra.mrb[0].mxu0 %v480
  %v718 = vpop.f32.mrb[0].mxu0
  %v719 = vadd.f32 %v421, %v718
  %v720 = vpop.f32.mrb[0].mxu0
  %v721 = vadd.f32 %v421, %v720
  %722 = vmatprep.mubr.f32.mxu0 0.0
  %723 = vmatmul.mubr.f32.gmra.mrb[0].mxu0 %v483
  %v724 = vpop.f32.mrb[0].mxu0
  %v725 = vadd.f32 %v426, %v724
  %v726 = vpop.f32.mrb[0].mxu0
  %v727 = vadd.f32 %v426, %v726
  %728 = vmatprep.mubr.f32.mxu0 0.0
  %729 = vmatmul.mubr.f32.gmra.mrb[0].mxu0 %v486
  %v730 = vpop.f32.mrb[0].mxu0
  %v731 = vadd.f32 %v431, %v730
  %v732 = vpop.f32.mrb[0].mxu0
  %v733 = vadd.f32 %v431, %v732
  %734 = vmatprep.mubr.f32.mxu0 0.0
  %735 = vmatmul.mubr.f32.gmra.mrb[0].mxu0 %v489
  %v736 = vpop.f32.mrb[0].mxu0
  %v737 = vadd.f32 %v436, %v736
  %v738 = vpop.f32.mrb[0].mxu0
  %v739 = vadd.f32 %v436, %v738
  %740 = vmatprep.mubr.f32.mxu0 0.0
  %741 = vmatmul.mubr.f32.gmra.mrb[0].mxu0 %v492
  %v742 = vpop.f32.mrb[0].mxu0
  %v743 = vadd.f32 %v441, %v742
  %v744 = vpop.f32.mrb[0].mxu0
  %v745 = vadd.f32 %v441, %v744
  %746 = vmatprep.mubr.f32.mxu0 0.0
  %747 = vmatmul.mubr.f32.gmra.mrb[0].mxu0 %v495
  %v748 = vpop.f32.mrb[0].mxu0
  %v749 = vadd.f32 %v446, %v748
  %v750 = vpop.f32.mrb[0].mxu0
  %v751 = vadd.f32 %v446, %v750
  %752 = vmatprep.mubr.f32.mxu0 0.0
  %753 = vmatmul.mubr.f32.gmra.mrb[0].mxu0 %v498
  %v754 = vpop.f32.mrb[0].mxu0
  %v755 = vadd.f32 %v451, %v754
  %v756 = vpop.f32.mrb[0].mxu0
  %v757 = vadd.f32 %v451, %v756
  %758 = vmatprep.mubr.f32.mxu0 0.0
  %759 = vmatmul.mubr.f32.gmra.mrb[0].mxu0 %v501
  %v760 = vpop.f32.mrb[0].mxu0
  %v761 = vadd.f32 %v456, %v760
  %v762 = vpop.f32.mrb[0].mxu0
  %v763 = vadd.f32 %v456, %v762
  %764 = vmatprep.mubr.f32.mxu0 0.0
  %765 = vmatmul.mubr.f32.gmra.mrb[0].mxu0 %v504
  %v766 = vpop.f32.mrb[0].mxu0
  %v767 = vadd.f32 %v461, %v766
  %v768 = vpop.f32.mrb[0].mxu0
  %v769 = vadd.f32 %v461, %v768
  %770 = vmatprep.mubr.f32.mxu0 0.0
  %771 = vmatmul.mubr.f32.gmra.mrb[0].mxu0 %v507
  %v772 = vpop.f32.mrb[0].mxu0
  %v773 = vadd.f32 %v466, %v772
  %v774 = vpop.f32.mrb[0].mxu0
  %v775 = vadd.f32 %v466, %v774
  %776 = vmatprep.mubr.f32.mxu0 0.0
  %777 = vmatmul.mubr.f32.gmra.mrb[0].mxu0 %v510
  %v778 = vpop.f32.mrb[0].mxu0
  %v779 = vadd.f32 %v471, %v778
  %v780 = vpop.f32.mrb[0].mxu0
  %v781 = vadd.f32 %v471, %v780
  %782 = vmatprep.mubr.f32.mxu0 0.0
  %783 = vmatmul.mubr.f32.gmra.mrb[0].mxu0 %v513
  %v784 = vpop.f32.mrb[0].mxu0
  %v785 = vadd.f32 %v476, %v784
  %v786 = vpop.f32.mrb[0].mxu0
  %v787 = vadd.f32 %v476, %v786
  %788 = vdwg.mxu0
  %v789 = vld [vmem:[%s5] sm:$0xff]
  %v790 = vld [vmem:[%s5 + $0x8] sm:$0xff]
  %v791 = vld [vmem:[%s5 + $0x10] sm:$0xff]
  %v792 = vld [vmem:[%s5 + $0x18] sm:$0xff]
  %v793 = vld [vmem:[%s5 + $0x20] sm:$0xff]
  %v794 = vld [vmem:[%s5 + $0x28] sm:$0xff]
  %v795 = vld [vmem:[%s5 + $0x30] sm:$0xff]
  %v796 = vld [vmem:[%s5 + $0x38] sm:$0xff]
  %v797 = vld [vmem:[%s6] sm:$0xf]
  %v798 = vld [vmem:[%s7] sm:$0xff]
  %v799 = vld [vmem:[%s7 + $0x8] sm:$0xff]
  %v800 = vld [vmem:[%s7 + $0x10] sm:$0xff]
  %v801 = vld [vmem:[%s7 + $0x18] sm:$0xff]
  %v802 = vrot.slane %v582, 4
  %v803 = vmax.f32 %v582, %v802
  %v804 = vrot.slane %v803, 2
  %v805 = vmax.f32 %v803, %v804
  %v806 = vrot.slane %v805, 1
  %v807 = vmax.f32 %v805, %v806
  %v808 = vrot.slane %v584, 4
  %v809 = vmax.f32 %v584, %v808
  %v810 = vrot.slane %v809, 2
  %v811 = vmax.f32 %v809, %v810
  %v812 = vrot.slane %v811, 1
  %v813 = vmax.f32 %v811, %v812
  %v814 = vrot.slane %v719, 4
  %v815 = vmax.f32 %v719, %v814
  %v816 = vrot.slane %v815, 2
  %v817 = vmax.f32 %v815, %v816
  %v818 = vrot.slane %v817, 1
  %v819 = vmax.f32 %v817, %v818
  %v820 = vrot.slane %v721, 4
  %v821 = vmax.f32 %v721, %v820
  %v822 = vrot.slane %v821, 2
  %v823 = vmax.f32 %v821, %v822
  %v824 = vrot.slane %v823, 1
  %v825 = vmax.f32 %v823, %v824
  %v826 = vrot.slane %v588, 4
  %v827 = vmax.f32 %v588, %v826
  %v828 = vrot.slane %v827, 2
  %v829 = vmax.f32 %v827, %v828
  %v830 = vrot.slane %v829, 1
  %v831 = vmax.f32 %v829, %v830
  %v832 = vrot.slane %v590, 4
  %v833 = vmax.f32 %v590, %v832
  %v834 = vrot.slane %v833, 2
  %v835 = vmax.f32 %v833, %v834
  %v836 = vrot.slane %v835, 1
  %v837 = vmax.f32 %v835, %v836
  %v838 = vrot.slane %v725, 4
  %v839 = vmax.f32 %v725, %v838
  %v840 = vrot.slane %v839, 2
  %v841 = vmax.f32 %v839, %v840
  %v842 = vrot.slane %v841, 1
  %v843 = vmax.f32 %v841, %v842
  %v844 = vrot.slane %v727, 4
  %v845 = vmax.f32 %v727, %v844
  %v846 = vrot.slane %v845, 2
  %v847 = vmax.f32 %v845, %v846
  %v848 = vrot.slane %v847, 1
  %v849 = vmax.f32 %v847, %v848
  %v850 = vrot.slane %v594, 4
  %v851 = vmax.f32 %v594, %v850
  %v852 = vrot.slane %v851, 2
  %v853 = vmax.f32 %v851, %v852
  %v854 = vrot.slane %v853, 1
  %v855 = vmax.f32 %v853, %v854
  %v856 = vrot.slane %v596, 4
  %v857 = vmax.f32 %v596, %v856
  %v858 = vrot.slane %v857, 2
  %v859 = vmax.f32 %v857, %v858
  %v860 = vrot.slane %v859, 1
  %v861 = vmax.f32 %v859, %v860
  %v862 = vrot.slane %v731, 4
  %v863 = vmax.f32 %v731, %v862
  %v864 = vrot.slane %v863, 2
  %v865 = vmax.f32 %v863, %v864
  %v866 = vrot.slane %v865, 1
  %v867 = vmax.f32 %v865, %v866
  %v868 = vrot.slane %v733, 4
  %v869 = vmax.f32 %v733, %v868
  %v870 = vrot.slane %v869, 2
  %v871 = vmax.f32 %v869, %v870
  %v872 = vrot.slane %v871, 1
  %v873 = vmax.f32 %v871, %v872
  %v874 = vrot.slane %v600, 4
  %v875 = vmax.f32 %v600, %v874
  %v876 = vrot.slane %v875, 2
  %v877 = vmax.f32 %v875, %v876
  %v878 = vrot.slane %v877, 1
  %v879 = vmax.f32 %v877, %v878
  %v880 = vrot.slane %v602, 4
  %v881 = vmax.f32 %v602, %v880
  %v882 = vrot.slane %v881, 2
  %v883 = vmax.f32 %v881, %v882
  %v884 = vrot.slane %v883, 1
  %v885 = vmax.f32 %v883, %v884
  %v886 = vrot.slane %v737, 4
  %v887 = vmax.f32 %v737, %v886
  %v888 = vrot.slane %v887, 2
  %v889 = vmax.f32 %v887, %v888
  %v890 = vrot.slane %v889, 1
  %v891 = vmax.f32 %v889, %v890
  %v892 = vrot.slane %v739, 4
  %v893 = vmax.f32 %v739, %v892
  %v894 = vrot.slane %v893, 2
  %v895 = vmax.f32 %v893, %v894
  %v896 = vrot.slane %v895, 1
  %v897 = vmax.f32 %v895, %v896
  %v898 = vrot.slane %v606, 4
  %v899 = vmax.f32 %v606, %v898
  %v900 = vrot.slane %v899, 2
  %v901 = vmax.f32 %v899, %v900
  %v902 = vrot.slane %v901, 1
  %v903 = vmax.f32 %v901, %v902
  %v904 = vrot.slane %v608, 4
  %v905 = vmax.f32 %v608, %v904
  %v906 = vrot.slane %v905, 2
  %v907 = vmax.f32 %v905, %v906
  %v908 = vrot.slane %v907, 1
  %v909 = vmax.f32 %v907, %v908
  %v910 = vrot.slane %v743, 4
  %v911 = vmax.f32 %v743, %v910
  %v912 = vrot.slane %v911, 2
  %v913 = vmax.f32 %v911, %v912
  %v914 = vrot.slane %v913, 1
  %v915 = vmax.f32 %v913, %v914
  %v916 = vrot.slane %v745, 4
  %v917 = vmax.f32 %v745, %v916
  %v918 = vrot.slane %v917, 2
  %v919 = vmax.f32 %v917, %v918
  %v920 = vrot.slane %v919, 1
  %v921 = vmax.f32 %v919, %v920
  %v922 = vrot.slane %v612, 4
  %v923 = vmax.f32 %v612, %v922
  %v924 = vrot.slane %v923, 2
  %v925 = vmax.f32 %v923, %v924
  %v926 = vrot.slane %v925, 1
  %v927 = vmax.f32 %v925, %v926
  %v928 = vrot.slane %v614, 4
  %v929 = vmax.f32 %v614, %v928
  %v930 = vrot.slane %v929, 2
  %v931 = vmax.f32 %v929, %v930
  %v932 = vrot.slane %v931, 1
  %v933 = vmax.f32 %v931, %v932
  %v934 = vrot.slane %v749, 4
  %v935 = vmax.f32 %v749, %v934
  %v936 = vrot.slane %v935, 2
  %v937 = vmax.f32 %v935, %v936
  %v938 = vrot.slane %v937, 1
  %v939 = vmax.f32 %v937, %v938
  %v940 = vrot.slane %v751, 4
  %v941 = vmax.f32 %v751, %v940
  %v942 = vrot.slane %v941, 2
  %v943 = vmax.f32 %v941, %v942
  %v944 = vrot.slane %v943, 1
  %v945 = vmax.f32 %v943, %v944
  %v946 = vrot.slane %v618, 4
  %v947 = vmax.f32 %v618, %v946
  %v948 = vrot.slane %v947, 2
  %v949 = vmax.f32 %v947, %v948
  %v950 = vrot.slane %v949, 1
  %v951 = vmax.f32 %v949, %v950
  %v952 = vrot.slane %v620, 4
  %v953 = vmax.f32 %v620, %v952
  %v954 = vrot.slane %v953, 2
  %v955 = vmax.f32 %v953, %v954
  %v956 = vrot.slane %v955, 1
  %v957 = vmax.f32 %v955, %v956
  %v958 = vrot.slane %v755, 4
  %v959 = vmax.f32 %v755, %v958
  %v960 = vrot.slane %v959, 2
  %v961 = vmax.f32 %v959, %v960
  %v962 = vrot.slane %v961, 1
  %v963 = vmax.f32 %v961, %v962
  %v964 = vrot.slane %v757, 4
  %v965 = vmax.f32 %v757, %v964
  %v966 = vrot.slane %v965, 2
  %v967 = vmax.f32 %v965, %v966
  %v968 = vrot.slane %v967, 1
  %v969 = vmax.f32 %v967, %v968
  %v970 = vrot.slane %v624, 4
  %v971 = vmax.f32 %v624, %v970
  %v972 = vrot.slane %v971, 2
  %v973 = vmax.f32 %v971, %v972
  %v974 = vrot.slane %v973, 1
  %v975 = vmax.f32 %v973, %v974
  %v976 = vrot.slane %v626, 4
  %v977 = vmax.f32 %v626, %v976
  %v978 = vrot.slane %v977, 2
  %v979 = vmax.f32 %v977, %v978
  %v980 = vrot.slane %v979, 1
  %v981 = vmax.f32 %v979, %v980
  %v982 = vrot.slane %v761, 4
  %v983 = vmax.f32 %v761, %v982
  %v984 = vrot.slane %v983, 2
  %v985 = vmax.f32 %v983, %v984
  %v986 = vrot.slane %v985, 1
  %v987 = vmax.f32 %v985, %v986
  %v988 = vrot.slane %v763, 4
  %v989 = vmax.f32 %v763, %v988
  %v990 = vrot.slane %v989, 2
  %v991 = vmax.f32 %v989, %v990
  %v992 = vrot.slane %v991, 1
  %v993 = vmax.f32 %v991, %v992
  %v994 = vsub.f32 %v582, %v807
  %v995 = vsub.f32 %v584, %v813
  %v996 = vsub.f32 %v719, %v819
  %v997 = vsub.f32 %v721, %v825
  %v998 = vsub.f32 %v588, %v831
  %v999 = vsub.f32 %v590, %v837
  %v1000 = vsub.f32 %v725, %v843
  %v1001 = vsub.f32 %v727, %v849
  %v1002 = vsub.f32 %v594, %v855
  %v1003 = vsub.f32 %v596, %v861
  %v1004 = vsub.f32 %v731, %v867
  %v1005 = vsub.f32 %v733, %v873
  %v1006 = vsub.f32 %v600, %v879
  %v1007 = vsub.f32 %v602, %v885
  %v1008 = vsub.f32 %v737, %v891
  %v1009 = vsub.f32 %v739, %v897
  %v1010 = vsub.f32 %v606, %v903
  %v1011 = vsub.f32 %v608, %v909
  %v1012 = vsub.f32 %v743, %v915
  %v1013 = vsub.f32 %v745, %v921
  %v1014 = vsub.f32 %v612, %v927
  %v1015 = vsub.f32 %v614, %v933
  %v1016 = vsub.f32 %v749, %v939
  %v1017 = vsub.f32 %v751, %v945
  %v1018 = vsub.f32 %v618, %v951
  %v1019 = vsub.f32 %v620, %v957
  %v1020 = vsub.f32 %v755, %v963
  %v1021 = vsub.f32 %v757, %v969
  %v1022 = vsub.f32 %v624, %v975
  %v1023 = vsub.f32 %v626, %v981
  %v1024 = vsub.f32 %v761, %v987
  %v1025 = vsub.f32 %v763, %v993
  %v1026 = vmul.f32 %v994, 1.442695
  %v1027 = vpow.pop %v1026
  %v1028 = vmul.f32 %v995, 1.442695
  %v1029 = vpow.pop %v1028
  %v1030 = vmul.f32 %v996, 1.442695
  %v1031 = vpow.pop %v1030
  %v1032 = vmul.f32 %v997, 1.442695
  %v1033 = vpow.pop %v1032
  %v1034 = vmul.f32 %v998, 1.442695
  %v1035 = vpow.pop %v1034
  %v1036 = vmul.f32 %v999, 1.442695
  %v1037 = vpow.pop %v1036
  %v1038 = vmul.f32 %v1000, 1.442695
  %v1039 = vpow.pop %v1038
  %v1040 = vmul.f32 %v1001, 1.442695
  %v1041 = vpow.pop %v1040
  %v1042 = vmul.f32 %v1002, 1.442695
  %v1043 = vpow.pop %v1042
  %v1044 = vmul.f32 %v1003, 1.442695
  %v1045 = vpow.pop %v1044
  %v1046 = vmul.f32 %v1004, 1.442695
  %v1047 = vpow.pop %v1046
  %v1048 = vmul.f32 %v1005, 1.442695
  %v1049 = vpow.pop %v1048
  %v1050 = vmul.f32 %v1006, 1.442695
  %v1051 = vpow.pop %v1050
  %v1052 = vmul.f32 %v1007, 1.442695
  %v1053 = vpow.pop %v1052
  %v1054 = vmul.f32 %v1008, 1.442695
  %v1055 = vpow.pop %v1054
  %v1056 = vmul.f32 %v1009, 1.442695
  %v1057 = vpow.pop %v1056
  %v1058 = vmul.f32 %v1010, 1.442695
  %v1059 = vpow.pop %v1058
  %v1060 = vmul.f32 %v1011, 1.442695
  %v1061 = vpow.pop %v1060
  %v1062 = vmul.f32 %v1012, 1.442695
  %v1063 = vpow.pop %v1062
  %v1064 = vmul.f32 %v1013, 1.442695
  %v1065 = vpow.pop %v1064
  %v1066 = vmul.f32 %v1014, 1.442695
  %v1067 = vpow.pop %v1066
  %v1068 = vmul.f32 %v1015, 1.442695
  %v1069 = vpow.pop %v1068
  %v1070 = vmul.f32 %v1016, 1.442695
  %v1071 = vpow.pop %v1070
  %v1072 = vmul.f32 %v1017, 1.442695
  %v1073 = vpow.pop %v1072
  %v1074 = vmul.f32 %v1018, 1.442695
  %v1075 = vpow.pop %v1074
  %v1076 = vmul.f32 %v1019, 1.442695
  %v1077 = vpow.pop %v1076
  %v1078 = vmul.f32 %v1020, 1.442695
  %v1079 = vpow.pop %v1078
  %v1080 = vmul.f32 %v1021, 1.442695
  %v1081 = vpow.pop %v1080
  %v1082 = vmul.f32 %v1022, 1.442695
  %v1083 = vpow.pop %v1082
  %v1084 = vmul.f32 %v1023, 1.442695
  %v1085 = vpow.pop %v1084
  %v1086 = vmul.f32 %v1024, 1.442695
  %v1087 = vpow.pop %v1086
  %v1088 = vmul.f32 %v1025, 1.442695
  %v1089 = vpow.pop %v1088
  %v1090 = vrot.slane %v1027, 4
  %v1091 = vadd.f32 %v1027, %v1090
  %v1092 = vrot.slane %v1091, 2
  %v1093 = vadd.f32 %v1091, %v1092
  %v1094 = vrot.slane %v1093, 1
  %v1095 = vadd.f32 %v1093, %v1094
  %v1096 = vrot.slane %v1029, 4
  %v1097 = vadd.f32 %v1029, %v1096
  %v1098 = vrot.slane %v1097, 2
  %v1099 = vadd.f32 %v1097, %v1098
  %v1100 = vrot.slane %v1099, 1
  %v1101 = vadd.f32 %v1099, %v1100
  %v1102 = vrot.slane %v1031, 4
  %v1103 = vadd.f32 %v1031, %v1102
  %v1104 = vrot.slane %v1103, 2
  %v1105 = vadd.f32 %v1103, %v1104
  %v1106 = vrot.slane %v1105, 1
  %v1107 = vadd.f32 %v1105, %v1106
  %v1108 = vrot.slane %v1033, 4
  %v1109 = vadd.f32 %v1033, %v1108
  %v1110 = vrot.slane %v1109, 2
  %v1111 = vadd.f32 %v1109, %v1110
  %v1112 = vrot.slane %v1111, 1
  %v1113 = vadd.f32 %v1111, %v1112
  %v1114 = vrot.slane %v1035, 4
  %v1115 = vadd.f32 %v1035, %v1114
  %v1116 = vrot.slane %v1115, 2
  %v1117 = vadd.f32 %v1115, %v1116
  %v1118 = vrot.slane %v1117, 1
  %v1119 = vadd.f32 %v1117, %v1118
  %v1120 = vrot.slane %v1037, 4
  %v1121 = vadd.f32 %v1037, %v1120
  %v1122 = vrot.slane %v1121, 2
  %v1123 = vadd.f32 %v1121, %v1122
  %v1124 = vrot.slane %v1123, 1
  %v1125 = vadd.f32 %v1123, %v1124
  %v1126 = vrot.slane %v1039, 4
  %v1127 = vadd.f32 %v1039, %v1126
  %v1128 = vrot.slane %v1127, 2
  %v1129 = vadd.f32 %v1127, %v1128
  %v1130 = vrot.slane %v1129, 1
  %v1131 = vadd.f32 %v1129, %v1130
  %v1132 = vrot.slane %v1041, 4
  %v1133 = vadd.f32 %v1041, %v1132
  %v1134 = vrot.slane %v1133, 2
  %v1135 = vadd.f32 %v1133, %v1134
  %v1136 = vrot.slane %v1135, 1
  %v1137 = vadd.f32 %v1135, %v1136
  %v1138 = vrot.slane %v1043, 4
  %v1139 = vadd.f32 %v1043, %v1138
  %v1140 = vrot.slane %v1139, 2
  %v1141 = vadd.f32 %v1139, %v1140
  %v1142 = vrot.slane %v1141, 1
  %v1143 = vadd.f32 %v1141, %v1142
  %v1144 = vrot.slane %v1045, 4
  %v1145 = vadd.f32 %v1045, %v1144
  %v1146 = vrot.slane %v1145, 2
  %v1147 = vadd.f32 %v1145, %v1146
  %v1148 = vrot.slane %v1147, 1
  %v1149 = vadd.f32 %v1147, %v1148
  %v1150 = vrot.slane %v1047, 4
  %v1151 = vadd.f32 %v1047, %v1150
  %v1152 = vrot.slane %v1151, 2
  %v1153 = vadd.f32 %v1151, %v1152
  %v1154 = vrot.slane %v1153, 1
  %v1155 = vadd.f32 %v1153, %v1154
  %v1156 = vrot.slane %v1049, 4
  %v1157 = vadd.f32 %v1049, %v1156
  %v1158 = vrot.slane %v1157, 2
  %v1159 = vadd.f32 %v1157, %v1158
  %v1160 = vrot.slane %v1159, 1
  %v1161 = vadd.f32 %v1159, %v1160
  %v1162 = vrot.slane %v1051, 4
  %v1163 = vadd.f32 %v1051, %v1162
  %v1164 = vrot.slane %v1163, 2
  %v1165 = vadd.f32 %v1163, %v1164
  %v1166 = vrot.slane %v1165, 1
  %v1167 = vadd.f32 %v1165, %v1166
  %v1168 = vrot.slane %v1053, 4
  %v1169 = vadd.f32 %v1053, %v1168
  %v1170 = vrot.slane %v1169, 2
  %v1171 = vadd.f32 %v1169, %v1170
  %v1172 = vrot.slane %v1171, 1
  %v1173 = vadd.f32 %v1171, %v1172
  %v1174 = vrot.slane %v1055, 4
  %v1175 = vadd.f32 %v1055, %v1174
  %v1176 = vrot.slane %v1175, 2
  %v1177 = vadd.f32 %v1175, %v1176
  %v1178 = vrot.slane %v1177, 1
  %v1179 = vadd.f32 %v1177, %v1178
  %v1180 = vrot.slane %v1057, 4
  %v1181 = vadd.f32 %v1057, %v1180
  %v1182 = vrot.slane %v1181, 2
  %v1183 = vadd.f32 %v1181, %v1182
  %v1184 = vrot.slane %v1183, 1
  %v1185 = vadd.f32 %v1183, %v1184
  %v1186 = vrot.slane %v1059, 4
  %v1187 = vadd.f32 %v1059, %v1186
  %v1188 = vrot.slane %v1187, 2
  %v1189 = vadd.f32 %v1187, %v1188
  %v1190 = vrot.slane %v1189, 1
  %v1191 = vadd.f32 %v1189, %v1190
  %v1192 = vrot.slane %v1061, 4
  %v1193 = vadd.f32 %v1061, %v1192
  %v1194 = vrot.slane %v1193, 2
  %v1195 = vadd.f32 %v1193, %v1194
  %v1196 = vrot.slane %v1195, 1
  %v1197 = vadd.f32 %v1195, %v1196
  %v1198 = vrot.slane %v1063, 4
  %v1199 = vadd.f32 %v1063, %v1198
  %v1200 = vrot.slane %v1199, 2
  %v1201 = vadd.f32 %v1199, %v1200
  %v1202 = vrot.slane %v1201, 1
  %v1203 = vadd.f32 %v1201, %v1202
  %v1204 = vrot.slane %v1065, 4
  %v1205 = vadd.f32 %v1065, %v1204
  %v1206 = vrot.slane %v1205, 2
  %v1207 = vadd.f32 %v1205, %v1206
  %v1208 = vrot.slane %v1207, 1
  %v1209 = vadd.f32 %v1207, %v1208
  %v1210 = vrot.slane %v1067, 4
  %v1211 = vadd.f32 %v1067, %v1210
  %v1212 = vrot.slane %v1211, 2
  %v1213 = vadd.f32 %v1211, %v1212
  %v1214 = vrot.slane %v1213, 1
  %v1215 = vadd.f32 %v1213, %v1214
  %v1216 = vrot.slane %v1069, 4
  %v1217 = vadd.f32 %v1069, %v1216
  %v1218 = vrot.slane %v1217, 2
  %v1219 = vadd.f32 %v1217, %v1218
  %v1220 = vrot.slane %v1219, 1
  %v1221 = vadd.f32 %v1219, %v1220
  %v1222 = vrot.slane %v1071, 4
  %v1223 = vadd.f32 %v1071, %v1222
  %v1224 = vrot.slane %v1223, 2
  %v1225 = vadd.f32 %v1223, %v1224
  %v1226 = vrot.slane %v1225, 1
  %v1227 = vadd.f32 %v1225, %v1226
  %v1228 = vrot.slane %v1073, 4
  %v1229 = vadd.f32 %v1073, %v1228
  %v1230 = vrot.slane %v1229, 2
  %v1231 = vadd.f32 %v1229, %v1230
  %v1232 = vrot.slane %v1231, 1
  %v1233 = vadd.f32 %v1231, %v1232
  %v1234 = vrot.slane %v1075, 4
  %v1235 = vadd.f32 %v1075, %v1234
  %v1236 = vrot.slane %v1235, 2
  %v1237 = vadd.f32 %v1235, %v1236
  %v1238 = vrot.slane %v1237, 1
  %v1239 = vadd.f32 %v1237, %v1238
  %v1240 = vrot.slane %v1077, 4
  %v1241 = vadd.f32 %v1077, %v1240
  %v1242 = vrot.slane %v1241, 2
  %v1243 = vadd.f32 %v1241, %v1242
  %v1244 = vrot.slane %v1243, 1
  %v1245 = vadd.f32 %v1243, %v1244
  %v1246 = vrot.slane %v1079, 4
  %v1247 = vadd.f32 %v1079, %v1246
  %v1248 = vrot.slane %v1247, 2
  %v1249 = vadd.f32 %v1247, %v1248
  %v1250 = vrot.slane %v1249, 1
  %v1251 = vadd.f32 %v1249, %v1250
  %v1252 = vrot.slane %v1081, 4
  %v1253 = vadd.f32 %v1081, %v1252
  %v1254 = vrot.slane %v1253, 2
  %v1255 = vadd.f32 %v1253, %v1254
  %v1256 = vrot.slane %v1255, 1
  %v1257 = vadd.f32 %v1255, %v1256
  %v1258 = vrot.slane %v1083, 4
  %v1259 = vadd.f32 %v1083, %v1258
  %v1260 = vrot.slane %v1259, 2
  %v1261 = vadd.f32 %v1259, %v1260
  %v1262 = vrot.slane %v1261, 1
  %v1263 = vadd.f32 %v1261, %v1262
  %v1264 = vrot.slane %v1085, 4
  %v1265 = vadd.f32 %v1085, %v1264
  %v1266 = vrot.slane %v1265, 2
  %v1267 = vadd.f32 %v1265, %v1266
  %v1268 = vrot.slane %v1267, 1
  %v1269 = vadd.f32 %v1267, %v1268
  %v1270 = vrot.slane %v1087, 4
  %v1271 = vadd.f32 %v1087, %v1270
  %v1272 = vrot.slane %v1271, 2
  %v1273 = vadd.f32 %v1271, %v1272
  %v1274 = vrot.slane %v1273, 1
  %v1275 = vadd.f32 %v1273, %v1274
  %v1276 = vrot.slane %v1089, 4
  %v1277 = vadd.f32 %v1089, %v1276
  %v1278 = vrot.slane %v1277, 2
  %v1279 = vadd.f32 %v1277, %v1278
  %v1280 = vrot.slane %v1279, 1
  %v1281 = vadd.f32 %v1279, %v1280
  %v1282 = vrcp.pop %v1095
  %v1283 = vmul.f32 %v1027, %v1282
  %v1284 = vrcp.pop %v1101
  %v1285 = vmul.f32 %v1029, %v1284
  %v1286 = vrcp.pop %v1107
  %v1287 = vmul.f32 %v1031, %v1286
  %v1288 = vrcp.pop %v1113
  %v1289 = vmul.f32 %v1033, %v1288
  %v1290 = vrcp.pop %v1119
  %v1291 = vmul.f32 %v1035, %v1290
  %v1292 = vrcp.pop %v1125
  %v1293 = vmul.f32 %v1037, %v1292
  %v1294 = vrcp.pop %v1131
  %v1295 = vmul.f32 %v1039, %v1294
  %v1296 = vrcp.pop %v1137
  %v1297 = vmul.f32 %v1041, %v1296
  %v1298 = vrcp.pop %v1143
  %v1299 = vmul.f32 %v1043, %v1298
  %v1300 = vrcp.pop %v1149
  %v1301 = vmul.f32 %v1045, %v1300
  %v1302 = vrcp.pop %v1155
  %v1303 = vmul.f32 %v1047, %v1302
  %v1304 = vrcp.pop %v1161
  %v1305 = vmul.f32 %v1049, %v1304
  %v1306 = vrcp.pop %v1167
  %v1307 = vmul.f32 %v1051, %v1306
  %v1308 = vrcp.pop %v1173
  %v1309 = vmul.f32 %v1053, %v1308
  %v1310 = vrcp.pop %v1179
  %v1311 = vmul.f32 %v1055, %v1310
  %v1312 = vrcp.pop %v1185
  %v1313 = vmul.f32 %v1057, %v1312
  %v1314 = vrcp.pop %v1191
  %v1315 = vmul.f32 %v1059, %v1314
  %v1316 = vrcp.pop %v1197
  %v1317 = vmul.f32 %v1061, %v1316
  %v1318 = vrcp.pop %v1203
  %v1319 = vmul.f32 %v1063, %v1318
  %v1320 = vrcp.pop %v1209
  %v1321 = vmul.f32 %v1065, %v1320
  %v1322 = vrcp.pop %v1215
  %v1323 = vmul.f32 %v1067, %v1322
  %v1324 = vrcp.pop %v1221
  %v1325 = vmul.f32 %v1069, %v1324
  %v1326 = vrcp.pop %v1227
  %v1327 = vmul.f32 %v1071, %v1326
  %v1328 = vrcp.pop %v1233
  %v1329 = vmul.f32 %v1073, %v1328
  %v1330 = vrcp.pop %v1239
  %v1331 = vmul.f32 %v1075, %v1330
  %v1332 = vrcp.pop %v1245
  %v1333 = vmul.f32 %v1077, %v1332
  %v1334 = vrcp.pop %v1251
  %v1335 = vmul.f32 %v1079, %v1334
  %v1336 = vrcp.pop %v1257
  %v1337 = vmul.f32 %v1081, %v1336
  %v1338 = vrcp.pop %v1263
  %v1339 = vmul.f32 %v1083, %v1338
  %v1340 = vrcp.pop %v1269
  %v1341 = vmul.f32 %v1085, %v1340
  %v1342 = vrcp.pop %v1275
  %v1343 = vmul.f32 %v1087, %v1342
  %v1344 = vrcp.pop %v1281
  %v1345 = vmul.f32 %v1089, %v1344
  %v1346 = vmul.f32 %v1283, 0.992
  %v1347 = vmul.f32 %v1285, 0.992
  %v1348 = vmul.f32 %v1287, 0.992
  %v1349 = vmul.f32 %v1289, 0.992
  %v1350 = vmul.f32 %v1291, 0.992
  %v1351 = vmul.f32 %v1293, 0.992
  %v1352 = vmul.f32 %v1295, 0.992
  %v1353 = vmul.f32 %v1297, 0.992
  %v1354 = vmul.f32 %v1299, 0.992
  %v1355 = vmul.f32 %v1301, 0.992
  %v1356 = vmul.f32 %v1303, 0.992
  %v1357 = vmul.f32 %v1305, 0.992
  %v1358 = vmul.f32 %v1307, 0.992
  %v1359 = vmul.f32 %v1309, 0.992
  %v1360 = vmul.f32 %v1311, 0.992
  %v1361 = vmul.f32 %v1313, 0.992
  %v1362 = vmul.f32 %v1315, 0.992
  %v1363 = vmul.f32 %v1317, 0.992
  %v1364 = vmul.f32 %v1319, 0.992
  %v1365 = vmul.f32 %v1321, 0.992
  %v1366 = vmul.f32 %v1323, 0.992
  %v1367 = vmul.f32 %v1325, 0.992
  %v1368 = vmul.f32 %v1327, 0.992
  %v1369 = vmul.f32 %v1329, 0.992
  %v1370 = vmul.f32 %v1331, 0.992
  %v1371 = vmul.f32 %v1333, 0.992
  %v1372 = vmul.f32 %v1335, 0.992
  %v1373 = vmul.f32 %v1337, 0.992
  %v1374 = vmul.f32 %v1339, 0.992
  %v1375 = vmul.f32 %v1341, 0.992
  %v1376 = vmul.f32 %v1343, 0.992
  %v1377 = vmul.f32 %v1345, 0.992
  %v1378 = vadd.f32 %v1346, 0.001
  %v1379 = vadd.f32 %v1347, 0.001
  %v1380 = vadd.f32 %v1348, 0.001
  %v1381 = vadd.f32 %v1349, 0.001
  %v1382 = vadd.f32 %v1350, 0.001
  %v1383 = vadd.f32 %v1351, 0.001
  %v1384 = vadd.f32 %v1352, 0.001
  %v1385 = vadd.f32 %v1353, 0.001
  %v1386 = vadd.f32 %v1354, 0.001
  %v1387 = vadd.f32 %v1355, 0.001
  %v1388 = vadd.f32 %v1356, 0.001
  %v1389 = vadd.f32 %v1357, 0.001
  %v1390 = vadd.f32 %v1358, 0.001
  %v1391 = vadd.f32 %v1359, 0.001
  %v1392 = vadd.f32 %v1360, 0.001
  %v1393 = vadd.f32 %v1361, 0.001
  %v1394 = vadd.f32 %v1362, 0.001
  %v1395 = vadd.f32 %v1363, 0.001
  %v1396 = vadd.f32 %v1364, 0.001
  %v1397 = vadd.f32 %v1365, 0.001
  %v1398 = vadd.f32 %v1366, 0.001
  %v1399 = vadd.f32 %v1367, 0.001
  %v1400 = vadd.f32 %v1368, 0.001
  %v1401 = vadd.f32 %v1369, 0.001
  %v1402 = vadd.f32 %v1370, 0.001
  %v1403 = vadd.f32 %v1371, 0.001
  %v1404 = vadd.f32 %v1372, 0.001
  %v1405 = vadd.f32 %v1373, 0.001
  %v1406 = vadd.f32 %v1374, 0.001
  %v1407 = vadd.f32 %v1375, 0.001
  %v1408 = vadd.f32 %v1376, 0.001
  %v1409 = vadd.f32 %v1377, 0.001
  %vm1410 = vcmask 523264
  %v1412 = vsel %vm1410, %v789, 0
  %v1415 = vsel %vm1410, %v790, 0
  %v1418 = vsel %vm1410, %v791, 0
  %v1421 = vsel %vm1410, %v792, 0
  %v1424 = vsel %vm1410, %v793, 0
  %v1427 = vsel %vm1410, %v794, 0
  %v1430 = vsel %vm1410, %v795, 0
  %v1433 = vsel %vm1410, %v796, 0
  %1435 = vmatprep.subr.mxu0 %v1379
  %1436 = vmatpush1.msra.mxu0 %v1378
  %1437 = vmatprep.subr.mxu0 %v1383
  %1438 = vmatpush1.msra.mxu0 %v1382
  %1439 = vmatprep.subr.mxu0 %v1387
  %1440 = vmatpush1.msra.mxu0 %v1386
  %1441 = vmatprep.subr.mxu0 %v1391
  %1442 = vmatpush1.msra.mxu0 %v1390
  %1443 = vmatprep.subr.mxu0 %v1395
  %1444 = vmatpush1.msra.mxu0 %v1394
  %1445 = vmatprep.subr.mxu0 %v1399
  %1446 = vmatpush1.msra.mxu0 %v1398
  %1447 = vmatprep.subr.mxu0 %v1403
  %1448 = vmatpush1.msra.mxu0 %v1402
  %1449 = vmatprep.subr.mxu0 %v1407
  %1450 = vmatpush1.msra.mxu0 %v1406
  %1451 = vmatprep.subr.mxu0 0.0
  %1452 = vmatpush1.msra.mxu0 0.0
  %1453 = vmatprep.subr.mxu0 0.0
  %1454 = vmatpush1.msra.mxu0 0.0
  %1455 = vmatprep.subr.mxu0 0.0
  %1456 = vmatpush1.msra.mxu0 0.0
  %1457 = vmatprep.subr.mxu0 0.0
  %1458 = vmatpush1.msra.mxu0 0.0
  %1459 = vmatprep.subr.mxu0 0.0
  %1460 = vmatpush1.msra.mxu0 0.0
  %1461 = vmatprep.subr.mxu0 0.0
  %1462 = vmatpush1.msra.mxu0 0.0
  %1463 = vmatprep.subr.mxu0 0.0
  %1464 = vmatpush1.msra.mxu0 0.0
  %1465 = vmatprep.subr.mxu0 0.0
  %1466 = vmatpush1.msra.mxu0 0.0
  %1467 = vmatprep.subr.mxu0 0.0
  %1468 = vmatpush1.msra.mxu0 0.0
  %1469 = vmatprep.subr.mxu0 0.0
  %1470 = vmatpush1.msra.mxu0 0.0
  %1471 = vmatprep.subr.mxu0 0.0
  %1472 = vmatpush1.msra.mxu0 0.0
  %1473 = vmatprep.subr.mxu0 0.0
  %1474 = vmatpush1.msra.mxu0 0.0
  %1475 = vmatprep.subr.mxu0 0.0
  %1476 = vmatpush1.msra.mxu0 0.0
  %1477 = vmatprep.subr.mxu0 0.0
  %1478 = vmatpush1.msra.mxu0 0.0
  %1479 = vmatprep.subr.mxu0 0.0
  %1480 = vmatpush1.msra.mxu0 0.0
  %1481 = vmatprep.subr.mxu0 0.0
  %1482 = vmatpush1.msra.mxu0 0.0
  %1483 = vmatprep.subr.mxu0 0.0
  %1484 = vmatpush1.msra.mxu0 0.0
  %1485 = vmatprep.subr.mxu0 0.0
  %1486 = vmatpush1.msra.mxu0 0.0
  %1487 = vmatprep.subr.mxu0 0.0
  %1488 = vmatpush1.msra.mxu0 0.0
  %1489 = vmatprep.subr.mxu0 0.0
  %1490 = vmatpush1.msra.mxu0 0.0
  %1491 = vmatprep.subr.mxu0 0.0
  %1492 = vmatpush1.msra.mxu0 0.0
  %1493 = vmatprep.subr.mxu0 0.0
  %1494 = vmatpush1.msra.mxu0 0.0
  %1495 = vmatprep.subr.mxu0 0.0
  %1496 = vmatpush1.msra.mxu0 0.0
  %1497 = vmatprep.subr.mxu0 0.0
  %1498 = vmatpush1.msra.mxu0 0.0
  %1499 = vmatprep.mubr.f32.mxu0 0.0
  %1500 = vmatmul.mubr.f32.gmra.mrb[0].mxu0 %v1412
  %v1501 = vpop.f32.mrb[0].mxu0
  %v1502 = vadd.f32 0.0, %v1501
  %v1503 = vpop.f32.mrb[0].mxu0
  %v1504 = vadd.f32 0.0, %v1503
  %1505 = vmatprep.mubr.f32.mxu0 0.0
  %1506 = vmatmul.mubr.f32.gmra.mrb[0].mxu0 %v1415
  %v1507 = vpop.f32.mrb[0].mxu0
  %v1508 = vadd.f32 0.0, %v1507
  %v1509 = vpop.f32.mrb[0].mxu0
  %v1510 = vadd.f32 0.0, %v1509
  %1511 = vmatprep.mubr.f32.mxu0 0.0
  %1512 = vmatmul.mubr.f32.gmra.mrb[0].mxu0 %v1418
  %v1513 = vpop.f32.mrb[0].mxu0
  %v1514 = vadd.f32 0.0, %v1513
  %v1515 = vpop.f32.mrb[0].mxu0
  %v1516 = vadd.f32 0.0, %v1515
  %1517 = vmatprep.mubr.f32.mxu0 0.0
  %1518 = vmatmul.mubr.f32.gmra.mrb[0].mxu0 %v1421
  %v1519 = vpop.f32.mrb[0].mxu0
  %v1520 = vadd.f32 0.0, %v1519
  %v1521 = vpop.f32.mrb[0].mxu0
  %v1522 = vadd.f32 0.0, %v1521
  %1523 = vmatprep.mubr.f32.mxu0 0.0
  %1524 = vmatmul.mubr.f32.gmra.mrb[0].mxu0 %v1424
  %v1525 = vpop.f32.mrb[0].mxu0
  %v1526 = vadd.f32 0.0, %v1525
  %v1527 = vpop.f32.mrb[0].mxu0
  %v1528 = vadd.f32 0.0, %v1527
  %1529 = vmatprep.mubr.f32.mxu0 0.0
  %1530 = vmatmul.mubr.f32.gmra.mrb[0].mxu0 %v1427
  %v1531 = vpop.f32.mrb[0].mxu0
  %v1532 = vadd.f32 0.0, %v1531
  %v1533 = vpop.f32.mrb[0].mxu0
  %v1534 = vadd.f32 0.0, %v1533
  %1535 = vmatprep.mubr.f32.mxu0 0.0
  %1536 = vmatmul.mubr.f32.gmra.mrb[0].mxu0 %v1430
  %v1537 = vpop.f32.mrb[0].mxu0
  %v1538 = vadd.f32 0.0, %v1537
  %v1539 = vpop.f32.mrb[0].mxu0
  %v1540 = vadd.f32 0.0, %v1539
  %1541 = vmatprep.mubr.f32.mxu0 0.0
  %1542 = vmatmul.mubr.f32.gmra.mrb[0].mxu0 %v1433
  %v1543 = vpop.f32.mrb[0].mxu0
  %v1544 = vadd.f32 0.0, %v1543
  %v1545 = vpop.f32.mrb[0].mxu0
  %v1546 = vadd.f32 0.0, %v1545
  %1547 = vdwg.mxu0
  %1548 = vmatprep.subr.mxu0 %v1381
  %1549 = vmatpush1.msra.mxu0 %v1380
  %1550 = vmatprep.subr.mxu0 %v1385
  %1551 = vmatpush1.msra.mxu0 %v1384
  %1552 = vmatprep.subr.mxu0 %v1389
  %1553 = vmatpush1.msra.mxu0 %v1388
  %1554 = vmatprep.subr.mxu0 %v1393
  %1555 = vmatpush1.msra.mxu0 %v1392
  %1556 = vmatprep.subr.mxu0 %v1397
  %1557 = vmatpush1.msra.mxu0 %v1396
  %1558 = vmatprep.subr.mxu0 %v1401
  %1559 = vmatpush1.msra.mxu0 %v1400
  %1560 = vmatprep.subr.mxu0 %v1405
  %1561 = vmatpush1.msra.mxu0 %v1404
  %1562 = vmatprep.subr.mxu0 %v1409
  %1563 = vmatpush1.msra.mxu0 %v1408
  %1564 = vmatprep.subr.mxu0 0.0
  %1565 = vmatpush1.msra.mxu0 0.0
  %1566 = vmatprep.subr.mxu0 0.0
  %1567 = vmatpush1.msra.mxu0 0.0
  %1568 = vmatprep.subr.mxu0 0.0
  %1569 = vmatpush1.msra.mxu0 0.0
  %1570 = vmatprep.subr.mxu0 0.0
  %1571 = vmatpush1.msra.mxu0 0.0
  %1572 = vmatprep.subr.mxu0 0.0
  %1573 = vmatpush1.msra.mxu0 0.0
  %1574 = vmatprep.subr.mxu0 0.0
  %1575 = vmatpush1.msra.mxu0 0.0
  %1576 = vmatprep.subr.mxu0 0.0
  %1577 = vmatpush1.msra.mxu0 0.0
  %1578 = vmatprep.subr.mxu0 0.0
  %1579 = vmatpush1.msra.mxu0 0.0
  %1580 = vmatprep.subr.mxu0 0.0
  %1581 = vmatpush1.msra.mxu0 0.0
  %1582 = vmatprep.subr.mxu0 0.0
  %1583 = vmatpush1.msra.mxu0 0.0
  %1584 = vmatprep.subr.mxu0 0.0
  %1585 = vmatpush1.msra.mxu0 0.0
  %1586 = vmatprep.subr.mxu0 0.0
  %1587 = vmatpush1.msra.mxu0 0.0
  %1588 = vmatprep.subr.mxu0 0.0
  %1589 = vmatpush1.msra.mxu0 0.0
  %1590 = vmatprep.subr.mxu0 0.0
  %1591 = vmatpush1.msra.mxu0 0.0
  %1592 = vmatprep.subr.mxu0 0.0
  %1593 = vmatpush1.msra.mxu0 0.0
  %1594 = vmatprep.subr.mxu0 0.0
  %1595 = vmatpush1.msra.mxu0 0.0
  %1596 = vmatprep.subr.mxu0 0.0
  %1597 = vmatpush1.msra.mxu0 0.0
  %1598 = vmatprep.subr.mxu0 0.0
  %1599 = vmatpush1.msra.mxu0 0.0
  %1600 = vmatprep.subr.mxu0 0.0
  %1601 = vmatpush1.msra.mxu0 0.0
  %1602 = vmatprep.subr.mxu0 0.0
  %1603 = vmatpush1.msra.mxu0 0.0
  %1604 = vmatprep.subr.mxu0 0.0
  %1605 = vmatpush1.msra.mxu0 0.0
  %1606 = vmatprep.subr.mxu0 0.0
  %1607 = vmatpush1.msra.mxu0 0.0
  %1608 = vmatprep.subr.mxu0 0.0
  %1609 = vmatpush1.msra.mxu0 0.0
  %1610 = vmatprep.subr.mxu0 0.0
  %1611 = vmatpush1.msra.mxu0 0.0
  %1612 = vmatprep.mubr.f32.mxu0 0.0
  %1613 = vmatmul.mubr.f32.gmra.mrb[0].mxu0 %v1412
  %v1614 = vpop.f32.mrb[0].mxu0
  %v1615 = vadd.f32 0.0, %v1614
  %v1616 = vpop.f32.mrb[0].mxu0
  %v1617 = vadd.f32 0.0, %v1616
  %1618 = vmatprep.mubr.f32.mxu0 0.0
  %1619 = vmatmul.mubr.f32.gmra.mrb[0].mxu0 %v1415
  %v1620 = vpop.f32.mrb[0].mxu0
  %v1621 = vadd.f32 0.0, %v1620
  %v1622 = vpop.f32.mrb[0].mxu0
  %v1623 = vadd.f32 0.0, %v1622
  %1624 = vmatprep.mubr.f32.mxu0 0.0
  %1625 = vmatmul.mubr.f32.gmra.mrb[0].mxu0 %v1418
  %v1626 = vpop.f32.mrb[0].mxu0
  %v1627 = vadd.f32 0.0, %v1626
  %v1628 = vpop.f32.mrb[0].mxu0
  %v1629 = vadd.f32 0.0, %v1628
  %1630 = vmatprep.mubr.f32.mxu0 0.0
  %1631 = vmatmul.mubr.f32.gmra.mrb[0].mxu0 %v1421
  %v1632 = vpop.f32.mrb[0].mxu0
  %v1633 = vadd.f32 0.0, %v1632
  %v1634 = vpop.f32.mrb[0].mxu0
  %v1635 = vadd.f32 0.0, %v1634
  %1636 = vmatprep.mubr.f32.mxu0 0.0
  %1637 = vmatmul.mubr.f32.gmra.mrb[0].mxu0 %v1424
  %v1638 = vpop.f32.mrb[0].mxu0
  %v1639 = vadd.f32 0.0, %v1638
  %v1640 = vpop.f32.mrb[0].mxu0
  %v1641 = vadd.f32 0.0, %v1640
  %1642 = vmatprep.mubr.f32.mxu0 0.0
  %1643 = vmatmul.mubr.f32.gmra.mrb[0].mxu0 %v1427
  %v1644 = vpop.f32.mrb[0].mxu0
  %v1645 = vadd.f32 0.0, %v1644
  %v1646 = vpop.f32.mrb[0].mxu0
  %v1647 = vadd.f32 0.0, %v1646
  %1648 = vmatprep.mubr.f32.mxu0 0.0
  %1649 = vmatmul.mubr.f32.gmra.mrb[0].mxu0 %v1430
  %v1650 = vpop.f32.mrb[0].mxu0
  %v1651 = vadd.f32 0.0, %v1650
  %v1652 = vpop.f32.mrb[0].mxu0
  %v1653 = vadd.f32 0.0, %v1652
  %1654 = vmatprep.mubr.f32.mxu0 0.0
  %1655 = vmatmul.mubr.f32.gmra.mrb[0].mxu0 %v1433
  %v1656 = vpop.f32.mrb[0].mxu0
  %v1657 = vadd.f32 0.0, %v1656
  %v1658 = vpop.f32.mrb[0].mxu0
  %v1659 = vadd.f32 0.0, %v1658
  %1660 = vdwg.mxu0
  %v1661 = vmul.f32 %v1502, 6.0
  %v1662 = vmul.f32 %v1504, 6.0
  %v1663 = vmul.f32 %v1615, 6.0
  %v1664 = vmul.f32 %v1617, 6.0
  %v1665 = vmul.f32 %v1508, 6.0
  %v1666 = vmul.f32 %v1510, 6.0
  %v1667 = vmul.f32 %v1621, 6.0
  %v1668 = vmul.f32 %v1623, 6.0
  %v1669 = vmul.f32 %v1514, 6.0
  %v1670 = vmul.f32 %v1516, 6.0
  %v1671 = vmul.f32 %v1627, 6.0
  %v1672 = vmul.f32 %v1629, 6.0
  %v1673 = vmul.f32 %v1520, 6.0
  %v1674 = vmul.f32 %v1522, 6.0
  %v1675 = vmul.f32 %v1633, 6.0
  %v1676 = vmul.f32 %v1635, 6.0
  %v1677 = vmul.f32 %v1526, 6.0
  %v1678 = vmul.f32 %v1528, 6.0
  %v1679 = vmul.f32 %v1639, 6.0
  %v1680 = vmul.f32 %v1641, 6.0
  %v1681 = vmul.f32 %v1532, 6.0
  %v1682 = vmul.f32 %v1534, 6.0
  %v1683 = vmul.f32 %v1645, 6.0
  %v1684 = vmul.f32 %v1647, 6.0
  %v1685 = vmul.f32 %v1538, 6.0
  %v1686 = vmul.f32 %v1540, 6.0
  %v1687 = vmul.f32 %v1651, 6.0
  %v1688 = vmul.f32 %v1653, 6.0
  %v1689 = vmul.f32 %v1544, 6.0
  %v1690 = vmul.f32 %v1546, 6.0
  %v1691 = vmul.f32 %v1657, 6.0
  %v1692 = vmul.f32 %v1659, 6.0
  %v1693 = vsub.f32 %v1661, 3.0
  %v1694 = vsub.f32 %v1662, 3.0
  %v1695 = vsub.f32 %v1663, 3.0
  %v1696 = vsub.f32 %v1664, 3.0
  %v1697 = vsub.f32 %v1665, 3.0
  %v1698 = vsub.f32 %v1666, 3.0
  %v1699 = vsub.f32 %v1667, 3.0
  %v1700 = vsub.f32 %v1668, 3.0
  %v1701 = vsub.f32 %v1669, 3.0
  %v1702 = vsub.f32 %v1670, 3.0
  %v1703 = vsub.f32 %v1671, 3.0
  %v1704 = vsub.f32 %v1672, 3.0
  %v1705 = vsub.f32 %v1673, 3.0
  %v1706 = vsub.f32 %v1674, 3.0
  %v1707 = vsub.f32 %v1675, 3.0
  %v1708 = vsub.f32 %v1676, 3.0
  %v1709 = vsub.f32 %v1677, 3.0
  %v1710 = vsub.f32 %v1678, 3.0
  %v1711 = vsub.f32 %v1679, 3.0
  %v1712 = vsub.f32 %v1680, 3.0
  %v1713 = vsub.f32 %v1681, 3.0
  %v1714 = vsub.f32 %v1682, 3.0
  %v1715 = vsub.f32 %v1683, 3.0
  %v1716 = vsub.f32 %v1684, 3.0
  %v1717 = vsub.f32 %v1685, 3.0
  %v1718 = vsub.f32 %v1686, 3.0
  %v1719 = vsub.f32 %v1687, 3.0
  %v1720 = vsub.f32 %v1688, 3.0
  %v1721 = vsub.f32 %v1689, 3.0
  %v1722 = vsub.f32 %v1690, 3.0
  %v1723 = vsub.f32 %v1691, 3.0
  %v1724 = vsub.f32 %v1692, 3.0
  %v1727 = vcombine.high %v31, %v31
  %v1728 = vcombine.high %v32, %v32
  %v1730 = vsel %vm41, %v798, 0
  %v1733 = vsel %vm41, %v799, 0
  %v1736 = vsel %vm41, %v800, 0
  %v1739 = vsel %vm41, %v801, 0
  %v1741 = vsel %vm54, %v31, 0
  %v1743 = vsel %vm54, %v1727, 0
  %v1745 = vsel %vm54, %v32, 0
  %v1747 = vsel %vm54, %v1728, 0
  %1749 = vmatprep.subr.mxu0 %v1743
  %1750 = vmatpush1.msra.mxu0 %v1741
  %1751 = vmatprep.subr.mxu0 0.0
  %1752 = vmatpush1.msra.mxu0 0.0
  %1753 = vmatprep.subr.mxu0 0.0
  %1754 = vmatpush1.msra.mxu0 0.0
  %1755 = vmatprep.subr.mxu0 0.0
  %1756 = vmatpush1.msra.mxu0 0.0
  %1757 = vmatprep.subr.mxu0 0.0
  %1758 = vmatpush1.msra.mxu0 0.0
  %1759 = vmatprep.subr.mxu0 0.0
  %1760 = vmatpush1.msra.mxu0 0.0
  %1761 = vmatprep.subr.mxu0 0.0
  %1762 = vmatpush1.msra.mxu0 0.0
  %1763 = vmatprep.subr.mxu0 0.0
  %1764 = vmatpush1.msra.mxu0 0.0
  %1765 = vmatprep.subr.mxu0 0.0
  %1766 = vmatpush1.msra.mxu0 0.0
  %1767 = vmatprep.subr.mxu0 0.0
  %1768 = vmatpush1.msra.mxu0 0.0
  %1769 = vmatprep.subr.mxu0 0.0
  %1770 = vmatpush1.msra.mxu0 0.0
  %1771 = vmatprep.subr.mxu0 0.0
  %1772 = vmatpush1.msra.mxu0 0.0
  %1773 = vmatprep.subr.mxu0 0.0
  %1774 = vmatpush1.msra.mxu0 0.0
  %1775 = vmatprep.subr.mxu0 0.0
  %1776 = vmatpush1.msra.mxu0 0.0
  %1777 = vmatprep.subr.mxu0 0.0
  %1778 = vmatpush1.msra.mxu0 0.0
  %1779 = vmatprep.subr.mxu0 0.0
  %1780 = vmatpush1.msra.mxu0 0.0
  %1781 = vmatprep.subr.mxu0 0.0
  %1782 = vmatpush1.msra.mxu0 0.0
  %1783 = vmatprep.subr.mxu0 0.0
  %1784 = vmatpush1.msra.mxu0 0.0
  %1785 = vmatprep.subr.mxu0 0.0
  %1786 = vmatpush1.msra.mxu0 0.0
  %1787 = vmatprep.subr.mxu0 0.0
  %1788 = vmatpush1.msra.mxu0 0.0
  %1789 = vmatprep.subr.mxu0 0.0
  %1790 = vmatpush1.msra.mxu0 0.0
  %1791 = vmatprep.subr.mxu0 0.0
  %1792 = vmatpush1.msra.mxu0 0.0
  %1793 = vmatprep.subr.mxu0 0.0
  %1794 = vmatpush1.msra.mxu0 0.0
  %1795 = vmatprep.subr.mxu0 0.0
  %1796 = vmatpush1.msra.mxu0 0.0
  %1797 = vmatprep.subr.mxu0 0.0
  %1798 = vmatpush1.msra.mxu0 0.0
  %1799 = vmatprep.subr.mxu0 0.0
  %1800 = vmatpush1.msra.mxu0 0.0
  %1801 = vmatprep.subr.mxu0 0.0
  %1802 = vmatpush1.msra.mxu0 0.0
  %1803 = vmatprep.subr.mxu0 0.0
  %1804 = vmatpush1.msra.mxu0 0.0
  %1805 = vmatprep.subr.mxu0 0.0
  %1806 = vmatpush1.msra.mxu0 0.0
  %1807 = vmatprep.subr.mxu0 0.0
  %1808 = vmatpush1.msra.mxu0 0.0
  %1809 = vmatprep.subr.mxu0 0.0
  %1810 = vmatpush1.msra.mxu0 0.0
  %1811 = vmatprep.subr.mxu0 0.0
  %1812 = vmatpush1.msra.mxu0 0.0
  %1813 = vmatprep.mubr.f32.mxu0 0.0
  %1814 = vmatmul.mubr.f32.gmra.mrb[0].mxu0 %v1730
  %v1815 = vpop.f32.mrb[0].mxu0
  %v1816 = vadd.f32 0.0, %v1815
  %v1817 = vpop.f32.mrb[0].mxu0
  %v1818 = vadd.f32 0.0, %v1817
  %1819 = vmatprep.mubr.f32.mxu0 0.0
  %1820 = vmatmul.mubr.f32.gmra.mrb[0].mxu0 %v1733
  %v1821 = vpop.f32.mrb[0].mxu0
  %v1822 = vadd.f32 0.0, %v1821
  %v1823 = vpop.f32.mrb[0].mxu0
  %v1824 = vadd.f32 0.0, %v1823
  %1825 = vmatprep.mubr.f32.mxu0 0.0
  %1826 = vmatmul.mubr.f32.gmra.mrb[0].mxu0 %v1736
  %v1827 = vpop.f32.mrb[0].mxu0
  %v1828 = vadd.f32 0.0, %v1827
  %v1829 = vpop.f32.mrb[0].mxu0
  %v1830 = vadd.f32 0.0, %v1829
  %1831 = vmatprep.mubr.f32.mxu0 0.0
  %1832 = vmatmul.mubr.f32.gmra.mrb[0].mxu0 %v1739
  %v1833 = vpop.f32.mrb[0].mxu0
  %v1834 = vadd.f32 0.0, %v1833
  %v1835 = vpop.f32.mrb[0].mxu0
  %v1836 = vadd.f32 0.0, %v1835
  %1837 = vdwg.mxu0
  %1838 = vmatprep.subr.mxu0 %v1747
  %1839 = vmatpush1.msra.mxu0 %v1745
  %1840 = vmatprep.subr.mxu0 0.0
  %1841 = vmatpush1.msra.mxu0 0.0
  %1842 = vmatprep.subr.mxu0 0.0
  %1843 = vmatpush1.msra.mxu0 0.0
  %1844 = vmatprep.subr.mxu0 0.0
  %1845 = vmatpush1.msra.mxu0 0.0
  %1846 = vmatprep.subr.mxu0 0.0
  %1847 = vmatpush1.msra.mxu0 0.0
  %1848 = vmatprep.subr.mxu0 0.0
  %1849 = vmatpush1.msra.mxu0 0.0
  %1850 = vmatprep.subr.mxu0 0.0
  %1851 = vmatpush1.msra.mxu0 0.0
  %1852 = vmatprep.subr.mxu0 0.0
  %1853 = vmatpush1.msra.mxu0 0.0
  %1854 = vmatprep.subr.mxu0 0.0
  %1855 = vmatpush1.msra.mxu0 0.0
  %1856 = vmatprep.subr.mxu0 0.0
  %1857 = vmatpush1.msra.mxu0 0.0
  %1858 = vmatprep.subr.mxu0 0.0
  %1859 = vmatpush1.msra.mxu0 0.0
  %1860 = vmatprep.subr.mxu0 0.0
  %1861 = vmatpush1.msra.mxu0 0.0
  %1862 = vmatprep.subr.mxu0 0.0
  %1863 = vmatpush1.msra.mxu0 0.0
  %1864 = vmatprep.subr.mxu0 0.0
  %1865 = vmatpush1.msra.mxu0 0.0
  %1866 = vmatprep.subr.mxu0 0.0
  %1867 = vmatpush1.msra.mxu0 0.0
  %1868 = vmatprep.subr.mxu0 0.0
  %1869 = vmatpush1.msra.mxu0 0.0
  %1870 = vmatprep.subr.mxu0 0.0
  %1871 = vmatpush1.msra.mxu0 0.0
  %1872 = vmatprep.subr.mxu0 0.0
  %1873 = vmatpush1.msra.mxu0 0.0
  %1874 = vmatprep.subr.mxu0 0.0
  %1875 = vmatpush1.msra.mxu0 0.0
  %1876 = vmatprep.subr.mxu0 0.0
  %1877 = vmatpush1.msra.mxu0 0.0
  %1878 = vmatprep.subr.mxu0 0.0
  %1879 = vmatpush1.msra.mxu0 0.0
  %1880 = vmatprep.subr.mxu0 0.0
  %1881 = vmatpush1.msra.mxu0 0.0
  %1882 = vmatprep.subr.mxu0 0.0
  %1883 = vmatpush1.msra.mxu0 0.0
  %1884 = vmatprep.subr.mxu0 0.0
  %1885 = vmatpush1.msra.mxu0 0.0
  %1886 = vmatprep.subr.mxu0 0.0
  %1887 = vmatpush1.msra.mxu0 0.0
  %1888 = vmatprep.subr.mxu0 0.0
  %1889 = vmatpush1.msra.mxu0 0.0
  %1890 = vmatprep.subr.mxu0 0.0
  %1891 = vmatpush1.msra.mxu0 0.0
  %1892 = vmatprep.subr.mxu0 0.0
  %1893 = vmatpush1.msra.mxu0 0.0
  %1894 = vmatprep.subr.mxu0 0.0
  %1895 = vmatpush1.msra.mxu0 0.0
  %1896 = vmatprep.subr.mxu0 0.0
  %1897 = vmatpush1.msra.mxu0 0.0
  %1898 = vmatprep.subr.mxu0 0.0
  %1899 = vmatpush1.msra.mxu0 0.0
  %1900 = vmatprep.subr.mxu0 0.0
  %1901 = vmatpush1.msra.mxu0 0.0
  %1902 = vmatprep.mubr.f32.mxu0 0.0
  %1903 = vmatmul.mubr.f32.gmra.mrb[0].mxu0 %v1730
  %v1904 = vpop.f32.mrb[0].mxu0
  %v1905 = vadd.f32 0.0, %v1904
  %v1906 = vpop.f32.mrb[0].mxu0
  %v1907 = vadd.f32 0.0, %v1906
  %1908 = vmatprep.mubr.f32.mxu0 0.0
  %1909 = vmatmul.mubr.f32.gmra.mrb[0].mxu0 %v1733
  %v1910 = vpop.f32.mrb[0].mxu0
  %v1911 = vadd.f32 0.0, %v1910
  %v1912 = vpop.f32.mrb[0].mxu0
  %v1913 = vadd.f32 0.0, %v1912
  %1914 = vmatprep.mubr.f32.mxu0 0.0
  %1915 = vmatmul.mubr.f32.gmra.mrb[0].mxu0 %v1736
  %v1916 = vpop.f32.mrb[0].mxu0
  %v1917 = vadd.f32 0.0, %v1916
  %v1918 = vpop.f32.mrb[0].mxu0
  %v1919 = vadd.f32 0.0, %v1918
  %1920 = vmatprep.mubr.f32.mxu0 0.0
  %1921 = vmatmul.mubr.f32.gmra.mrb[0].mxu0 %v1739
  %v1922 = vpop.f32.mrb[0].mxu0
  %v1923 = vadd.f32 0.0, %v1922
  %v1924 = vpop.f32.mrb[0].mxu0
  %v1925 = vadd.f32 0.0, %v1924
  %1926 = vdwg.mxu0
  %vm1927 = vcmp.ge.f32.partialorder %v1816, %v1693
  %vm1928 = vcmp.ge.f32.partialorder %v1818, %v1694
  %vm1929 = vcmp.ge.f32.partialorder %v1905, %v1695
  %vm1930 = vcmp.ge.f32.partialorder %v1907, %v1696
  %vm1931 = vcmp.ge.f32.partialorder %v1822, %v1697
  %vm1932 = vcmp.ge.f32.partialorder %v1824, %v1698
  %vm1933 = vcmp.ge.f32.partialorder %v1911, %v1699
  %vm1934 = vcmp.ge.f32.partialorder %v1913, %v1700
  %vm1935 = vcmp.ge.f32.partialorder %v1828, %v1701
  %vm1936 = vcmp.ge.f32.partialorder %v1830, %v1702
  %vm1937 = vcmp.ge.f32.partialorder %v1917, %v1703
  %vm1938 = vcmp.ge.f32.partialorder %v1919, %v1704
  %vm1939 = vcmp.ge.f32.partialorder %v1834, %v1705
  %vm1940 = vcmp.ge.f32.partialorder %v1836, %v1706
  %vm1941 = vcmp.ge.f32.partialorder %v1923, %v1707
  %vm1942 = vcmp.ge.f32.partialorder %v1925, %v1708
  %v1943 = vsel %vm1927, 1, 0
  %v1944 = vsel %vm1928, 1, 0
  %v1945 = vsel %vm1929, 1, 0
  %v1946 = vsel %vm1930, 1, 0
  %v1947 = vsel %vm1931, 1, 0
  %v1948 = vsel %vm1932, 1, 0
  %v1949 = vsel %vm1933, 1, 0
  %v1950 = vsel %vm1934, 1, 0
  %v1951 = vsel %vm1935, 1, 0
  %v1952 = vsel %vm1936, 1, 0
  %v1953 = vsel %vm1937, 1, 0
  %v1954 = vsel %vm1938, 1, 0
  %v1955 = vsel %vm1939, 1, 0
  %v1956 = vsel %vm1940, 1, 0
  %v1957 = vsel %vm1941, 1, 0
  %v1958 = vsel %vm1942, 1, 0
  %v1959 = vcvt.s32.f32 %v1943
  %v1960 = vcvt.s32.f32 %v1944
  %v1961 = vcvt.s32.f32 %v1945
  %v1962 = vcvt.s32.f32 %v1946
  %v1963 = vcvt.s32.f32 %v1947
  %v1964 = vcvt.s32.f32 %v1948
  %v1965 = vcvt.s32.f32 %v1949
  %v1966 = vcvt.s32.f32 %v1950
  %v1967 = vcvt.s32.f32 %v1951
  %v1968 = vcvt.s32.f32 %v1952
  %v1969 = vcvt.s32.f32 %v1953
  %v1970 = vcvt.s32.f32 %v1954
  %v1971 = vcvt.s32.f32 %v1955
  %v1972 = vcvt.s32.f32 %v1956
  %v1973 = vcvt.s32.f32 %v1957
  %v1974 = vcvt.s32.f32 %v1958
  %v1976 = vsel %vm478, %v797, 0
  %1978 = vmatprep.subr.mxu0 %v1960
  %1979 = vmatpush1.msra.mxu0 %v1959
  %1980 = vmatprep.subr.mxu0 %v1964
  %1981 = vmatpush1.msra.mxu0 %v1963
  %1982 = vmatprep.subr.mxu0 %v1968
  %1983 = vmatpush1.msra.mxu0 %v1967
  %1984 = vmatprep.subr.mxu0 %v1972
  %1985 = vmatpush1.msra.mxu0 %v1971
  %1986 = vmatprep.subr.mxu0 0.0
  %1987 = vmatpush1.msra.mxu0 0.0
  %1988 = vmatprep.subr.mxu0 0.0
  %1989 = vmatpush1.msra.mxu0 0.0
  %1990 = vmatprep.subr.mxu0 0.0
  %1991 = vmatpush1.msra.mxu0 0.0
  %1992 = vmatprep.subr.mxu0 0.0
  %1993 = vmatpush1.msra.mxu0 0.0
  %1994 = vmatprep.subr.mxu0 0.0
  %1995 = vmatpush1.msra.mxu0 0.0
  %1996 = vmatprep.subr.mxu0 0.0
  %1997 = vmatpush1.msra.mxu0 0.0
  %1998 = vmatprep.subr.mxu0 0.0
  %1999 = vmatpush1.msra.mxu0 0.0
  %2000 = vmatprep.subr.mxu0 0.0
  %2001 = vmatpush1.msra.mxu0 0.0
  %2002 = vmatprep.subr.mxu0 0.0
  %2003 = vmatpush1.msra.mxu0 0.0
  %2004 = vmatprep.subr.mxu0 0.0
  %2005 = vmatpush1.msra.mxu0 0.0
  %2006 = vmatprep.subr.mxu0 0.0
  %2007 = vmatpush1.msra.mxu0 0.0
  %2008 = vmatprep.subr.mxu0 0.0
  %2009 = vmatpush1.msra.mxu0 0.0
  %2010 = vmatprep.subr.mxu0 0.0
  %2011 = vmatpush1.msra.mxu0 0.0
  %2012 = vmatprep.subr.mxu0 0.0
  %2013 = vmatpush1.msra.mxu0 0.0
  %2014 = vmatprep.subr.mxu0 0.0
  %2015 = vmatpush1.msra.mxu0 0.0
  %2016 = vmatprep.subr.mxu0 0.0
  %2017 = vmatpush1.msra.mxu0 0.0
  %2018 = vmatprep.subr.mxu0 0.0
  %2019 = vmatpush1.msra.mxu0 0.0
  %2020 = vmatprep.subr.mxu0 0.0
  %2021 = vmatpush1.msra.mxu0 0.0
  %2022 = vmatprep.subr.mxu0 0.0
  %2023 = vmatpush1.msra.mxu0 0.0
  %2024 = vmatprep.subr.mxu0 0.0
  %2025 = vmatpush1.msra.mxu0 0.0
  %2026 = vmatprep.subr.mxu0 0.0
  %2027 = vmatpush1.msra.mxu0 0.0
  %2028 = vmatprep.subr.mxu0 0.0
  %2029 = vmatpush1.msra.mxu0 0.0
  %2030 = vmatprep.subr.mxu0 0.0
  %2031 = vmatpush1.msra.mxu0 0.0
  %2032 = vmatprep.subr.mxu0 0.0
  %2033 = vmatpush1.msra.mxu0 0.0
  %2034 = vmatprep.subr.mxu0 0.0
  %2035 = vmatpush1.msra.mxu0 0.0
  %2036 = vmatprep.subr.mxu0 0.0
  %2037 = vmatpush1.msra.mxu0 0.0
  %2038 = vmatprep.subr.mxu0 0.0
  %2039 = vmatpush1.msra.mxu0 0.0
  %2040 = vmatprep.subr.mxu0 0.0
  %2041 = vmatpush1.msra.mxu0 0.0
  %2042 = vmatprep.mubr.f32.mxu0 0.0
  %2043 = vmatmul.mubr.f32.gmra.mrb[0].mxu0 %v1976
  %v2044 = vpop.f32.mrb[0].mxu0
  %v2045 = vadd.f32 0.0, %v2044
  %v2046 = vpop.f32.mrb[0].mxu0
  %v2047 = vadd.f32 0.0, %v2046
  %2048 = vdwg.mxu0
  %2049 = vmatprep.subr.mxu0 %v1962
  %2050 = vmatpush1.msra.mxu0 %v1961
  %2051 = vmatprep.subr.mxu0 %v1966
  %2052 = vmatpush1.msra.mxu0 %v1965
  %2053 = vmatprep.subr.mxu0 %v1970
  %2054 = vmatpush1.msra.mxu0 %v1969
  %2055 = vmatprep.subr.mxu0 %v1974
  %2056 = vmatpush1.msra.mxu0 %v1973
  %2057 = vmatprep.subr.mxu0 0.0
  %2058 = vmatpush1.msra.mxu0 0.0
  %2059 = vmatprep.subr.mxu0 0.0
  %2060 = vmatpush1.msra.mxu0 0.0
  %2061 = vmatprep.subr.mxu0 0.0
  %2062 = vmatpush1.msra.mxu0 0.0
  %2063 = vmatprep.subr.mxu0 0.0
  %2064 = vmatpush1.msra.mxu0 0.0
  %2065 = vmatprep.subr.mxu0 0.0
  %2066 = vmatpush1.msra.mxu0 0.0
  %2067 = vmatprep.subr.mxu0 0.0
  %2068 = vmatpush1.msra.mxu0 0.0
  %2069 = vmatprep.subr.mxu0 0.0
  %2070 = vmatpush1.msra.mxu0 0.0
  %2071 = vmatprep.subr.mxu0 0.0
  %2072 = vmatpush1.msra.mxu0 0.0
  %2073 = vmatprep.subr.mxu0 0.0
  %2074 = vmatpush1.msra.mxu0 0.0
  %2075 = vmatprep.subr.mxu0 0.0
  %2076 = vmatpush1.msra.mxu0 0.0
  %2077 = vmatprep.subr.mxu0 0.0
  %2078 = vmatpush1.msra.mxu0 0.0
  %2079 = vmatprep.subr.mxu0 0.0
  %2080 = vmatpush1.msra.mxu0 0.0
  %2081 = vmatprep.subr.mxu0 0.0
  %2082 = vmatpush1.msra.mxu0 0.0
  %2083 = vmatprep.subr.mxu0 0.0
  %2084 = vmatpush1.msra.mxu0 0.0
  %2085 = vmatprep.subr.mxu0 0.0
  %2086 = vmatpush1.msra.mxu0 0.0
  %2087 = vmatprep.subr.mxu0 0.0
  %2088 = vmatpush1.msra.mxu0 0.0
  %2089 = vmatprep.subr.mxu0 0.0
  %2090 = vmatpush1.msra.mxu0 0.0
  %2091 = vmatprep.subr.mxu0 0.0
  %2092 = vmatpush1.msra.mxu0 0.0
  %2093 = vmatprep.subr.mxu0 0.0
  %2094 = vmatpush1.msra.mxu0 0.0
  %2095 = vmatprep.subr.mxu0 0.0
  %2096 = vmatpush1.msra.mxu0 0.0
  %2097 = vmatprep.subr.mxu0 0.0
  %2098 = vmatpush1.msra.mxu0 0.0
  %2099 = vmatprep.subr.mxu0 0.0
  %2100 = vmatpush1.msra.mxu0 0.0
  %2101 = vmatprep.subr.mxu0 0.0
  %2102 = vmatpush1.msra.mxu0 0.0
  %2103 = vmatprep.subr.mxu0 0.0
  %2104 = vmatpush1.msra.mxu0 0.0
  %2105 = vmatprep.subr.mxu0 0.0
  %2106 = vmatpush1.msra.mxu0 0.0
  %2107 = vmatprep.subr.mxu0 0.0
  %2108 = vmatpush1.msra.mxu0 0.0
  %2109 = vmatprep.subr.mxu0 0.0
  %2110 = vmatpush1.msra.mxu0 0.0
  %2111 = vmatprep.subr.mxu0 0.0
  %2112 = vmatpush1.msra.mxu0 0.0
  %2113 = vmatprep.mubr.f32.mxu0 0.0
  %2114 = vmatmul.mubr.f32.gmra.mrb[0].mxu0 %v1976
  %v2115 = vpop.f32.mrb[0].mxu0
  %v2116 = vadd.f32 0.0, %v2115
  %v2117 = vpop.f32.mrb[0].mxu0
  %v2118 = vadd.f32 0.0, %v2117
  %2119 = vdwg.mxu0
  %v2120 = vsub.f32 %v2045, 1.0
  %v2121 = vsub.f32 %v2047, 1.0
  %v2122 = vsub.f32 %v2116, 1.0
  %v2123 = vsub.f32 %v2118, 1.0
  %v2124 = vmax.f32 %v2120, 0.0
  %v2125 = vmax.f32 %v2121, 0.0
  %v2126 = vmax.f32 %v2122, 0.0
  %v2127 = vmax.f32 %v2123, 0.0
  %v2128 = vmin.f32 %v2124, 7.0
  %v2129 = vmin.f32 %v2125, 7.0
  %v2130 = vmin.f32 %v2126, 7.0
  %v2131 = vmin.f32 %v2127, 7.0
  %v2133 = vsel %vm54, %v2128, 0
  %v2136 = vsel %vm54, %v2129, 0
  %v2139 = vsel %vm54, %v2130, 0
  %v2142 = vsel %vm54, %v2131, 0
  %2144 = vmatprep.subr.mxu0 %v2136
  %2145 = vmatpush1.msra.mxu0 %v2133
  %2146 = vmatprep.subr.mxu0 0.0
  %2147 = vmatpush1.msra.mxu0 0.0
  %2148 = vmatprep.subr.mxu0 0.0
  %2149 = vmatpush1.msra.mxu0 0.0
  %2150 = vmatprep.subr.mxu0 0.0
  %2151 = vmatpush1.msra.mxu0 0.0
  %2152 = vmatprep.subr.mxu0 0.0
  %2153 = vmatpush1.msra.mxu0 0.0
  %2154 = vmatprep.subr.mxu0 0.0
  %2155 = vmatpush1.msra.mxu0 0.0
  %2156 = vmatprep.subr.mxu0 0.0
  %2157 = vmatpush1.msra.mxu0 0.0
  %2158 = vmatprep.subr.mxu0 0.0
  %2159 = vmatpush1.msra.mxu0 0.0
  %2160 = vmatprep.subr.mxu0 0.0
  %2161 = vmatpush1.msra.mxu0 0.0
  %2162 = vmatprep.subr.mxu0 0.0
  %2163 = vmatpush1.msra.mxu0 0.0
  %2164 = vmatprep.subr.mxu0 0.0
  %2165 = vmatpush1.msra.mxu0 0.0
  %2166 = vmatprep.subr.mxu0 0.0
  %2167 = vmatpush1.msra.mxu0 0.0
  %2168 = vmatprep.subr.mxu0 0.0
  %2169 = vmatpush1.msra.mxu0 0.0
  %2170 = vmatprep.subr.mxu0 0.0
  %2171 = vmatpush1.msra.mxu0 0.0
  %2172 = vmatprep.subr.mxu0 0.0
  %2173 = vmatpush1.msra.mxu0 0.0
  %2174 = vmatprep.subr.mxu0 0.0
  %2175 = vmatpush1.msra.mxu0 0.0
  %2176 = vmatprep.subr.mxu0 0.0
  %2177 = vmatpush1.msra.mxu0 0.0
  %2178 = vmatprep.subr.mxu0 0.0
  %2179 = vmatpush1.msra.mxu0 0.0
  %2180 = vmatprep.subr.mxu0 0.0
  %2181 = vmatpush1.msra.mxu0 0.0
  %2182 = vmatprep.subr.mxu0 0.0
  %2183 = vmatpush1.msra.mxu0 0.0
  %2184 = vmatprep.subr.mxu0 0.0
  %2185 = vmatpush1.msra.mxu0 0.0
  %2186 = vmatprep.subr.mxu0 0.0
  %2187 = vmatpush1.msra.mxu0 0.0
  %2188 = vmatprep.subr.mxu0 0.0
  %2189 = vmatpush1.msra.mxu0 0.0
  %2190 = vmatprep.subr.mxu0 0.0
  %2191 = vmatpush1.msra.mxu0 0.0
  %2192 = vmatprep.subr.mxu0 0.0
  %2193 = vmatpush1.msra.mxu0 0.0
  %2194 = vmatprep.subr.mxu0 0.0
  %2195 = vmatpush1.msra.mxu0 0.0
  %2196 = vmatprep.subr.mxu0 0.0
  %2197 = vmatpush1.msra.mxu0 0.0
  %2198 = vmatprep.subr.mxu0 0.0
  %2199 = vmatpush1.msra.mxu0 0.0
  %2200 = vmatprep.subr.mxu0 0.0
  %2201 = vmatpush1.msra.mxu0 0.0
  %2202 = vmatprep.subr.mxu0 0.0
  %2203 = vmatpush1.msra.mxu0 0.0
  %2204 = vmatprep.subr.mxu0 0.0
  %2205 = vmatpush1.msra.mxu0 0.0
  %2206 = vmatprep.subr.mxu0 0.0
  %2207 = vmatpush1.msra.mxu0 0.0
  %2208 = vmatprep.mubr.f32.mxu0 0.0
  %2209 = vmatmul.mubr.f32.gmra.mrb[0].mxu0 %v1730
  %v2210 = vpop.f32.mrb[0].mxu0
  %v2211 = vadd.f32 0.0, %v2210
  %v2212 = vpop.f32.mrb[0].mxu0
  %v2213 = vadd.f32 0.0, %v2212
  %2214 = vmatprep.mubr.f32.mxu0 0.0
  %2215 = vmatmul.mubr.f32.gmra.mrb[0].mxu0 %v1733
  %v2216 = vpop.f32.mrb[0].mxu0
  %v2217 = vadd.f32 0.0, %v2216
  %v2218 = vpop.f32.mrb[0].mxu0
  %v2219 = vadd.f32 0.0, %v2218
  %2220 = vmatprep.mubr.f32.mxu0 0.0
  %2221 = vmatmul.mubr.f32.gmra.mrb[0].mxu0 %v1736
  %v2222 = vpop.f32.mrb[0].mxu0
  %v2223 = vadd.f32 0.0, %v2222
  %v2224 = vpop.f32.mrb[0].mxu0
  %v2225 = vadd.f32 0.0, %v2224
  %2226 = vmatprep.mubr.f32.mxu0 0.0
  %2227 = vmatmul.mubr.f32.gmra.mrb[0].mxu0 %v1739
  %v2228 = vpop.f32.mrb[0].mxu0
  %v2229 = vadd.f32 0.0, %v2228
  %v2230 = vpop.f32.mrb[0].mxu0
  %v2231 = vadd.f32 0.0, %v2230
  %2232 = vdwg.mxu0
  %2233 = vmatprep.subr.mxu0 %v2142
  %2234 = vmatpush1.msra.mxu0 %v2139
  %2235 = vmatprep.subr.mxu0 0.0
  %2236 = vmatpush1.msra.mxu0 0.0
  %2237 = vmatprep.subr.mxu0 0.0
  %2238 = vmatpush1.msra.mxu0 0.0
  %2239 = vmatprep.subr.mxu0 0.0
  %2240 = vmatpush1.msra.mxu0 0.0
  %2241 = vmatprep.subr.mxu0 0.0
  %2242 = vmatpush1.msra.mxu0 0.0
  %2243 = vmatprep.subr.mxu0 0.0
  %2244 = vmatpush1.msra.mxu0 0.0
  %2245 = vmatprep.subr.mxu0 0.0
  %2246 = vmatpush1.msra.mxu0 0.0
  %2247 = vmatprep.subr.mxu0 0.0
  %2248 = vmatpush1.msra.mxu0 0.0
  %2249 = vmatprep.subr.mxu0 0.0
  %2250 = vmatpush1.msra.mxu0 0.0
  %2251 = vmatprep.subr.mxu0 0.0
  %2252 = vmatpush1.msra.mxu0 0.0
  %2253 = vmatprep.subr.mxu0 0.0
  %2254 = vmatpush1.msra.mxu0 0.0
  %2255 = vmatprep.subr.mxu0 0.0
  %2256 = vmatpush1.msra.mxu0 0.0
  %2257 = vmatprep.subr.mxu0 0.0
  %2258 = vmatpush1.msra.mxu0 0.0
  %2259 = vmatprep.subr.mxu0 0.0
  %2260 = vmatpush1.msra.mxu0 0.0
  %2261 = vmatprep.subr.mxu0 0.0
  %2262 = vmatpush1.msra.mxu0 0.0
  %2263 = vmatprep.subr.mxu0 0.0
  %2264 = vmatpush1.msra.mxu0 0.0
  %2265 = vmatprep.subr.mxu0 0.0
  %2266 = vmatpush1.msra.mxu0 0.0
  %2267 = vmatprep.subr.mxu0 0.0
  %2268 = vmatpush1.msra.mxu0 0.0
  %2269 = vmatprep.subr.mxu0 0.0
  %2270 = vmatpush1.msra.mxu0 0.0
  %2271 = vmatprep.subr.mxu0 0.0
  %2272 = vmatpush1.msra.mxu0 0.0
  %2273 = vmatprep.subr.mxu0 0.0
  %2274 = vmatpush1.msra.mxu0 0.0
  %2275 = vmatprep.subr.mxu0 0.0
  %2276 = vmatpush1.msra.mxu0 0.0
  %2277 = vmatprep.subr.mxu0 0.0
  %2278 = vmatpush1.msra.mxu0 0.0
  %2279 = vmatprep.subr.mxu0 0.0
  %2280 = vmatpush1.msra.mxu0 0.0
  %2281 = vmatprep.subr.mxu0 0.0
  %2282 = vmatpush1.msra.mxu0 0.0
  %2283 = vmatprep.subr.mxu0 0.0
  %2284 = vmatpush1.msra.mxu0 0.0
  %2285 = vmatprep.subr.mxu0 0.0
  %2286 = vmatpush1.msra.mxu0 0.0
  %2287 = vmatprep.subr.mxu0 0.0
  %2288 = vmatpush1.msra.mxu0 0.0
  %2289 = vmatprep.subr.mxu0 0.0
  %2290 = vmatpush1.msra.mxu0 0.0
  %2291 = vmatprep.subr.mxu0 0.0
  %2292 = vmatpush1.msra.mxu0 0.0
  %2293 = vmatprep.subr.mxu0 0.0
  %2294 = vmatpush1.msra.mxu0 0.0
  %2295 = vmatprep.subr.mxu0 0.0
  %2296 = vmatpush1.msra.mxu0 0.0
  %2297 = vmatprep.mubr.f32.mxu0 0.0
  %2298 = vmatmul.mubr.f32.gmra.mrb[0].mxu0 %v1730
  %v2299 = vpop.f32.mrb[0].mxu0
  %v2300 = vadd.f32 0.0, %v2299
  %v2301 = vpop.f32.mrb[0].mxu0
  %v2302 = vadd.f32 0.0, %v2301
  %2303 = vmatprep.mubr.f32.mxu0 0.0
  %2304 = vmatmul.mubr.f32.gmra.mrb[0].mxu0 %v1733
  %v2305 = vpop.f32.mrb[0].mxu0
  %v2306 = vadd.f32 0.0, %v2305
  %v2307 = vpop.f32.mrb[0].mxu0
  %v2308 = vadd.f32 0.0, %v2307
  %2309 = vmatprep.mubr.f32.mxu0 0.0
  %2310 = vmatmul.mubr.f32.gmra.mrb[0].mxu0 %v1736
  %v2311 = vpop.f32.mrb[0].mxu0
  %v2312 = vadd.f32 0.0, %v2311
  %v2313 = vpop.f32.mrb[0].mxu0
  %v2314 = vadd.f32 0.0, %v2313
  %2315 = vmatprep.mubr.f32.mxu0 0.0
  %2316 = vmatmul.mubr.f32.gmra.mrb[0].mxu0 %v1739
  %v2317 = vpop.f32.mrb[0].mxu0
  %v2318 = vadd.f32 0.0, %v2317
  %v2319 = vpop.f32.mrb[0].mxu0
  %v2320 = vadd.f32 0.0, %v2319
  %2321 = vdwg.mxu0
  %v2322 = vlaneseq
  %v2323 = vshrl.u32 %v2322, 7
  %v2324 = vadd.s32 %v2323, 8
  %v2325 = vadd.s32 %v2323, 16
  %v2326 = vadd.s32 %v2323, 24
  %vm2327 = vcmp.lt.s32.totalorder %v2323, 0
  %v2328 = vsub.s32 0, %v2323
  %v2329 = vsel %vm2327, %v2328, %v2323
  %v2330 = vshrl.u32 %v2329, 3
  %v2331 = vand.u32 %v2329, 7
  %v2332 = vsub.s32 0, %v2331
  %v2333 = vsel %vm2327, %v2332, %v2331
  %vm2334 = vcmp.lt.s32.totalorder %v2324, 0
  %v2335 = vsub.s32 0, %v2324
  %v2336 = vsel %vm2334, %v2335, %v2324
  %v2337 = vshrl.u32 %v2336, 3
  %v2338 = vand.u32 %v2336, 7
  %v2339 = vsub.s32 0, %v2338
  %v2340 = vsel %vm2334, %v2339, %v2338
  %vm2341 = vcmp.lt.s32.totalorder %v2325, 0
  %v2342 = vsub.s32 0, %v2325
  %v2343 = vsel %vm2341, %v2342, %v2325
  %v2344 = vshrl.u32 %v2343, 3
  %v2345 = vand.u32 %v2343, 7
  %v2346 = vsub.s32 0, %v2345
  %v2347 = vsel %vm2341, %v2346, %v2345
  %vm2348 = vcmp.lt.s32.totalorder %v2326, 0
  %v2349 = vsub.s32 0, %v2326
  %v2350 = vsel %vm2348, %v2349, %v2326
  %v2351 = vshrl.u32 %v2350, 3
  %v2352 = vand.u32 %v2350, 7
  %v2353 = vsub.s32 0, %v2352
  %v2354 = vsel %vm2348, %v2353, %v2352
  %vm2355 = vcmp.ne.s32.totalorder %v2333, 0
  %vm2356 = vcmp.ne.s32.totalorder %v2340, 0
  %vm2357 = vcmp.ne.s32.totalorder %v2347, 0
  %vm2358 = vcmp.ne.s32.totalorder %v2354, 0
  %vm2359 = vcmp.lt.s32.totalorder %v2333, 0
  %vm2360 = vcmp.lt.s32.totalorder %v2340, 0
  %vm2361 = vcmp.lt.s32.totalorder %v2347, 0
  %vm2362 = vcmp.lt.s32.totalorder %v2354, 0
  %vm2363 = vmand %vm2359, %vm2355
  %vm2364 = vmand %vm2360, %vm2356
  %vm2365 = vmand %vm2361, %vm2357
  %vm2366 = vmand %vm2362, %vm2358
  %v2367 = vadd.s32 %v2333, 8
  %v2368 = vadd.s32 %v2340, 8
  %v2369 = vadd.s32 %v2347, 8
  %v2370 = vadd.s32 %v2354, 8
  %v2371 = vsel %vm2363, %v2367, %v2333
  %v2372 = vsel %vm2364, %v2368, %v2340
  %v2373 = vsel %vm2365, %v2369, %v2347
  %v2374 = vsel %vm2366, %v2370, %v2354
  %v2375 = vcvt.s32.f32 %v2371
  %v2376 = vcvt.s32.f32 %v2372
  %v2377 = vcvt.s32.f32 %v2373
  %v2378 = vcvt.s32.f32 %v2374
  %vm2379 = vcmp.eq.f32.partialorder %v2375, %v2211
  %vm2380 = vcmp.eq.f32.partialorder %v2375, %v2213
  %vm2381 = vcmp.eq.f32.partialorder %v2375, %v2300
  %vm2382 = vcmp.eq.f32.partialorder %v2375, %v2302
  %vm2383 = vcmp.eq.f32.partialorder %v2376, %v2217
  %vm2384 = vcmp.eq.f32.partialorder %v2376, %v2219
  %vm2385 = vcmp.eq.f32.partialorder %v2376, %v2306
  %vm2386 = vcmp.eq.f32.partialorder %v2376, %v2308
  %vm2387 = vcmp.eq.f32.partialorder %v2377, %v2223
  %vm2388 = vcmp.eq.f32.partialorder %v2377, %v2225
  %vm2389 = vcmp.eq.f32.partialorder %v2377, %v2312
  %vm2390 = vcmp.eq.f32.partialorder %v2377, %v2314
  %vm2391 = vcmp.eq.f32.partialorder %v2378, %v2229
  %vm2392 = vcmp.eq.f32.partialorder %v2378, %v2231
  %vm2393 = vcmp.eq.f32.partialorder %v2378, %v2318
  %vm2394 = vcmp.eq.f32.partialorder %v2378, %v2320
  %v2395 = vsel %vm2379, 1, 0
  %v2396 = vsel %vm2380, 1, 0
  %v2397 = vsel %vm2381, 1, 0
  %v2398 = vsel %vm2382, 1, 0
  %v2399 = vsel %vm2383, 1, 0
  %v2400 = vsel %vm2384, 1, 0
  %v2401 = vsel %vm2385, 1, 0
  %v2402 = vsel %vm2386, 1, 0
  %v2403 = vsel %vm2387, 1, 0
  %v2404 = vsel %vm2388, 1, 0
  %v2405 = vsel %vm2389, 1, 0
  %v2406 = vsel %vm2390, 1, 0
  %v2407 = vsel %vm2391, 1, 0
  %v2408 = vsel %vm2392, 1, 0
  %v2409 = vsel %vm2393, 1, 0
  %v2410 = vsel %vm2394, 1, 0
  %v2411 = vcvt.s32.f32 %v2395
  %v2412 = vcvt.s32.f32 %v2396
  %v2413 = vcvt.s32.f32 %v2397
  %v2414 = vcvt.s32.f32 %v2398
  %v2415 = vcvt.s32.f32 %v2399
  %v2416 = vcvt.s32.f32 %v2400
  %v2417 = vcvt.s32.f32 %v2401
  %v2418 = vcvt.s32.f32 %v2402
  %v2419 = vcvt.s32.f32 %v2403
  %v2420 = vcvt.s32.f32 %v2404
  %v2421 = vcvt.s32.f32 %v2405
  %v2422 = vcvt.s32.f32 %v2406
  %v2423 = vcvt.s32.f32 %v2407
  %v2424 = vcvt.s32.f32 %v2408
  %v2425 = vcvt.s32.f32 %v2409
  %v2426 = vcvt.s32.f32 %v2410
  %vm2427 = vcmp.eq.f32.partialorder %v2211, 7.0
  %vm2428 = vcmp.eq.f32.partialorder %v2213, 7.0
  %vm2429 = vcmp.eq.f32.partialorder %v2300, 7.0
  %vm2430 = vcmp.eq.f32.partialorder %v2302, 7.0
  %vm2431 = vcmp.eq.f32.partialorder %v2217, 7.0
  %vm2432 = vcmp.eq.f32.partialorder %v2219, 7.0
  %vm2433 = vcmp.eq.f32.partialorder %v2306, 7.0
  %vm2434 = vcmp.eq.f32.partialorder %v2308, 7.0
  %vm2435 = vcmp.eq.f32.partialorder %v2223, 7.0
  %vm2436 = vcmp.eq.f32.partialorder %v2225, 7.0
  %vm2437 = vcmp.eq.f32.partialorder %v2312, 7.0
  %vm2438 = vcmp.eq.f32.partialorder %v2314, 7.0
  %vm2439 = vcmp.eq.f32.partialorder %v2229, 7.0
  %vm2440 = vcmp.eq.f32.partialorder %v2231, 7.0
  %vm2441 = vcmp.eq.f32.partialorder %v2318, 7.0
  %vm2442 = vcmp.eq.f32.partialorder %v2320, 7.0
  %v2443 = vadd.f32 %v2211, 1.0
  %v2444 = vadd.f32 %v2213, 1.0
  %v2445 = vadd.f32 %v2300, 1.0
  %v2446 = vadd.f32 %v2302, 1.0
  %v2447 = vadd.f32 %v2217, 1.0
  %v2448 = vadd.f32 %v2219, 1.0
  %v2449 = vadd.f32 %v2306, 1.0
  %v2450 = vadd.f32 %v2308, 1.0
  %v2451 = vadd.f32 %v2223, 1.0
  %v2452 = vadd.f32 %v2225, 1.0
  %v2453 = vadd.f32 %v2312, 1.0
  %v2454 = vadd.f32 %v2314, 1.0
  %v2455 = vadd.f32 %v2229, 1.0
  %v2456 = vadd.f32 %v2231, 1.0
  %v2457 = vadd.f32 %v2318, 1.0
  %v2458 = vadd.f32 %v2320, 1.0
  %v2459 = vsel %vm2427, 0.0, %v2443
  %v2460 = vsel %vm2428, 0.0, %v2444
  %v2461 = vsel %vm2429, 0.0, %v2445
  %v2462 = vsel %vm2430, 0.0, %v2446
  %v2463 = vsel %vm2431, 0.0, %v2447
  %v2464 = vsel %vm2432, 0.0, %v2448
  %v2465 = vsel %vm2433, 0.0, %v2449
  %v2466 = vsel %vm2434, 0.0, %v2450
  %v2467 = vsel %vm2435, 0.0, %v2451
  %v2468 = vsel %vm2436, 0.0, %v2452
  %v2469 = vsel %vm2437, 0.0, %v2453
  %v2470 = vsel %vm2438, 0.0, %v2454
  %v2471 = vsel %vm2439, 0.0, %v2455
  %v2472 = vsel %vm2440, 0.0, %v2456
  %v2473 = vsel %vm2441, 0.0, %v2457
  %v2474 = vsel %vm2442, 0.0, %v2458
  %vm2475 = vcmp.eq.f32.partialorder %v2375, %v2459
  %vm2476 = vcmp.eq.f32.partialorder %v2375, %v2460
  %vm2477 = vcmp.eq.f32.partialorder %v2375, %v2461
  %vm2478 = vcmp.eq.f32.partialorder %v2375, %v2462
  %vm2479 = vcmp.eq.f32.partialorder %v2376, %v2463
  %vm2480 = vcmp.eq.f32.partialorder %v2376, %v2464
  %vm2481 = vcmp.eq.f32.partialorder %v2376, %v2465
  %vm2482 = vcmp.eq.f32.partialorder %v2376, %v2466
  %vm2483 = vcmp.eq.f32.partialorder %v2377, %v2467
  %vm2484 = vcmp.eq.f32.partialorder %v2377, %v2468
  %vm2485 = vcmp.eq.f32.partialorder %v2377, %v2469
  %vm2486 = vcmp.eq.f32.partialorder %v2377, %v2470
  %vm2487 = vcmp.eq.f32.partialorder %v2378, %v2471
  %vm2488 = vcmp.eq.f32.partialorder %v2378, %v2472
  %vm2489 = vcmp.eq.f32.partialorder %v2378, %v2473
  %vm2490 = vcmp.eq.f32.partialorder %v2378, %v2474
  %v2491 = vsel %vm2475, 1, 0
  %v2492 = vsel %vm2476, 1, 0
  %v2493 = vsel %vm2477, 1, 0
  %v2494 = vsel %vm2478, 1, 0
  %v2495 = vsel %vm2479, 1, 0
  %v2496 = vsel %vm2480, 1, 0
  %v2497 = vsel %vm2481, 1, 0
  %v2498 = vsel %vm2482, 1, 0
  %v2499 = vsel %vm2483, 1, 0
  %v2500 = vsel %vm2484, 1, 0
  %v2501 = vsel %vm2485, 1, 0
  %v2502 = vsel %vm2486, 1, 0
  %v2503 = vsel %vm2487, 1, 0
  %v2504 = vsel %vm2488, 1, 0
  %v2505 = vsel %vm2489, 1, 0
  %v2506 = vsel %vm2490, 1, 0
  %v2507 = vcvt.s32.f32 %v2491
  %v2508 = vcvt.s32.f32 %v2492
  %v2509 = vcvt.s32.f32 %v2493
  %v2510 = vcvt.s32.f32 %v2494
  %v2511 = vcvt.s32.f32 %v2495
  %v2512 = vcvt.s32.f32 %v2496
  %v2513 = vcvt.s32.f32 %v2497
  %v2514 = vcvt.s32.f32 %v2498
  %v2515 = vcvt.s32.f32 %v2499
  %v2516 = vcvt.s32.f32 %v2500
  %v2517 = vcvt.s32.f32 %v2501
  %v2518 = vcvt.s32.f32 %v2502
  %v2519 = vcvt.s32.f32 %v2503
  %v2520 = vcvt.s32.f32 %v2504
  %v2521 = vcvt.s32.f32 %v2505
  %v2522 = vcvt.s32.f32 %v2506
  %v2523 = vmul.f32 %v1693, %v2411
  %v2524 = vmul.f32 %v1694, %v2412
  %v2525 = vmul.f32 %v1695, %v2413
  %v2526 = vmul.f32 %v1696, %v2414
  %v2527 = vmul.f32 %v1697, %v2415
  %v2528 = vmul.f32 %v1698, %v2416
  %v2529 = vmul.f32 %v1699, %v2417
  %v2530 = vmul.f32 %v1700, %v2418
  %v2531 = vmul.f32 %v1701, %v2419
  %v2532 = vmul.f32 %v1702, %v2420
  %v2533 = vmul.f32 %v1703, %v2421
  %v2534 = vmul.f32 %v1704, %v2422
  %v2535 = vmul.f32 %v1705, %v2423
  %v2536 = vmul.f32 %v1706, %v2424
  %v2537 = vmul.f32 %v1707, %v2425
  %v2538 = vmul.f32 %v1708, %v2426
  %2539 = vmatprep.subr.mxu0 %v2524
  %2540 = vmatpush1.msra.mxu0 %v2523
  %2541 = vmatprep.subr.mxu0 %v2528
  %2542 = vmatpush1.msra.mxu0 %v2527
  %2543 = vmatprep.subr.mxu0 %v2532
  %2544 = vmatpush1.msra.mxu0 %v2531
  %2545 = vmatprep.subr.mxu0 %v2536
  %2546 = vmatpush1.msra.mxu0 %v2535
  %2547 = vmatprep.subr.mxu0 0.0
  %2548 = vmatpush1.msra.mxu0 0.0
  %2549 = vmatprep.subr.mxu0 0.0
  %2550 = vmatpush1.msra.mxu0 0.0
  %2551 = vmatprep.subr.mxu0 0.0
  %2552 = vmatpush1.msra.mxu0 0.0
  %2553 = vmatprep.subr.mxu0 0.0
  %2554 = vmatpush1.msra.mxu0 0.0
  %2555 = vmatprep.subr.mxu0 0.0
  %2556 = vmatpush1.msra.mxu0 0.0
  %2557 = vmatprep.subr.mxu0 0.0
  %2558 = vmatpush1.msra.mxu0 0.0
  %2559 = vmatprep.subr.mxu0 0.0
  %2560 = vmatpush1.msra.mxu0 0.0
  %2561 = vmatprep.subr.mxu0 0.0
  %2562 = vmatpush1.msra.mxu0 0.0
  %2563 = vmatprep.subr.mxu0 0.0
  %2564 = vmatpush1.msra.mxu0 0.0
  %2565 = vmatprep.subr.mxu0 0.0
  %2566 = vmatpush1.msra.mxu0 0.0
  %2567 = vmatprep.subr.mxu0 0.0
  %2568 = vmatpush1.msra.mxu0 0.0
  %2569 = vmatprep.subr.mxu0 0.0
  %2570 = vmatpush1.msra.mxu0 0.0
  %2571 = vmatprep.subr.mxu0 0.0
  %2572 = vmatpush1.msra.mxu0 0.0
  %2573 = vmatprep.subr.mxu0 0.0
  %2574 = vmatpush1.msra.mxu0 0.0
  %2575 = vmatprep.subr.mxu0 0.0
  %2576 = vmatpush1.msra.mxu0 0.0
  %2577 = vmatprep.subr.mxu0 0.0
  %2578 = vmatpush1.msra.mxu0 0.0
  %2579 = vmatprep.subr.mxu0 0.0
  %2580 = vmatpush1.msra.mxu0 0.0
  %2581 = vmatprep.subr.mxu0 0.0
  %2582 = vmatpush1.msra.mxu0 0.0
  %2583 = vmatprep.subr.mxu0 0.0
  %2584 = vmatpush1.msra.mxu0 0.0
  %2585 = vmatprep.subr.mxu0 0.0
  %2586 = vmatpush1.msra.mxu0 0.0
  %2587 = vmatprep.subr.mxu0 0.0
  %2588 = vmatpush1.msra.mxu0 0.0
  %2589 = vmatprep.subr.mxu0 0.0
  %2590 = vmatpush1.msra.mxu0 0.0
  %2591 = vmatprep.subr.mxu0 0.0
  %2592 = vmatpush1.msra.mxu0 0.0
  %2593 = vmatprep.subr.mxu0 0.0
  %2594 = vmatpush1.msra.mxu0 0.0
  %2595 = vmatprep.subr.mxu0 0.0
  %2596 = vmatpush1.msra.mxu0 0.0
  %2597 = vmatprep.subr.mxu0 0.0
  %2598 = vmatpush1.msra.mxu0 0.0
  %2599 = vmatprep.subr.mxu0 0.0
  %2600 = vmatpush1.msra.mxu0 0.0
  %2601 = vmatprep.subr.mxu0 0.0
  %2602 = vmatpush1.msra.mxu0 0.0
  %2603 = vmatprep.mubr.f32.mxu0 0.0
  %2604 = vmatmul.mubr.f32.gmra.mrb[0].mxu0 %v1976
  %v2605 = vpop.f32.mrb[0].mxu0
  %v2606 = vadd.f32 0.0, %v2605
  %v2607 = vpop.f32.mrb[0].mxu0
  %v2608 = vadd.f32 0.0, %v2607
  %2609 = vdwg.mxu0
  %2610 = vmatprep.subr.mxu0 %v2526
  %2611 = vmatpush1.msra.mxu0 %v2525
  %2612 = vmatprep.subr.mxu0 %v2530
  %2613 = vmatpush1.msra.mxu0 %v2529
  %2614 = vmatprep.subr.mxu0 %v2534
  %2615 = vmatpush1.msra.mxu0 %v2533
  %2616 = vmatprep.subr.mxu0 %v2538
  %2617 = vmatpush1.msra.mxu0 %v2537
  %2618 = vmatprep.subr.mxu0 0.0
  %2619 = vmatpush1.msra.mxu0 0.0
  %2620 = vmatprep.subr.mxu0 0.0
  %2621 = vmatpush1.msra.mxu0 0.0
  %2622 = vmatprep.subr.mxu0 0.0
  %2623 = vmatpush1.msra.mxu0 0.0
  %2624 = vmatprep.subr.mxu0 0.0
  %2625 = vmatpush1.msra.mxu0 0.0
  %2626 = vmatprep.subr.mxu0 0.0
  %2627 = vmatpush1.msra.mxu0 0.0
  %2628 = vmatprep.subr.mxu0 0.0
  %2629 = vmatpush1.msra.mxu0 0.0
  %2630 = vmatprep.subr.mxu0 0.0
  %2631 = vmatpush1.msra.mxu0 0.0
  %2632 = vmatprep.subr.mxu0 0.0
  %2633 = vmatpush1.msra.mxu0 0.0
  %2634 = vmatprep.subr.mxu0 0.0
  %2635 = vmatpush1.msra.mxu0 0.0
  %2636 = vmatprep.subr.mxu0 0.0
  %2637 = vmatpush1.msra.mxu0 0.0
  %2638 = vmatprep.subr.mxu0 0.0
  %2639 = vmatpush1.msra.mxu0 0.0
  %2640 = vmatprep.subr.mxu0 0.0
  %2641 = vmatpush1.msra.mxu0 0.0
  %2642 = vmatprep.subr.mxu0 0.0
  %2643 = vmatpush1.msra.mxu0 0.0
  %2644 = vmatprep.subr.mxu0 0.0
  %2645 = vmatpush1.msra.mxu0 0.0
  %2646 = vmatprep.subr.mxu0 0.0
  %2647 = vmatpush1.msra.mxu0 0.0
  %2648 = vmatprep.subr.mxu0 0.0
  %2649 = vmatpush1.msra.mxu0 0.0
  %2650 = vmatprep.subr.mxu0 0.0
  %2651 = vmatpush1.msra.mxu0 0.0
  %2652 = vmatprep.subr.mxu0 0.0
  %2653 = vmatpush1.msra.mxu0 0.0
  %2654 = vmatprep.subr.mxu0 0.0
  %2655 = vmatpush1.msra.mxu0 0.0
  %2656 = vmatprep.subr.mxu0 0.0
  %2657 = vmatpush1.msra.mxu0 0.0
  %2658 = vmatprep.subr.mxu0 0.0
  %2659 = vmatpush1.msra.mxu0 0.0
  %2660 = vmatprep.subr.mxu0 0.0
  %2661 = vmatpush1.msra.mxu0 0.0
  %2662 = vmatprep.subr.mxu0 0.0
  %2663 = vmatpush1.msra.mxu0 0.0
  %2664 = vmatprep.subr.mxu0 0.0
  %2665 = vmatpush1.msra.mxu0 0.0
  %2666 = vmatprep.subr.mxu0 0.0
  %2667 = vmatpush1.msra.mxu0 0.0
  %2668 = vmatprep.subr.mxu0 0.0
  %2669 = vmatpush1.msra.mxu0 0.0
  %2670 = vmatprep.subr.mxu0 0.0
  %2671 = vmatpush1.msra.mxu0 0.0
  %2672 = vmatprep.subr.mxu0 0.0
  %2673 = vmatpush1.msra.mxu0 0.0
  %2674 = vmatprep.mubr.f32.mxu0 0.0
  %2675 = vmatmul.mubr.f32.gmra.mrb[0].mxu0 %v1976
  %v2676 = vpop.f32.mrb[0].mxu0
  %v2677 = vadd.f32 0.0, %v2676
  %v2678 = vpop.f32.mrb[0].mxu0
  %v2679 = vadd.f32 0.0, %v2678
  %2680 = vdwg.mxu0
  %v2681 = vmul.f32 %v1709, %v2411
  %v2682 = vmul.f32 %v1710, %v2412
  %v2683 = vmul.f32 %v1711, %v2413
  %v2684 = vmul.f32 %v1712, %v2414
  %v2685 = vmul.f32 %v1713, %v2415
  %v2686 = vmul.f32 %v1714, %v2416
  %v2687 = vmul.f32 %v1715, %v2417
  %v2688 = vmul.f32 %v1716, %v2418
  %v2689 = vmul.f32 %v1717, %v2419
  %v2690 = vmul.f32 %v1718, %v2420
  %v2691 = vmul.f32 %v1719, %v2421
  %v2692 = vmul.f32 %v1720, %v2422
  %v2693 = vmul.f32 %v1721, %v2423
  %v2694 = vmul.f32 %v1722, %v2424
  %v2695 = vmul.f32 %v1723, %v2425
  %v2696 = vmul.f32 %v1724, %v2426
  %v2697 = vmul.f32 %v1378, %v2411
  %v2698 = vmul.f32 %v1379, %v2412
  %v2699 = vmul.f32 %v1380, %v2413
  %v2700 = vmul.f32 %v1381, %v2414
  %v2701 = vmul.f32 %v1382, %v2415
  %v2702 = vmul.f32 %v1383, %v2416
  %v2703 = vmul.f32 %v1384, %v2417
  %v2704 = vmul.f32 %v1385, %v2418
  %v2705 = vmul.f32 %v1386, %v2419
  %v2706 = vmul.f32 %v1387, %v2420
  %v2707 = vmul.f32 %v1388, %v2421
  %v2708 = vmul.f32 %v1389, %v2422
  %v2709 = vmul.f32 %v1390, %v2423
  %v2710 = vmul.f32 %v1391, %v2424
  %v2711 = vmul.f32 %v1392, %v2425
  %v2712 = vmul.f32 %v1393, %v2426
  %2713 = vmatprep.subr.mxu0 %v2698
  %2714 = vmatpush1.msra.mxu0 %v2697
  %2715 = vmatprep.subr.mxu0 %v2702
  %2716 = vmatpush1.msra.mxu0 %v2701
  %2717 = vmatprep.subr.mxu0 %v2706
  %2718 = vmatpush1.msra.mxu0 %v2705
  %2719 = vmatprep.subr.mxu0 %v2710
  %2720 = vmatpush1.msra.mxu0 %v2709
  %2721 = vmatprep.subr.mxu0 0.0
  %2722 = vmatpush1.msra.mxu0 0.0
  %2723 = vmatprep.subr.mxu0 0.0
  %2724 = vmatpush1.msra.mxu0 0.0
  %2725 = vmatprep.subr.mxu0 0.0
  %2726 = vmatpush1.msra.mxu0 0.0
  %2727 = vmatprep.subr.mxu0 0.0
  %2728 = vmatpush1.msra.mxu0 0.0
  %2729 = vmatprep.subr.mxu0 0.0
  %2730 = vmatpush1.msra.mxu0 0.0
  %2731 = vmatprep.subr.mxu0 0.0
  %2732 = vmatpush1.msra.mxu0 0.0
  %2733 = vmatprep.subr.mxu0 0.0
  %2734 = vmatpush1.msra.mxu0 0.0
  %2735 = vmatprep.subr.mxu0 0.0
  %2736 = vmatpush1.msra.mxu0 0.0
  %2737 = vmatprep.subr.mxu0 0.0
  %2738 = vmatpush1.msra.mxu0 0.0
  %2739 = vmatprep.subr.mxu0 0.0
  %2740 = vmatpush1.msra.mxu0 0.0
  %2741 = vmatprep.subr.mxu0 0.0
  %2742 = vmatpush1.msra.mxu0 0.0
  %2743 = vmatprep.subr.mxu0 0.0
  %2744 = vmatpush1.msra.mxu0 0.0
  %2745 = vmatprep.subr.mxu0 0.0
  %2746 = vmatpush1.msra.mxu0 0.0
  %2747 = vmatprep.subr.mxu0 0.0
  %2748 = vmatpush1.msra.mxu0 0.0
  %2749 = vmatprep.subr.mxu0 0.0
  %2750 = vmatpush1.msra.mxu0 0.0
  %2751 = vmatprep.subr.mxu0 0.0
  %2752 = vmatpush1.msra.mxu0 0.0
  %2753 = vmatprep.subr.mxu0 0.0
  %2754 = vmatpush1.msra.mxu0 0.0
  %2755 = vmatprep.subr.mxu0 0.0
  %2756 = vmatpush1.msra.mxu0 0.0
  %2757 = vmatprep.subr.mxu0 0.0
  %2758 = vmatpush1.msra.mxu0 0.0
  %2759 = vmatprep.subr.mxu0 0.0
  %2760 = vmatpush1.msra.mxu0 0.0
  %2761 = vmatprep.subr.mxu0 0.0
  %2762 = vmatpush1.msra.mxu0 0.0
  %2763 = vmatprep.subr.mxu0 0.0
  %2764 = vmatpush1.msra.mxu0 0.0
  %2765 = vmatprep.subr.mxu0 0.0
  %2766 = vmatpush1.msra.mxu0 0.0
  %2767 = vmatprep.subr.mxu0 0.0
  %2768 = vmatpush1.msra.mxu0 0.0
  %2769 = vmatprep.subr.mxu0 0.0
  %2770 = vmatpush1.msra.mxu0 0.0
  %2771 = vmatprep.subr.mxu0 0.0
  %2772 = vmatpush1.msra.mxu0 0.0
  %2773 = vmatprep.subr.mxu0 0.0
  %2774 = vmatpush1.msra.mxu0 0.0
  %2775 = vmatprep.subr.mxu0 0.0
  %2776 = vmatpush1.msra.mxu0 0.0
  %2777 = vmatprep.mubr.f32.mxu0 0.0
  %2778 = vmatmul.mubr.f32.gmra.mrb[0].mxu0 %v1976
  %v2779 = vpop.f32.mrb[0].mxu0
  %v2780 = vadd.f32 0.0, %v2779
  %v2781 = vpop.f32.mrb[0].mxu0
  %v2782 = vadd.f32 0.0, %v2781
  %2783 = vdwg.mxu0
  %2784 = vmatprep.subr.mxu0 %v2700
  %2785 = vmatpush1.msra.mxu0 %v2699
  %2786 = vmatprep.subr.mxu0 %v2704
  %2787 = vmatpush1.msra.mxu0 %v2703
  %2788 = vmatprep.subr.mxu0 %v2708
  %2789 = vmatpush1.msra.mxu0 %v2707
  %2790 = vmatprep.subr.mxu0 %v2712
  %2791 = vmatpush1.msra.mxu0 %v2711
  %2792 = vmatprep.subr.mxu0 0.0
  %2793 = vmatpush1.msra.mxu0 0.0
  %2794 = vmatprep.subr.mxu0 0.0
  %2795 = vmatpush1.msra.mxu0 0.0
  %2796 = vmatprep.subr.mxu0 0.0
  %2797 = vmatpush1.msra.mxu0 0.0
  %2798 = vmatprep.subr.mxu0 0.0
  %2799 = vmatpush1.msra.mxu0 0.0
  %2800 = vmatprep.subr.mxu0 0.0
  %2801 = vmatpush1.msra.mxu0 0.0
  %2802 = vmatprep.subr.mxu0 0.0
  %2803 = vmatpush1.msra.mxu0 0.0
  %2804 = vmatprep.subr.mxu0 0.0
  %2805 = vmatpush1.msra.mxu0 0.0
  %2806 = vmatprep.subr.mxu0 0.0
  %2807 = vmatpush1.msra.mxu0 0.0
  %2808 = vmatprep.subr.mxu0 0.0
  %2809 = vmatpush1.msra.mxu0 0.0
  %2810 = vmatprep.subr.mxu0 0.0
  %2811 = vmatpush1.msra.mxu0 0.0
  %2812 = vmatprep.subr.mxu0 0.0
  %2813 = vmatpush1.msra.mxu0 0.0
  %2814 = vmatprep.subr.mxu0 0.0
  %2815 = vmatpush1.msra.mxu0 0.0
  %2816 = vmatprep.subr.mxu0 0.0
  %2817 = vmatpush1.msra.mxu0 0.0
  %2818 = vmatprep.subr.mxu0 0.0
  %2819 = vmatpush1.msra.mxu0 0.0
  %2820 = vmatprep.subr.mxu0 0.0
  %2821 = vmatpush1.msra.mxu0 0.0
  %2822 = vmatprep.subr.mxu0 0.0
  %2823 = vmatpush1.msra.mxu0 0.0
  %2824 = vmatprep.subr.mxu0 0.0
  %2825 = vmatpush1.msra.mxu0 0.0
  %2826 = vmatprep.subr.mxu0 0.0
  %2827 = vmatpush1.msra.mxu0 0.0
  %2828 = vmatprep.subr.mxu0 0.0
  %2829 = vmatpush1.msra.mxu0 0.0
  %2830 = vmatprep.subr.mxu0 0.0
  %2831 = vmatpush1.msra.mxu0 0.0
  %2832 = vmatprep.subr.mxu0 0.0
  %2833 = vmatpush1.msra.mxu0 0.0
  %2834 = vmatprep.subr.mxu0 0.0
  %2835 = vmatpush1.msra.mxu0 0.0
  %2836 = vmatprep.subr.mxu0 0.0
  %2837 = vmatpush1.msra.mxu0 0.0
  %2838 = vmatprep.subr.mxu0 0.0
  %2839 = vmatpush1.msra.mxu0 0.0
  %2840 = vmatprep.subr.mxu0 0.0
  %2841 = vmatpush1.msra.mxu0 0.0
  %2842 = vmatprep.subr.mxu0 0.0
  %2843 = vmatpush1.msra.mxu0 0.0
  %2844 = vmatprep.subr.mxu0 0.0
  %2845 = vmatpush1.msra.mxu0 0.0
  %2846 = vmatprep.subr.mxu0 0.0
  %2847 = vmatpush1.msra.mxu0 0.0
  %2848 = vmatprep.mubr.f32.mxu0 0.0
  %2849 = vmatmul.mubr.f32.gmra.mrb[0].mxu0 %v1976
  %v2850 = vpop.f32.mrb[0].mxu0
  %v2851 = vadd.f32 0.0, %v2850
  %v2852 = vpop.f32.mrb[0].mxu0
  %v2853 = vadd.f32 0.0, %v2852
  %2854 = vdwg.mxu0
  %v2855 = vmul.f32 %v2780, 6.0
  %v2856 = vmul.f32 %v2782, 6.0
  %v2857 = vmul.f32 %v2851, 6.0
  %v2858 = vmul.f32 %v2853, 6.0
  %v2859 = vmul.f32 %v1394, %v2411
  %v2860 = vmul.f32 %v1395, %v2412
  %v2861 = vmul.f32 %v1396, %v2413
  %v2862 = vmul.f32 %v1397, %v2414
  %v2863 = vmul.f32 %v1398, %v2415
  %v2864 = vmul.f32 %v1399, %v2416
  %v2865 = vmul.f32 %v1400, %v2417
  %v2866 = vmul.f32 %v1401, %v2418
  %v2867 = vmul.f32 %v1402, %v2419
  %v2868 = vmul.f32 %v1403, %v2420
  %v2869 = vmul.f32 %v1404, %v2421
  %v2870 = vmul.f32 %v1405, %v2422
  %v2871 = vmul.f32 %v1406, %v2423
  %v2872 = vmul.f32 %v1407, %v2424
  %v2873 = vmul.f32 %v1408, %v2425
  %v2874 = vmul.f32 %v1409, %v2426
  %2875 = vmatprep.subr.mxu0 %v2860
  %2876 = vmatpush1.msra.mxu0 %v2859
  %2877 = vmatprep.subr.mxu0 %v2864
  %2878 = vmatpush1.msra.mxu0 %v2863
  %2879 = vmatprep.subr.mxu0 %v2868
  %2880 = vmatpush1.msra.mxu0 %v2867
  %2881 = vmatprep.subr.mxu0 %v2872
  %2882 = vmatpush1.msra.mxu0 %v2871
  %2883 = vmatprep.subr.mxu0 0.0
  %2884 = vmatpush1.msra.mxu0 0.0
  %2885 = vmatprep.subr.mxu0 0.0
  %2886 = vmatpush1.msra.mxu0 0.0
  %2887 = vmatprep.subr.mxu0 0.0
  %2888 = vmatpush1.msra.mxu0 0.0
  %2889 = vmatprep.subr.mxu0 0.0
  %2890 = vmatpush1.msra.mxu0 0.0
  %2891 = vmatprep.subr.mxu0 0.0
  %2892 = vmatpush1.msra.mxu0 0.0
  %2893 = vmatprep.subr.mxu0 0.0
  %2894 = vmatpush1.msra.mxu0 0.0
  %2895 = vmatprep.subr.mxu0 0.0
  %2896 = vmatpush1.msra.mxu0 0.0
  %2897 = vmatprep.subr.mxu0 0.0
  %2898 = vmatpush1.msra.mxu0 0.0
  %2899 = vmatprep.subr.mxu0 0.0
  %2900 = vmatpush1.msra.mxu0 0.0
  %2901 = vmatprep.subr.mxu0 0.0
  %2902 = vmatpush1.msra.mxu0 0.0
  %2903 = vmatprep.subr.mxu0 0.0
  %2904 = vmatpush1.msra.mxu0 0.0
  %2905 = vmatprep.subr.mxu0 0.0
  %2906 = vmatpush1.msra.mxu0 0.0
  %2907 = vmatprep.subr.mxu0 0.0
  %2908 = vmatpush1.msra.mxu0 0.0
  %2909 = vmatprep.subr.mxu0 0.0
  %2910 = vmatpush1.msra.mxu0 0.0
  %2911 = vmatprep.subr.mxu0 0.0
  %2912 = vmatpush1.msra.mxu0 0.0
  %2913 = vmatprep.subr.mxu0 0.0
  %2914 = vmatpush1.msra.mxu0 0.0
  %2915 = vmatprep.subr.mxu0 0.0
  %2916 = vmatpush1.msra.mxu0 0.0
  %2917 = vmatprep.subr.mxu0 0.0
  %2918 = vmatpush1.msra.mxu0 0.0
  %2919 = vmatprep.subr.mxu0 0.0
  %2920 = vmatpush1.msra.mxu0 0.0
  %2921 = vmatprep.subr.mxu0 0.0
  %2922 = vmatpush1.msra.mxu0 0.0
  %2923 = vmatprep.subr.mxu0 0.0
  %2924 = vmatpush1.msra.mxu0 0.0
  %2925 = vmatprep.subr.mxu0 0.0
  %2926 = vmatpush1.msra.mxu0 0.0
  %2927 = vmatprep.subr.mxu0 0.0
  %2928 = vmatpush1.msra.mxu0 0.0
  %2929 = vmatprep.subr.mxu0 0.0
  %2930 = vmatpush1.msra.mxu0 0.0
  %2931 = vmatprep.subr.mxu0 0.0
  %2932 = vmatpush1.msra.mxu0 0.0
  %2933 = vmatprep.subr.mxu0 0.0
  %2934 = vmatpush1.msra.mxu0 0.0
  %2935 = vmatprep.subr.mxu0 0.0
  %2936 = vmatpush1.msra.mxu0 0.0
  %2937 = vmatprep.subr.mxu0 0.0
  %2938 = vmatpush1.msra.mxu0 0.0
  %2939 = vmatprep.mubr.f32.mxu0 0.0
  %2940 = vmatmul.mubr.f32.gmra.mrb[0].mxu0 %v1976
  %v2941 = vpop.f32.mrb[0].mxu0
  %v2942 = vadd.f32 0.0, %v2941
  %v2943 = vpop.f32.mrb[0].mxu0
  %v2944 = vadd.f32 0.0, %v2943
  %2945 = vdwg.mxu0
  %2946 = vmatprep.subr.mxu0 %v2862
  %2947 = vmatpush1.msra.mxu0 %v2861
  %2948 = vmatprep.subr.mxu0 %v2866
  %2949 = vmatpush1.msra.mxu0 %v2865
  %2950 = vmatprep.subr.mxu0 %v2870
  %2951 = vmatpush1.msra.mxu0 %v2869
  %2952 = vmatprep.subr.mxu0 %v2874
  %2953 = vmatpush1.msra.mxu0 %v2873
  %2954 = vmatprep.subr.mxu0 0.0
  %2955 = vmatpush1.msra.mxu0 0.0
  %2956 = vmatprep.subr.mxu0 0.0
  %2957 = vmatpush1.msra.mxu0 0.0
  %2958 = vmatprep.subr.mxu0 0.0
  %2959 = vmatpush1.msra.mxu0 0.0
  %2960 = vmatprep.subr.mxu0 0.0
  %2961 = vmatpush1.msra.mxu0 0.0
  %2962 = vmatprep.subr.mxu0 0.0
  %2963 = vmatpush1.msra.mxu0 0.0
  %2964 = vmatprep.subr.mxu0 0.0
  %2965 = vmatpush1.msra.mxu0 0.0
  %2966 = vmatprep.subr.mxu0 0.0
  %2967 = vmatpush1.msra.mxu0 0.0
  %2968 = vmatprep.subr.mxu0 0.0
  %2969 = vmatpush1.msra.mxu0 0.0
  %2970 = vmatprep.subr.mxu0 0.0
  %2971 = vmatpush1.msra.mxu0 0.0
  %2972 = vmatprep.subr.mxu0 0.0
  %2973 = vmatpush1.msra.mxu0 0.0
  %2974 = vmatprep.subr.mxu0 0.0
  %2975 = vmatpush1.msra.mxu0 0.0
  %2976 = vmatprep.subr.mxu0 0.0
  %2977 = vmatpush1.msra.mxu0 0.0
  %2978 = vmatprep.subr.mxu0 0.0
  %2979 = vmatpush1.msra.mxu0 0.0
  %2980 = vmatprep.subr.mxu0 0.0
  %2981 = vmatpush1.msra.mxu0 0.0
  %2982 = vmatprep.subr.mxu0 0.0
  %2983 = vmatpush1.msra.mxu0 0.0
  %2984 = vmatprep.subr.mxu0 0.0
  %2985 = vmatpush1.msra.mxu0 0.0
  %2986 = vmatprep.subr.mxu0 0.0
  %2987 = vmatpush1.msra.mxu0 0.0
  %2988 = vmatprep.subr.mxu0 0.0
  %2989 = vmatpush1.msra.mxu0 0.0
  %2990 = vmatprep.subr.mxu0 0.0
  %2991 = vmatpush1.msra.mxu0 0.0
  %2992 = vmatprep.subr.mxu0 0.0
  %2993 = vmatpush1.msra.mxu0 0.0
  %2994 = vmatprep.subr.mxu0 0.0
  %2995 = vmatpush1.msra.mxu0 0.0
  %2996 = vmatprep.subr.mxu0 0.0
  %2997 = vmatpush1.msra.mxu0 0.0
  %2998 = vmatprep.subr.mxu0 0.0
  %2999 = vmatpush1.msra.mxu0 0.0
  %3000 = vmatprep.subr.mxu0 0.0
  %3001 = vmatpush1.msra.mxu0 0.0
  %3002 = vmatprep.subr.mxu0 0.0
  %3003 = vmatpush1.msra.mxu0 0.0
  %3004 = vmatprep.subr.mxu0 0.0
  %3005 = vmatpush1.msra.mxu0 0.0
  %3006 = vmatprep.subr.mxu0 0.0
  %3007 = vmatpush1.msra.mxu0 0.0
  %3008 = vmatprep.subr.mxu0 0.0
  %3009 = vmatpush1.msra.mxu0 0.0
  %3010 = vmatprep.mubr.f32.mxu0 0.0
  %3011 = vmatmul.mubr.f32.gmra.mrb[0].mxu0 %v1976
  %v3012 = vpop.f32.mrb[0].mxu0
  %v3013 = vadd.f32 0.0, %v3012
  %v3014 = vpop.f32.mrb[0].mxu0
  %v3015 = vadd.f32 0.0, %v3014
  %3016 = vdwg.mxu0
  %v3017 = vmul.f32 %v2942, 6.0
  %v3018 = vmul.f32 %v2944, 6.0
  %v3019 = vmul.f32 %v3013, 6.0
  %v3020 = vmul.f32 %v3015, 6.0
  %v3021 = vmul.f32 %v630, %v2411
  %v3022 = vmul.f32 %v632, %v2412
  %v3023 = vmul.f32 %v767, %v2413
  %v3024 = vmul.f32 %v769, %v2414
  %v3025 = vmul.f32 %v636, %v2415
  %v3026 = vmul.f32 %v638, %v2416
  %v3027 = vmul.f32 %v773, %v2417
  %v3028 = vmul.f32 %v775, %v2418
  %v3029 = vmul.f32 %v642, %v2419
  %v3030 = vmul.f32 %v644, %v2420
  %v3031 = vmul.f32 %v779, %v2421
  %v3032 = vmul.f32 %v781, %v2422
  %v3033 = vmul.f32 %v648, %v2423
  %v3034 = vmul.f32 %v650, %v2424
  %v3035 = vmul.f32 %v785, %v2425
  %v3036 = vmul.f32 %v787, %v2426
  %3037 = vmatprep.subr.mxu0 %v3022
  %3038 = vmatpush1.msra.mxu0 %v3021
  %3039 = vmatprep.subr.mxu0 %v3026
  %3040 = vmatpush1.msra.mxu0 %v3025
  %3041 = vmatprep.subr.mxu0 %v3030
  %3042 = vmatpush1.msra.mxu0 %v3029
  %3043 = vmatprep.subr.mxu0 %v3034
  %3044 = vmatpush1.msra.mxu0 %v3033
  %3045 = vmatprep.subr.mxu0 0.0
  %3046 = vmatpush1.msra.mxu0 0.0
  %3047 = vmatprep.subr.mxu0 0.0
  %3048 = vmatpush1.msra.mxu0 0.0
  %3049 = vmatprep.subr.mxu0 0.0
  %3050 = vmatpush1.msra.mxu0 0.0
  %3051 = vmatprep.subr.mxu0 0.0
  %3052 = vmatpush1.msra.mxu0 0.0
  %3053 = vmatprep.subr.mxu0 0.0
  %3054 = vmatpush1.msra.mxu0 0.0
  %3055 = vmatprep.subr.mxu0 0.0
  %3056 = vmatpush1.msra.mxu0 0.0
  %3057 = vmatprep.subr.mxu0 0.0
  %3058 = vmatpush1.msra.mxu0 0.0
  %3059 = vmatprep.subr.mxu0 0.0
  %3060 = vmatpush1.msra.mxu0 0.0
  %3061 = vmatprep.subr.mxu0 0.0
  %3062 = vmatpush1.msra.mxu0 0.0
  %3063 = vmatprep.subr.mxu0 0.0
  %3064 = vmatpush1.msra.mxu0 0.0
  %3065 = vmatprep.subr.mxu0 0.0
  %3066 = vmatpush1.msra.mxu0 0.0
  %3067 = vmatprep.subr.mxu0 0.0
  %3068 = vmatpush1.msra.mxu0 0.0
  %3069 = vmatprep.subr.mxu0 0.0
  %3070 = vmatpush1.msra.mxu0 0.0
  %3071 = vmatprep.subr.mxu0 0.0
  %3072 = vmatpush1.msra.mxu0 0.0
  %3073 = vmatprep.subr.mxu0 0.0
  %3074 = vmatpush1.msra.mxu0 0.0
  %3075 = vmatprep.subr.mxu0 0.0
  %3076 = vmatpush1.msra.mxu0 0.0
  %3077 = vmatprep.subr.mxu0 0.0
  %3078 = vmatpush1.msra.mxu0 0.0
  %3079 = vmatprep.subr.mxu0 0.0
  %3080 = vmatpush1.msra.mxu0 0.0
  %3081 = vmatprep.subr.mxu0 0.0
  %3082 = vmatpush1.msra.mxu0 0.0
  %3083 = vmatprep.subr.mxu0 0.0
  %3084 = vmatpush1.msra.mxu0 0.0
  %3085 = vmatprep.subr.mxu0 0.0
  %3086 = vmatpush1.msra.mxu0 0.0
  %3087 = vmatprep.subr.mxu0 0.0
  %3088 = vmatpush1.msra.mxu0 0.0
  %3089 = vmatprep.subr.mxu0 0.0
  %3090 = vmatpush1.msra.mxu0 0.0
  %3091 = vmatprep.subr.mxu0 0.0
  %3092 = vmatpush1.msra.mxu0 0.0
  %3093 = vmatprep.subr.mxu0 0.0
  %3094 = vmatpush1.msra.mxu0 0.0
  %3095 = vmatprep.subr.mxu0 0.0
  %3096 = vmatpush1.msra.mxu0 0.0
  %3097 = vmatprep.subr.mxu0 0.0
  %3098 = vmatpush1.msra.mxu0 0.0
  %3099 = vmatprep.subr.mxu0 0.0
  %3100 = vmatpush1.msra.mxu0 0.0
  %3101 = vmatprep.mubr.f32.mxu0 0.0
  %3102 = vmatmul.mubr.f32.gmra.mrb[0].mxu0 %v1976
  %v3103 = vpop.f32.mrb[0].mxu0
  %v3104 = vadd.f32 0.0, %v3103
  %v3105 = vpop.f32.mrb[0].mxu0
  %v3106 = vadd.f32 0.0, %v3105
  %3107 = vdwg.mxu0
  %3108 = vmatprep.subr.mxu0 %v3024
  %3109 = vmatpush1.msra.mxu0 %v3023
  %3110 = vmatprep.subr.mxu0 %v3028
  %3111 = vmatpush1.msra.mxu0 %v3027
  %3112 = vmatprep.subr.mxu0 %v3032
  %3113 = vmatpush1.msra.mxu0 %v3031
  %3114 = vmatprep.subr.mxu0 %v3036
  %3115 = vmatpush1.msra.mxu0 %v3035
  %3116 = vmatprep.subr.mxu0 0.0
  %3117 = vmatpush1.msra.mxu0 0.0
  %3118 = vmatprep.subr.mxu0 0.0
  %3119 = vmatpush1.msra.mxu0 0.0
  %3120 = vmatprep.subr.mxu0 0.0
  %3121 = vmatpush1.msra.mxu0 0.0
  %3122 = vmatprep.subr.mxu0 0.0
  %3123 = vmatpush1.msra.mxu0 0.0
  %3124 = vmatprep.subr.mxu0 0.0
  %3125 = vmatpush1.msra.mxu0 0.0
  %3126 = vmatprep.subr.mxu0 0.0
  %3127 = vmatpush1.msra.mxu0 0.0
  %3128 = vmatprep.subr.mxu0 0.0
  %3129 = vmatpush1.msra.mxu0 0.0
  %3130 = vmatprep.subr.mxu0 0.0
  %3131 = vmatpush1.msra.mxu0 0.0
  %3132 = vmatprep.subr.mxu0 0.0
  %3133 = vmatpush1.msra.mxu0 0.0
  %3134 = vmatprep.subr.mxu0 0.0
  %3135 = vmatpush1.msra.mxu0 0.0
  %3136 = vmatprep.subr.mxu0 0.0
  %3137 = vmatpush1.msra.mxu0 0.0
  %3138 = vmatprep.subr.mxu0 0.0
  %3139 = vmatpush1.msra.mxu0 0.0
  %3140 = vmatprep.subr.mxu0 0.0
  %3141 = vmatpush1.msra.mxu0 0.0
  %3142 = vmatprep.subr.mxu0 0.0
  %3143 = vmatpush1.msra.mxu0 0.0
  %3144 = vmatprep.subr.mxu0 0.0
  %3145 = vmatpush1.msra.mxu0 0.0
  %3146 = vmatprep.subr.mxu0 0.0
  %3147 = vmatpush1.msra.mxu0 0.0
  %3148 = vmatprep.subr.mxu0 0.0
  %3149 = vmatpush1.msra.mxu0 0.0
  %3150 = vmatprep.subr.mxu0 0.0
  %3151 = vmatpush1.msra.mxu0 0.0
  %3152 = vmatprep.subr.mxu0 0.0
  %3153 = vmatpush1.msra.mxu0 0.0
  %3154 = vmatprep.subr.mxu0 0.0
  %3155 = vmatpush1.msra.mxu0 0.0
  %3156 = vmatprep.subr.mxu0 0.0
  %3157 = vmatpush1.msra.mxu0 0.0
  %3158 = vmatprep.subr.mxu0 0.0
  %3159 = vmatpush1.msra.mxu0 0.0
  %3160 = vmatprep.subr.mxu0 0.0
  %3161 = vmatpush1.msra.mxu0 0.0
  %3162 = vmatprep.subr.mxu0 0.0
  %3163 = vmatpush1.msra.mxu0 0.0
  %3164 = vmatprep.subr.mxu0 0.0
  %3165 = vmatpush1.msra.mxu0 0.0
  %3166 = vmatprep.subr.mxu0 0.0
  %3167 = vmatpush1.msra.mxu0 0.0
  %3168 = vmatprep.subr.mxu0 0.0
  %3169 = vmatpush1.msra.mxu0 0.0
  %3170 = vmatprep.subr.mxu0 0.0
  %3171 = vmatpush1.msra.mxu0 0.0
  %3172 = vmatprep.mubr.f32.mxu0 0.0
  %3173 = vmatmul.mubr.f32.gmra.mrb[0].mxu0 %v1976
  %v3174 = vpop.f32.mrb[0].mxu0
  %v3175 = vadd.f32 0.0, %v3174
  %v3176 = vpop.f32.mrb[0].mxu0
  %v3177 = vadd.f32 0.0, %v3176
  %3178 = vdwg.mxu0
  %v3179 = vmul.f32 %v630, %v2507
  %v3180 = vmul.f32 %v632, %v2508
  %v3181 = vmul.f32 %v767, %v2509
  %v3182 = vmul.f32 %v769, %v2510
  %v3183 = vmul.f32 %v636, %v2511
  %v3184 = vmul.f32 %v638, %v2512
  %v3185 = vmul.f32 %v773, %v2513
  %v3186 = vmul.f32 %v775, %v2514
  %v3187 = vmul.f32 %v642, %v2515
  %v3188 = vmul.f32 %v644, %v2516
  %v3189 = vmul.f32 %v779, %v2517
  %v3190 = vmul.f32 %v781, %v2518
  %v3191 = vmul.f32 %v648, %v2519
  %v3192 = vmul.f32 %v650, %v2520
  %v3193 = vmul.f32 %v785, %v2521
  %v3194 = vmul.f32 %v787, %v2522
  %3195 = vmatprep.subr.mxu0 %v3180
  %3196 = vmatpush1.msra.mxu0 %v3179
  %3197 = vmatprep.subr.mxu0 %v3184
  %3198 = vmatpush1.msra.mxu0 %v3183
  %3199 = vmatprep.subr.mxu0 %v3188
  %3200 = vmatpush1.msra.mxu0 %v3187
  %3201 = vmatprep.subr.mxu0 %v3192
  %3202 = vmatpush1.msra.mxu0 %v3191
  %3203 = vmatprep.subr.mxu0 0.0
  %3204 = vmatpush1.msra.mxu0 0.0
  %3205 = vmatprep.subr.mxu0 0.0
  %3206 = vmatpush1.msra.mxu0 0.0
  %3207 = vmatprep.subr.mxu0 0.0
  %3208 = vmatpush1.msra.mxu0 0.0
  %3209 = vmatprep.subr.mxu0 0.0
  %3210 = vmatpush1.msra.mxu0 0.0
  %3211 = vmatprep.subr.mxu0 0.0
  %3212 = vmatpush1.msra.mxu0 0.0
  %3213 = vmatprep.subr.mxu0 0.0
  %3214 = vmatpush1.msra.mxu0 0.0
  %3215 = vmatprep.subr.mxu0 0.0
  %3216 = vmatpush1.msra.mxu0 0.0
  %3217 = vmatprep.subr.mxu0 0.0
  %3218 = vmatpush1.msra.mxu0 0.0
  %3219 = vmatprep.subr.mxu0 0.0
  %3220 = vmatpush1.msra.mxu0 0.0
  %3221 = vmatprep.subr.mxu0 0.0
  %3222 = vmatpush1.msra.mxu0 0.0
  %3223 = vmatprep.subr.mxu0 0.0
  %3224 = vmatpush1.msra.mxu0 0.0
  %3225 = vmatprep.subr.mxu0 0.0
  %3226 = vmatpush1.msra.mxu0 0.0
  %3227 = vmatprep.subr.mxu0 0.0
  %3228 = vmatpush1.msra.mxu0 0.0
  %3229 = vmatprep.subr.mxu0 0.0
  %3230 = vmatpush1.msra.mxu0 0.0
  %3231 = vmatprep.subr.mxu0 0.0
  %3232 = vmatpush1.msra.mxu0 0.0
  %3233 = vmatprep.subr.mxu0 0.0
  %3234 = vmatpush1.msra.mxu0 0.0
  %3235 = vmatprep.subr.mxu0 0.0
  %3236 = vmatpush1.msra.mxu0 0.0
  %3237 = vmatprep.subr.mxu0 0.0
  %3238 = vmatpush1.msra.mxu0 0.0
  %3239 = vmatprep.subr.mxu0 0.0
  %3240 = vmatpush1.msra.mxu0 0.0
  %3241 = vmatprep.subr.mxu0 0.0
  %3242 = vmatpush1.msra.mxu0 0.0
  %3243 = vmatprep.subr.mxu0 0.0
  %3244 = vmatpush1.msra.mxu0 0.0
  %3245 = vmatprep.subr.mxu0 0.0
  %3246 = vmatpush1.msra.mxu0 0.0
  %3247 = vmatprep.subr.mxu0 0.0
  %3248 = vmatpush1.msra.mxu0 0.0
  %3249 = vmatprep.subr.mxu0 0.0
  %3250 = vmatpush1.msra.mxu0 0.0
  %3251 = vmatprep.subr.mxu0 0.0
  %3252 = vmatpush1.msra.mxu0 0.0
  %3253 = vmatprep.subr.mxu0 0.0
  %3254 = vmatpush1.msra.mxu0 0.0
  %3255 = vmatprep.subr.mxu0 0.0
  %3256 = vmatpush1.msra.mxu0 0.0
  %3257 = vmatprep.subr.mxu0 0.0
  %3258 = vmatpush1.msra.mxu0 0.0
  %3259 = vmatprep.mubr.f32.mxu0 0.0
  %3260 = vmatmul.mubr.f32.gmra.mrb[0].mxu0 %v1976
  %v3261 = vpop.f32.mrb[0].mxu0
  %v3262 = vadd.f32 0.0, %v3261
  %v3263 = vpop.f32.mrb[0].mxu0
  %v3264 = vadd.f32 0.0, %v3263
  %3265 = vdwg.mxu0
  %3266 = vmatprep.subr.mxu0 %v3182
  %3267 = vmatpush1.msra.mxu0 %v3181
  %3268 = vmatprep.subr.mxu0 %v3186
  %3269 = vmatpush1.msra.mxu0 %v3185
  %3270 = vmatprep.subr.mxu0 %v3190
  %3271 = vmatpush1.msra.mxu0 %v3189
  %3272 = vmatprep.subr.mxu0 %v3194
  %3273 = vmatpush1.msra.mxu0 %v3193
  %3274 = vmatprep.subr.mxu0 0.0
  %3275 = vmatpush1.msra.mxu0 0.0
  %3276 = vmatprep.subr.mxu0 0.0
  %3277 = vmatpush1.msra.mxu0 0.0
  %3278 = vmatprep.subr.mxu0 0.0
  %3279 = vmatpush1.msra.mxu0 0.0
  %3280 = vmatprep.subr.mxu0 0.0
  %3281 = vmatpush1.msra.mxu0 0.0
  %3282 = vmatprep.subr.mxu0 0.0
  %3283 = vmatpush1.msra.mxu0 0.0
  %3284 = vmatprep.subr.mxu0 0.0
  %3285 = vmatpush1.msra.mxu0 0.0
  %3286 = vmatprep.subr.mxu0 0.0
  %3287 = vmatpush1.msra.mxu0 0.0
  %3288 = vmatprep.subr.mxu0 0.0
  %3289 = vmatpush1.msra.mxu0 0.0
  %3290 = vmatprep.subr.mxu0 0.0
  %3291 = vmatpush1.msra.mxu0 0.0
  %3292 = vmatprep.subr.mxu0 0.0
  %3293 = vmatpush1.msra.mxu0 0.0
  %3294 = vmatprep.subr.mxu0 0.0
  %3295 = vmatpush1.msra.mxu0 0.0
  %3296 = vmatprep.subr.mxu0 0.0
  %3297 = vmatpush1.msra.mxu0 0.0
  %3298 = vmatprep.subr.mxu0 0.0
  %3299 = vmatpush1.msra.mxu0 0.0
  %3300 = vmatprep.subr.mxu0 0.0
  %3301 = vmatpush1.msra.mxu0 0.0
  %3302 = vmatprep.subr.mxu0 0.0
  %3303 = vmatpush1.msra.mxu0 0.0
  %3304 = vmatprep.subr.mxu0 0.0
  %3305 = vmatpush1.msra.mxu0 0.0
  %3306 = vmatprep.subr.mxu0 0.0
  %3307 = vmatpush1.msra.mxu0 0.0
  %3308 = vmatprep.subr.mxu0 0.0
  %3309 = vmatpush1.msra.mxu0 0.0
  %3310 = vmatprep.subr.mxu0 0.0
  %3311 = vmatpush1.msra.mxu0 0.0
  %3312 = vmatprep.subr.mxu0 0.0
  %3313 = vmatpush1.msra.mxu0 0.0
  %3314 = vmatprep.subr.mxu0 0.0
  %3315 = vmatpush1.msra.mxu0 0.0
  %3316 = vmatprep.subr.mxu0 0.0
  %3317 = vmatpush1.msra.mxu0 0.0
  %3318 = vmatprep.subr.mxu0 0.0
  %3319 = vmatpush1.msra.mxu0 0.0
  %3320 = vmatprep.subr.mxu0 0.0
  %3321 = vmatpush1.msra.mxu0 0.0
  %3322 = vmatprep.subr.mxu0 0.0
  %3323 = vmatpush1.msra.mxu0 0.0
  %3324 = vmatprep.subr.mxu0 0.0
  %3325 = vmatpush1.msra.mxu0 0.0
  %3326 = vmatprep.subr.mxu0 0.0
  %3327 = vmatpush1.msra.mxu0 0.0
  %3328 = vmatprep.subr.mxu0 0.0
  %3329 = vmatpush1.msra.mxu0 0.0
  %3330 = vmatprep.mubr.f32.mxu0 0.0
  %3331 = vmatmul.mubr.f32.gmra.mrb[0].mxu0 %v1976
  %v3332 = vpop.f32.mrb[0].mxu0
  %v3333 = vadd.f32 0.0, %v3332
  %v3334 = vpop.f32.mrb[0].mxu0
  %v3335 = vadd.f32 0.0, %v3334
  %3336 = vdwg.mxu0
  %v3337 = vand.u32 2147483647, %v3104
  %v3338 = vand.u32 2147483647, %v3106
  %v3339 = vand.u32 2147483647, %v3175
  %v3340 = vand.u32 2147483647, %v3177
  %v3341 = vsub.f32 0.0, %v3337
  %v3342 = vsub.f32 0.0, %v3338
  %v3343 = vsub.f32 0.0, %v3339
  %v3344 = vsub.f32 0.0, %v3340
  %v3345 = vmul.f32 %v3341, 1.442695
  %v3346 = vpow.pop %v3345
  %v3347 = vmul.f32 %v3342, 1.442695
  %v3348 = vpow.pop %v3347
  %v3349 = vmul.f32 %v3343, 1.442695
  %v3350 = vpow.pop %v3349
  %v3351 = vmul.f32 %v3344, 1.442695
  %v3352 = vpow.pop %v3351
  %v3353 = vadd.f32 %v3346, 1.0
  %v3354 = vadd.f32 %v3348, 1.0
  %v3355 = vadd.f32 %v3350, 1.0
  %v3356 = vadd.f32 %v3352, 1.0
  %v3357 = vlog2.pop %v3353
  %v3358 = vmul.f32 %v3357, 0.6931472
  %v3359 = vlog2.pop %v3354
  %v3360 = vmul.f32 %v3359, 0.6931472
  %v3361 = vlog2.pop %v3355
  %v3362 = vmul.f32 %v3361, 0.6931472
  %v3363 = vlog2.pop %v3356
  %v3364 = vmul.f32 %v3363, 0.6931472
  %v3365 = vmax.f32 %v3104, 0.0
  %v3366 = vmax.f32 %v3106, 0.0
  %v3367 = vmax.f32 %v3175, 0.0
  %v3368 = vmax.f32 %v3177, 0.0
  %v3369 = vadd.f32 %v3358, %v3365
  %v3370 = vadd.f32 %v3360, %v3366
  %v3371 = vadd.f32 %v3362, %v3367
  %v3372 = vadd.f32 %v3364, %v3368
  %v3373 = vadd.f32 %v3369, 0.001
  %v3374 = vadd.f32 %v3370, 0.001
  %v3375 = vadd.f32 %v3371, 0.001
  %v3376 = vadd.f32 %v3372, 0.001
  %v3377 = vand.u32 2147483647, %v3262
  %v3378 = vand.u32 2147483647, %v3264
  %v3379 = vand.u32 2147483647, %v3333
  %v3380 = vand.u32 2147483647, %v3335
  %v3381 = vsub.f32 0.0, %v3377
  %v3382 = vsub.f32 0.0, %v3378
  %v3383 = vsub.f32 0.0, %v3379
  %v3384 = vsub.f32 0.0, %v3380
  %v3385 = vmul.f32 %v3381, 1.442695
  %v3386 = vpow.pop %v3385
  %v3387 = vmul.f32 %v3382, 1.442695
  %v3388 = vpow.pop %v3387
  %v3389 = vmul.f32 %v3383, 1.442695
  %v3390 = vpow.pop %v3389
  %v3391 = vmul.f32 %v3384, 1.442695
  %v3392 = vpow.pop %v3391
  %v3393 = vadd.f32 %v3386, 1.0
  %v3394 = vadd.f32 %v3388, 1.0
  %v3395 = vadd.f32 %v3390, 1.0
  %v3396 = vadd.f32 %v3392, 1.0
  %v3397 = vlog2.pop %v3393
  %v3398 = vmul.f32 %v3397, 0.6931472
  %v3399 = vlog2.pop %v3394
  %v3400 = vmul.f32 %v3399, 0.6931472
  %v3401 = vlog2.pop %v3395
  %v3402 = vmul.f32 %v3401, 0.6931472
  %v3403 = vlog2.pop %v3396
  %v3404 = vmul.f32 %v3403, 0.6931472
  %v3405 = vmax.f32 %v3262, 0.0
  %v3406 = vmax.f32 %v3264, 0.0
  %v3407 = vmax.f32 %v3333, 0.0
  %v3408 = vmax.f32 %v3335, 0.0
  %v3409 = vadd.f32 %v3398, %v3405
  %v3410 = vadd.f32 %v3400, %v3406
  %v3411 = vadd.f32 %v3402, %v3407
  %v3412 = vadd.f32 %v3404, %v3408
  %v3413 = vadd.f32 %v3409, 0.001
  %v3414 = vadd.f32 %v3410, 0.001
  %v3415 = vadd.f32 %v3411, 0.001
  %v3416 = vadd.f32 %v3412, 0.001
  %v3417 = vrcp.pop %v2855
  %v3418 = vmul.f32 1.0, %v3417
  %v3419 = vrcp.pop %v2856
  %v3420 = vmul.f32 1.0, %v3419
  %v3421 = vrcp.pop %v2857
  %v3422 = vmul.f32 1.0, %v3421
  %v3423 = vrcp.pop %v2858
  %v3424 = vmul.f32 1.0, %v3423
  %v3425 = vmul.f32 %v3017, %v3418
  %v3426 = vmul.f32 %v3018, %v3420
  %v3427 = vmul.f32 %v3019, %v3422
  %v3428 = vmul.f32 %v3020, %v3424
  %v3433 = vcombine.low %v2606, %v2608
  %v3434 = vcombine.low %v2677, %v2679
  %v3437 = vsub.f32 %v31, %v3433
  %v3438 = vsub.f32 %v32, %v3434
  %v3443 = vcombine.low %v3418, %v3420
  %v3444 = vcombine.low %v3422, %v3424
  %v3447 = vmul.f32 %v3437, %v3443
  %v3448 = vmul.f32 %v3438, %v3444
  %v3449 = vsub.f32 1.0, %v3447
  %v3450 = vsub.f32 1.0, %v3448
  %v3451 = vmul.f32 %v3447, %v3449
  %v3452 = vmul.f32 %v3448, %v3450
  %v3455 = vcombine.high %v3447, %v3447
  %v3456 = vcombine.high %v3448, %v3448
  %v3459 = vmul.f32 %v3425, %v3447
  %v3460 = vmul.f32 %v3426, %v3455
  %v3461 = vmul.f32 %v3427, %v3448
  %v3462 = vmul.f32 %v3428, %v3456
  %v3463 = vmul.f32 %v3459, %v3447
  %v3464 = vmul.f32 %v3460, %v3455
  %v3465 = vmul.f32 %v3461, %v3448
  %v3466 = vmul.f32 %v3462, %v3456
  %v3469 = vcombine.high %v3451, %v3451
  %v3470 = vcombine.high %v3452, %v3452
  %v3473 = vmul.f32 %v3373, %v3451
  %v3474 = vmul.f32 %v3374, %v3469
  %v3475 = vmul.f32 %v3375, %v3452
  %v3476 = vmul.f32 %v3376, %v3470
  %v3477 = vadd.f32 %v3463, %v3473
  %v3478 = vadd.f32 %v3464, %v3474
  %v3479 = vadd.f32 %v3465, %v3475
  %v3480 = vadd.f32 %v3466, %v3476
  %v3481 = vmul.f32 %v3017, %v3477
  %v3482 = vmul.f32 %v3018, %v3478
  %v3483 = vmul.f32 %v3019, %v3479
  %v3484 = vmul.f32 %v3020, %v3480
  %v3485 = vadd.f32 %v3373, %v3413
  %v3486 = vadd.f32 %v3374, %v3414
  %v3487 = vadd.f32 %v3375, %v3415
  %v3488 = vadd.f32 %v3376, %v3416
  %v3489 = vmul.f32 %v3425, 2.0
  %v3490 = vmul.f32 %v3426, 2.0
  %v3491 = vmul.f32 %v3427, 2.0
  %v3492 = vmul.f32 %v3428, 2.0
  %v3493 = vsub.f32 %v3485, %v3489
  %v3494 = vsub.f32 %v3486, %v3490
  %v3495 = vsub.f32 %v3487, %v3491
  %v3496 = vsub.f32 %v3488, %v3492
  %v3497 = vmul.f32 %v3493, %v3451
  %v3498 = vmul.f32 %v3494, %v3469
  %v3499 = vmul.f32 %v3495, %v3452
  %v3500 = vmul.f32 %v3496, %v3470
  %v3501 = vadd.f32 %v3425, %v3497
  %v3502 = vadd.f32 %v3426, %v3498
  %v3503 = vadd.f32 %v3427, %v3499
  %v3504 = vadd.f32 %v3428, %v3500
  %v3505 = vrcp.pop %v3501
  %v3506 = vmul.f32 1.0, %v3505
  %v3507 = vrcp.pop %v3502
  %v3508 = vmul.f32 1.0, %v3507
  %v3509 = vrcp.pop %v3503
  %v3510 = vmul.f32 1.0, %v3509
  %v3511 = vrcp.pop %v3504
  %v3512 = vmul.f32 1.0, %v3511
  %v3513 = vmul.f32 %v3481, %v3506
  %v3514 = vmul.f32 %v3482, %v3508
  %v3515 = vmul.f32 %v3483, %v3510
  %v3516 = vmul.f32 %v3484, %v3512
  %3517 = vmatprep.subr.mxu0 %v2682
  %3518 = vmatpush1.msra.mxu0 %v2681
  %3519 = vmatprep.subr.mxu0 %v2686
  %3520 = vmatpush1.msra.mxu0 %v2685
  %3521 = vmatprep.subr.mxu0 %v2690
  %3522 = vmatpush1.msra.mxu0 %v2689
  %3523 = vmatprep.subr.mxu0 %v2694
  %3524 = vmatpush1.msra.mxu0 %v2693
  %3525 = vmatprep.subr.mxu0 0.0
  %3526 = vmatpush1.msra.mxu0 0.0
  %3527 = vmatprep.subr.mxu0 0.0
  %3528 = vmatpush1.msra.mxu0 0.0
  %3529 = vmatprep.subr.mxu0 0.0
  %3530 = vmatpush1.msra.mxu0 0.0
  %3531 = vmatprep.subr.mxu0 0.0
  %3532 = vmatpush1.msra.mxu0 0.0
  %3533 = vmatprep.subr.mxu0 0.0
  %3534 = vmatpush1.msra.mxu0 0.0
  %3535 = vmatprep.subr.mxu0 0.0
  %3536 = vmatpush1.msra.mxu0 0.0
  %3537 = vmatprep.subr.mxu0 0.0
  %3538 = vmatpush1.msra.mxu0 0.0
  %3539 = vmatprep.subr.mxu0 0.0
  %3540 = vmatpush1.msra.mxu0 0.0
  %3541 = vmatprep.subr.mxu0 0.0
  %3542 = vmatpush1.msra.mxu0 0.0
  %3543 = vmatprep.subr.mxu0 0.0
  %3544 = vmatpush1.msra.mxu0 0.0
  %3545 = vmatprep.subr.mxu0 0.0
  %3546 = vmatpush1.msra.mxu0 0.0
  %3547 = vmatprep.subr.mxu0 0.0
  %3548 = vmatpush1.msra.mxu0 0.0
  %3549 = vmatprep.subr.mxu0 0.0
  %3550 = vmatpush1.msra.mxu0 0.0
  %3551 = vmatprep.subr.mxu0 0.0
  %3552 = vmatpush1.msra.mxu0 0.0
  %3553 = vmatprep.subr.mxu0 0.0
  %3554 = vmatpush1.msra.mxu0 0.0
  %3555 = vmatprep.subr.mxu0 0.0
  %3556 = vmatpush1.msra.mxu0 0.0
  %3557 = vmatprep.subr.mxu0 0.0
  %3558 = vmatpush1.msra.mxu0 0.0
  %3559 = vmatprep.subr.mxu0 0.0
  %3560 = vmatpush1.msra.mxu0 0.0
  %3561 = vmatprep.subr.mxu0 0.0
  %3562 = vmatpush1.msra.mxu0 0.0
  %3563 = vmatprep.subr.mxu0 0.0
  %3564 = vmatpush1.msra.mxu0 0.0
  %3565 = vmatprep.subr.mxu0 0.0
  %3566 = vmatpush1.msra.mxu0 0.0
  %3567 = vmatprep.subr.mxu0 0.0
  %3568 = vmatpush1.msra.mxu0 0.0
  %3569 = vmatprep.subr.mxu0 0.0
  %3570 = vmatpush1.msra.mxu0 0.0
  %3571 = vmatprep.subr.mxu0 0.0
  %3572 = vmatpush1.msra.mxu0 0.0
  %3573 = vmatprep.subr.mxu0 0.0
  %3574 = vmatpush1.msra.mxu0 0.0
  %3575 = vmatprep.subr.mxu0 0.0
  %3576 = vmatpush1.msra.mxu0 0.0
  %3577 = vmatprep.subr.mxu0 0.0
  %3578 = vmatpush1.msra.mxu0 0.0
  %3579 = vmatprep.subr.mxu0 0.0
  %3580 = vmatpush1.msra.mxu0 0.0
  %3581 = vmatprep.mubr.f32.mxu0 0.0
  %3582 = vmatmul.mubr.f32.gmra.mrb[0].mxu0 %v1976
  %v3583 = vpop.f32.mrb[0].mxu0
  %v3584 = vadd.f32 %v3513, %v3583
  %v3585 = vpop.f32.mrb[0].mxu0
  %v3586 = vadd.f32 %v3514, %v3585
  %3587 = vdwg.mxu0
  %3588 = vmatprep.subr.mxu0 %v2684
  %3589 = vmatpush1.msra.mxu0 %v2683
  %3590 = vmatprep.subr.mxu0 %v2688
  %3591 = vmatpush1.msra.mxu0 %v2687
  %3592 = vmatprep.subr.mxu0 %v2692
  %3593 = vmatpush1.msra.mxu0 %v2691
  %3594 = vmatprep.subr.mxu0 %v2696
  %3595 = vmatpush1.msra.mxu0 %v2695
  %3596 = vmatprep.subr.mxu0 0.0
  %3597 = vmatpush1.msra.mxu0 0.0
  %3598 = vmatprep.subr.mxu0 0.0
  %3599 = vmatpush1.msra.mxu0 0.0
  %3600 = vmatprep.subr.mxu0 0.0
  %3601 = vmatpush1.msra.mxu0 0.0
  %3602 = vmatprep.subr.mxu0 0.0
  %3603 = vmatpush1.msra.mxu0 0.0
  %3604 = vmatprep.subr.mxu0 0.0
  %3605 = vmatpush1.msra.mxu0 0.0
  %3606 = vmatprep.subr.mxu0 0.0
  %3607 = vmatpush1.msra.mxu0 0.0
  %3608 = vmatprep.subr.mxu0 0.0
  %3609 = vmatpush1.msra.mxu0 0.0
  %3610 = vmatprep.subr.mxu0 0.0
  %3611 = vmatpush1.msra.mxu0 0.0
  %3612 = vmatprep.subr.mxu0 0.0
  %3613 = vmatpush1.msra.mxu0 0.0
  %3614 = vmatprep.subr.mxu0 0.0
  %3615 = vmatpush1.msra.mxu0 0.0
  %3616 = vmatprep.subr.mxu0 0.0
  %3617 = vmatpush1.msra.mxu0 0.0
  %3618 = vmatprep.subr.mxu0 0.0
  %3619 = vmatpush1.msra.mxu0 0.0
  %3620 = vmatprep.subr.mxu0 0.0
  %3621 = vmatpush1.msra.mxu0 0.0
  %3622 = vmatprep.subr.mxu0 0.0
  %3623 = vmatpush1.msra.mxu0 0.0
  %3624 = vmatprep.subr.mxu0 0.0
  %3625 = vmatpush1.msra.mxu0 0.0
  %3626 = vmatprep.subr.mxu0 0.0
  %3627 = vmatpush1.msra.mxu0 0.0
  %3628 = vmatprep.subr.mxu0 0.0
  %3629 = vmatpush1.msra.mxu0 0.0
  %3630 = vmatprep.subr.mxu0 0.0
  %3631 = vmatpush1.msra.mxu0 0.0
  %3632 = vmatprep.subr.mxu0 0.0
  %3633 = vmatpush1.msra.mxu0 0.0
  %3634 = vmatprep.subr.mxu0 0.0
  %3635 = vmatpush1.msra.mxu0 0.0
  %3636 = vmatprep.subr.mxu0 0.0
  %3637 = vmatpush1.msra.mxu0 0.0
  %3638 = vmatprep.subr.mxu0 0.0
  %3639 = vmatpush1.msra.mxu0 0.0
  %3640 = vmatprep.subr.mxu0 0.0
  %3641 = vmatpush1.msra.mxu0 0.0
  %3642 = vmatprep.subr.mxu0 0.0
  %3643 = vmatpush1.msra.mxu0 0.0
  %3644 = vmatprep.subr.mxu0 0.0
  %3645 = vmatpush1.msra.mxu0 0.0
  %3646 = vmatprep.subr.mxu0 0.0
  %3647 = vmatpush1.msra.mxu0 0.0
  %3648 = vmatprep.subr.mxu0 0.0
  %3649 = vmatpush1.msra.mxu0 0.0
  %3650 = vmatprep.subr.mxu0 0.0
  %3651 = vmatpush1.msra.mxu0 0.0
  %3652 = vmatprep.mubr.f32.mxu0 0.0
  %3653 = vmatmul.mubr.f32.gmra.mrb[0].mxu0 %v1976
  %v3654 = vpop.f32.mrb[0].mxu0
  %v3655 = vadd.f32 %v3515, %v3654
  %v3656 = vpop.f32.mrb[0].mxu0
  %v3657 = vadd.f32 %v3516, %v3656
  %3658 = vdwg.mxu0
  %v3659 = vmul.f32 %v3425, %v3425
  %v3660 = vmul.f32 %v3426, %v3426
  %v3661 = vmul.f32 %v3427, %v3427
  %v3662 = vmul.f32 %v3428, %v3428
  %v3663 = vmul.f32 %v3413, %v3447
  %v3664 = vmul.f32 %v3414, %v3455
  %v3665 = vmul.f32 %v3415, %v3448
  %v3666 = vmul.f32 %v3416, %v3456
  %v3667 = vmul.f32 %v3663, %v3447
  %v3668 = vmul.f32 %v3664, %v3455
  %v3669 = vmul.f32 %v3665, %v3448
  %v3670 = vmul.f32 %v3666, %v3456
  %v3671 = vmul.f32 %v3489, %v3451
  %v3672 = vmul.f32 %v3490, %v3469
  %v3673 = vmul.f32 %v3491, %v3452
  %v3674 = vmul.f32 %v3492, %v3470
  %v3675 = vadd.f32 %v3667, %v3671
  %v3676 = vadd.f32 %v3668, %v3672
  %v3677 = vadd.f32 %v3669, %v3673
  %v3678 = vadd.f32 %v3670, %v3674
  %v3681 = vcombine.high %v3449, %v3449
  %v3682 = vcombine.high %v3450, %v3450
  %v3685 = vmul.f32 %v3373, %v3449
  %v3686 = vmul.f32 %v3374, %v3681
  %v3687 = vmul.f32 %v3375, %v3450
  %v3688 = vmul.f32 %v3376, %v3682
  %v3689 = vmul.f32 %v3685, %v3449
  %v3690 = vmul.f32 %v3686, %v3681
  %v3691 = vmul.f32 %v3687, %v3450
  %v3692 = vmul.f32 %v3688, %v3682
  %v3693 = vadd.f32 %v3675, %v3689
  %v3694 = vadd.f32 %v3676, %v3690
  %v3695 = vadd.f32 %v3677, %v3691
  %v3696 = vadd.f32 %v3678, %v3692
  %v3697 = vmul.f32 %v3659, %v3693
  %v3698 = vmul.f32 %v3660, %v3694
  %v3699 = vmul.f32 %v3661, %v3695
  %v3700 = vmul.f32 %v3662, %v3696
  %v3701 = vmul.f32 %v3506, %v3506
  %v3702 = vmul.f32 %v3508, %v3508
  %v3703 = vmul.f32 %v3510, %v3510
  %v3704 = vmul.f32 %v3512, %v3512
  %v3705 = vmul.f32 %v3697, %v3701
  %v3706 = vmul.f32 %v3698, %v3702
  %v3707 = vmul.f32 %v3699, %v3703
  %v3708 = vmul.f32 %v3700, %v3704
  %v3709 = vlog2.pop %v3705
  %v3710 = vmul.f32 %v3709, 0.6931472
  %v3711 = vlog2.pop %v3706
  %v3712 = vmul.f32 %v3711, 0.6931472
  %v3713 = vlog2.pop %v3707
  %v3714 = vmul.f32 %v3713, 0.6931472
  %v3715 = vlog2.pop %v3708
  %v3716 = vmul.f32 %v3715, 0.6931472
  %vm3717 = vcmp.ge.f32.partialorder %v31, -3.0
  %vm3718 = vcmp.ge.f32.partialorder %v32, -3.0
  %vm3719 = vcmp.le.f32.partialorder %v31, 3.0
  %vm3720 = vcmp.le.f32.partialorder %v32, 3.0
  %vm3721 = vmand %vm3717, %vm3719
  %vm3722 = vmand %vm3718, %vm3720
  %v3727 = vcombine.low %v3584, %v3586
  %v3728 = vcombine.low %v3655, %v3657
  %v3731 = vsel %vm3721, %v3727, %v31
  %v3732 = vsel %vm3722, %v3728, %v32
  %v3737 = vcombine.low %v3710, %v3712
  %v3738 = vcombine.low %v3714, %v3716
  %v3741 = vsel %vm3721, %v3737, 0.0
  %v3742 = vsel %vm3722, %v3738, 0.0
  %v3745 = vcombine.high %v3731, %v3731
  %v3746 = vcombine.high %v3732, %v3732
  %v3751 = vcombine.low %v3741, %v3741
  %v3752 = vcombine.low %v3742, %v3742
  %v3755 = vsel %vm54, %v3731, %v3751
  %v3756 = vsel %vm54, %v3745, %v3741
  %v3757 = vsel %vm54, %v3732, %v3752
  %v3758 = vsel %vm54, %v3746, %v3742
  %3759 = vst [vmem:[%s8] sm:$0xff] %v3755
  %3760 = vst [vmem:[%s8 + $0x8] sm:$0xff] %v3756
  %3761 = vst [vmem:[%s8 + $0x10] sm:$0xff] %v3757
  %3762 = vst [vmem:[%s8 + $0x18] sm:$0xff] %v3758
  // Predicated region
  $region34: #{spline_coupling_forward.1} parent=0 // pred_check
    _
  $region35: #{spline_coupling_forward.1} parent=0 // pred_check_branch
    %3764 = sbr.rel (0) target = $region37
  $region36: #{spline_coupling_forward.1} parent=0 // pred_region
    _
  $region37: #{spline_coupling_forward.1} parent=0 // pred_fallthru
    _
  // Predicated region
  $region38: #{spline_coupling_forward.1} parent=0 // pred_check
    _
  $region39: #{spline_coupling_forward.1} parent=0 // pred_check_branch
    %3766 = sbr.rel (0) target = $region41
  $region40: #{spline_coupling_forward.1} parent=0 // pred_region
    _
  $region41: #{spline_coupling_forward.1} parent=0 // pred_fallthru
    _

</llo_original>
